<compile_context>
chip_gen: v7x
topology: tpu7x:2x2x1
jax: 0.10.0
libtpu: 0.0.40
codegen_flags: <defaults>
</compile_context>

<pallas_src>
import functools

import jax
import jax.numpy as jnp
from jax.experimental import pallas as pl
from jax.experimental.pallas import tpu as pltpu

LN_EPS = 1e-5
BN_EPS = 1e-5


# ----------------------------------------------------------------------------
# small in-kernel helpers
# ----------------------------------------------------------------------------
def _ln(x, g, b):
    mu = jnp.mean(x, axis=-1, keepdims=True)
    xc = x - mu
    var = jnp.mean(xc * xc, axis=-1, keepdims=True)
    return xc * jax.lax.rsqrt(var + LN_EPS) * g + b


def _gelu(x):
    # tanh-approximate GELU (transcendental lands on the EUP slot); ~1e-3 abs
    # from the exact erf GELU used by nn.GELU().
    c = 0.7978845608028654  # sqrt(2/pi)
    return 0.5 * x * (1.0 + jnp.tanh(c * (x + 0.044715 * x * x * x)))


# ----------------------------------------------------------------------------
# Fused per-layer Class_Decoder kernel (gridded over batch)
# ----------------------------------------------------------------------------
def _decoder_kernel(q_ref, x_ref,
                    proj_w, proj_b, norm_g, norm_b,
                    n1q_g, n1q_b, n1_g, n1_b,
                    fcq_w, fcq_b, fckv_w, fckv_b,
                    ap_w, ap_b, n2_g, n2_b,
                    w1, b1, w2, b2,
                    n3_g, n3_b, m2w1, m2b1, m2w2, m2b2,
                    qc_w, qc_b,
                    qout_ref, aout_ref, nqout_ref,
                    kv_scr, qp_scr, qh_scr, ctxh_scr, ctx_scr,
                    *, nh, hd, scale):
    f32 = jnp.float32
    nc, C = q_ref.shape[1], q_ref.shape[2]

    # proj_layers (1x1 conv as matmul over tokens) + norm_layers (LN over C)
    x = x_ref[0]                                                         # (N, C)
    tok = jnp.dot(x, proj_w[...], preferred_element_type=f32) + proj_b[...]
    tok = _ln(tok, norm_g[...], norm_b[...])

    xn = _ln(tok, n1_g[...], n1_b[...])                                  # norm1
    qn = _ln(q_ref[0], n1q_g[...], n1q_b[...])                           # norm1_query

    # fc_q (attention scale folded into q: touches nc*C elems instead of nc*N)
    qp_scr[...] = (jnp.dot(qn, fcq_w[...], preferred_element_type=f32)
                   + fcq_b[...]) * scale                                 # (nc, C)
    # fc_kv (single MXU matmul; per-head slices are read back from VMEM scratch)
    kv_scr[...] = jnp.dot(xn, fckv_w[...], preferred_element_type=f32) + fckv_b[...]

    for h in range(nh):
        # torch: q = fc_q(q).reshape(B, nh, nc, hd)  -- flat re-interpretation,
        # NO permute, so head h / class c2 reads chunk g = h*nc + c2 of the flat
        # (nc*C) buffer.  Assemble that gather with small ref-to-ref copies.
        for c2 in range(nc):
            g = h * nc + c2
            r, jb = g // nh, g % nh
            qh_scr[c2:c2 + 1, :] = qp_scr[r:r + 1, jb * hd:(jb + 1) * hd]
        q_h = qh_scr[...]                                                # (nc, hd)
        k_h = kv_scr[:, h * hd:(h + 1) * hd]                             # (N, hd)
        v_h = kv_scr[:, C + h * hd:C + (h + 1) * hd]                     # (N, hd)

        # attn1 (already scaled, since scale was folded into q)
        s = jax.lax.dot_general(q_h, k_h, (((1,), (1,)), ((), ())),
                                preferred_element_type=f32)              # (nc, N)
        m = jnp.max(s, axis=-1, keepdims=True)
        e = jnp.exp(s - m)
        p_sm = e * pl.reciprocal(jnp.sum(e, axis=-1, keepdims=True), approx=True)
        ctxh_scr[...] = jnp.dot(p_sm, v_h, preferred_element_type=f32)   # (nc, hd)

        # torch: (attn @ v).reshape(B, nc, C)  -- flat re-interpretation back
        for c2 in range(nc):
            g = h * nc + c2
            ctx_scr[g // nh:g // nh + 1, (g % nh) * hd:(g % nh + 1) * hd] = \
                ctxh_scr[c2:c2 + 1, :]

        # attention-map branch (per-row over N, independent of head/class order):
        #   attn = attn1 + drop_path(attn1) ; attn += drop_path(mlp2(norm3(attn)))
        a = s + s
        a_ln = _ln(a, n3_g[...], n3_b[...])
        hmid = _gelu(jnp.dot(a_ln, m2w1[...], preferred_element_type=f32) + m2b1[...])
        a = a + jnp.dot(hmid, m2w2[...], preferred_element_type=f32) + m2b2[...]
        aout_ref[h, 0] = a                                               # (nc, N)

    # attn.proj -> residual doubling -> MLP (Dropout/DropPath identities in eval)
    xq = jnp.dot(ctx_scr[...], ap_w[...], preferred_element_type=f32) + ap_b[...]
    query = xq + xq
    qn2 = _ln(query, n2_g[...], n2_b[...])
    hmid = _gelu(jnp.dot(qn2, w1[...], preferred_element_type=f32) + b1[...])
    query = query + jnp.dot(hmid, w2[...], preferred_element_type=f32) + b2[...]
    qout_ref[0] = query

    # query_convs (Conv1d k=1 == per-class linear) -> next guided query
    nqout_ref[0] = jnp.dot(query, qc_w[...], preferred_element_type=f32) + qc_b[...]


def class_decoder_layer(Q, x_tok, p, *, nh, nc, scale):
    """Q:(B,nc,C), x_tok:(B,N,C) -> (query:(B,nc,C), attn:(nh,B,nc,N), next_Q:(B,nc,C//2))."""
    B, N, C = x_tok.shape
    hd = C // nh

    def wspec(arr):
        nd = arr.ndim
        return pl.BlockSpec(arr.shape, lambda b: (0,) * nd)

    weights = [p["proj_w"], p["proj_b"], p["norm_g"], p["norm_b"],
               p["n1q_g"], p["n1q_b"], p["n1_g"], p["n1_b"],
               p["fcq_w"], p["fcq_b"], p["fckv_w"], p["fckv_b"],
               p["attnproj_w"], p["attnproj_b"], p["n2_g"], p["n2_b"],
               p["mlp_w1"], p["mlp_b1"], p["mlp_w2"], p["mlp_b2"],
               p["n3_g"], p["n3_b"], p["mlp2_w1"], p["mlp2_b1"],
               p["mlp2_w2"], p["mlp2_b2"], p["qc_w"], p["qc_b"]]

    in_specs = ([pl.BlockSpec((1, nc, C), lambda b: (b, 0, 0)),
                 pl.BlockSpec((1, N, C), lambda b: (b, 0, 0))]
                + [wspec(a) for a in weights])
    out_specs = (pl.BlockSpec((1, nc, C), lambda b: (b, 0, 0)),
                 pl.BlockSpec((nh, 1, nc, N), lambda b: (0, b, 0, 0)),
                 pl.BlockSpec((1, nc, C // 2), lambda b: (b, 0, 0)))
    out_shape = (jax.ShapeDtypeStruct((B, nc, C), jnp.float32),
                 jax.ShapeDtypeStruct((nh, B, nc, N), jnp.float32),
                 jax.ShapeDtypeStruct((B, nc, C // 2), jnp.float32))

    kern = functools.partial(_decoder_kernel, nh=nh, hd=hd, scale=scale)
    # TODO(synk): for realistic N (e.g. 56^2) the (N,N) mlp2 weights need a
    # K-tiled accumulator grid axis to fit v7x's 64 MiB VMEM.
    return pl.pallas_call(
        kern,
        out_shape=out_shape,
        grid=(B,),
        in_specs=in_specs,
        out_specs=out_specs,
        scratch_shapes=[pltpu.VMEM((N, 2 * C), jnp.float32),   # kv
                        pltpu.VMEM((nc, C), jnp.float32),      # scaled fc_q(q)
                        pltpu.VMEM((nc, hd), jnp.float32),     # per-head q gather
                        pltpu.VMEM((nc, hd), jnp.float32),     # per-head context
                        pltpu.VMEM((nc, C), jnp.float32)],     # re-assembled context
        compiler_params=pltpu.CompilerParams(
            dimension_semantics=("parallel",)),
    )(Q, x_tok, *weights)


# ----------------------------------------------------------------------------
# attn_convs0 (SeparableConv2d, relu_first=False) + attn_convs1 (1x1 head)
# vectorized: lanes = spatial (h*w), sublanes = (head, map) channels
# ----------------------------------------------------------------------------
def _attn_conv_kernel(xpad_ref, wdw_ref, bn1b_ref, pwf_ref, bn2b_ref,
                      w1x1_ref, b1x1_ref, o_ref, y_scr, *, nh, M, h, w):
    N = h * w
    base = w + 1
    # column-validity masks for the horizontal taps (halo handled by wrapper padding)
    col = jax.lax.broadcasted_iota(jnp.int32, (1, N), 1) % w
    mask_l = (col >= 1).astype(jnp.float32)
    mask_r = (col <= w - 2).astype(jnp.float32)

    # depthwise 3x3 (BN1 scale folded into wdw) as 9 shifted vector FMAs
    acc = jnp.zeros((nh * M, N), jnp.float32)
    for a in (-1, 0, 1):
        for bb in (-1, 0, 1):
            tap = (a + 1) * 3 + (bb + 1)
            s = a * w + bb
            sl = xpad_ref[:, base + s: base + s + N]           # (nh*M, N) shifted view
            contrib = sl * wdw_ref[:, tap:tap + 1]
            if bb == -1:
                contrib = contrib * mask_l
            elif bb == 1:
                contrib = contrib * mask_r
            acc = acc + contrib
    y_scr[...] = jnp.maximum(acc + bn1b_ref[...], 0.0)         # BN1 bias + ReLU

    # pointwise 1x1 across heads (BN2 scale folded), BN2 bias + ReLU,
    # then the trailing 1x1 (nh -> 1) conv head with bias.
    feat = jnp.zeros((M, N), jnp.float32)
    for oc in range(nh):
        z = jnp.zeros((M, N), jnp.float32)
        for c in range(nh):
            z = z + pwf_ref[oc, c] * y_scr[c * M:(c + 1) * M, :]
        z = jnp.maximum(z + bn2b_ref[oc], 0.0)
        feat = feat + w1x1_ref[oc] * z
    o_ref[...] = feat + b1x1_ref[0]


def attn_conv(attn, p, *, B, nc, nh, h, w):
    """attn:(nh, B, nc, N) head-major -> feat_map:(B, nc, h, w)."""
    M = B * nc
    N = h * w
    CH = nh * M
    X = attn.reshape(CH, N)
    Xpad = jnp.pad(X, ((0, 0), (w + 1, w + 1)))                      # halo on the HBM side
    wdw_rows = jnp.repeat(p["dw_w"] * p["bn1_s"][:, None], M, axis=0)   # (CH, 9)
    bn1b_rows = jnp.repeat(p["bn1_b"][:, None], M, axis=0)              # (CH, 1)
    pwf = p["pw_w"] * p["bn2_s"][:, None]                               # (nh, nh)

    vmem = pl.BlockSpec(memory_space=pltpu.MemorySpace.VMEM)
    smem = pl.BlockSpec(memory_space=pltpu.MemorySpace.SMEM)
    kern = functools.partial(_attn_conv_kernel, nh=nh, M=M, h=h, w=w)
    feat = pl.pallas_call(
        kern,
        out_shape=jax.ShapeDtypeStruct((M, N), jnp.float32),
        in_specs=[vmem, vmem, vmem, smem, smem, smem, smem],
        out_specs=vmem,
        scratch_shapes=[pltpu.VMEM((CH, N), jnp.float32)],
    )(Xpad, wdw_rows, bn1b_rows, pwf, p["bn2_b"], p["c1x1_w"], p["c1x1_b"])
    return feat.reshape(B, nc, h, w)


# ----------------------------------------------------------------------------
# Parameter initialization (deterministic, synthetic)
# ----------------------------------------------------------------------------
def init_params(key, in_chans, num_heads, num_classes, input_resolution):
    def nrm(k, shape, scale=0.02):
        return scale * jax.random.normal(k, shape, dtype=jnp.float32)

    keys = jax.random.split(key, 1 + len(in_chans))
    # torch inits guided_Q to zeros; small randoms keep the compute non-degenerate
    params = {"guided_Q": nrm(keys[0], (1, num_classes, in_chans[0]))}
    layers = []
    for i, C in enumerate(in_chans):
        nh = num_heads[i]
        N = input_resolution[i] * input_resolution[i]
        hid = int(C * 4.0)
        k = jax.random.split(keys[i + 1], 20)
        # BatchNorm2d eval with default stats: scale = g/sqrt(var+eps), bias = b - mean*scale
        bn_s = jnp.ones((nh,), jnp.float32) / jnp.sqrt(1.0 + BN_EPS)
        bn_b = jnp.zeros((nh,), jnp.float32)
        p = dict(
            proj_w=nrm(k[0], (C, C)), proj_b=nrm(k[1], (1, C)),             # 1x1 Conv2d
            norm_g=jnp.ones((1, C)), norm_b=jnp.zeros((1, C)),              # norm_layers
            n1q_g=jnp.ones((1, C)), n1q_b=jnp.zeros((1, C)),                # norm1_query
            n1_g=jnp.ones((1, C)), n1_b=jnp.zeros((1, C)),                  # norm1
            fcq_w=nrm(k[2], (C, C)), fcq_b=nrm(k[3], (1, C)),               # fc_q (qkv_bias)
            fckv_w=nrm(k[4], (C, 2 * C)), fckv_b=nrm(k[5], (1, 2 * C)),     # fc_kv
            attnproj_w=nrm(k[6], (C, C)), attnproj_b=nrm(k[7], (1, C)),     # attn.proj
            n2_g=jnp.ones((1, C)), n2_b=jnp.zeros((1, C)),                  # norm2
            mlp_w1=nrm(k[8], (C, hid)), mlp_b1=nrm(k[9], (1, hid)),         # mlp
            mlp_w2=nrm(k[10], (hid, C)), mlp_b2=jnp.zeros((1, C)),
            n3_g=jnp.ones((1, N)), n3_b=jnp.zeros((1, N)),                  # norm3
            mlp2_w1=nrm(k[11], (N, N)), mlp2_b1=nrm(k[12], (1, N)),         # mlp2
            mlp2_w2=nrm(k[13], (N, N)), mlp2_b2=jnp.zeros((1, N)),
            dw_w=nrm(k[14], (nh, 9), scale=0.1),                            # depthwise 3x3
            pw_w=nrm(k[15], (nh, nh), scale=0.1),                           # pointwise 1x1
            bn1_s=bn_s, bn1_b=bn_b, bn2_s=bn_s, bn2_b=bn_b,
            c1x1_w=nrm(k[16], (nh,), scale=0.1), c1x1_b=nrm(k[17], (1,), scale=0.1),
            qc_w=nrm(k[18], (C, C // 2)), qc_b=nrm(k[19], (1, C // 2)),     # query_convs
        )
        layers.append(p)
    params["layers"] = layers
    return params


# ----------------------------------------------------------------------------
# Forward pass: two fused pallas_calls per layer, thin XLA glue
# ----------------------------------------------------------------------------
def inherent_consistent_forward(feats, params, num_heads, num_classes,
                                guided_Q=None, modal="labeled"):
    feat_maps, updated_Qs = [], []
    B = feats[0].shape[0]
    if modal == "labeled":
        next_Q = jnp.broadcast_to(params["guided_Q"],
                                  (B,) + params["guided_Q"].shape[1:])
    for i, p in enumerate(params["layers"]):
        x = feats[i]                              # NCHW, like the PyTorch module
        _, C, H, W = x.shape
        N = H * W
        nh = num_heads[i]
        hd = C // nh
        scale = hd ** (-0.5)
        if modal == "unlabeled":
            next_Q = jnp.broadcast_to(guided_Q[i], (B,) + guided_Q[i].shape[1:])

        tok_in = jnp.transpose(x.reshape(B, C, N), (0, 2, 1))          # (B, N, C)
        query, attn, next_Q = class_decoder_layer(
            next_Q, tok_in, p, nh=nh, nc=num_classes, scale=scale)
        # attn is already in the head-major layout the conv head consumes.
        feat_map = attn_conv(attn, p, B=B, nc=num_classes, nh=nh, h=H, w=W)

        feat_maps.append(feat_map)
        updated_Qs.append(jnp.mean(query, axis=0, keepdims=True))       # torch: mean(dim=0)
    return feat_maps, updated_Qs


# ----------------------------------------------------------------------------
if __name__ == "__main__":
    key = jax.random.PRNGKey(0)

    # small synthetic config consistent with the module
    in_chans = [32, 16]            # in_chans[i+1] == in_chans[i] // 2 (required by query_convs)
    num_heads = [4, 2]
    num_classes = 4
    input_resolution = [8, 8]      # h = w = 8  ->  N_patch = 64
    B = 2

    kp, kf0, kf1 = jax.random.split(key, 3)
    params = init_params(kp, in_chans, num_heads, num_classes, input_resolution)
    feats = [jax.random.normal(kf0, (B, in_chans[0], 8, 8), dtype=jnp.float32),
             jax.random.normal(kf1, (B, in_chans[1], 8, 8), dtype=jnp.float32)]

    feat_maps, updated_Qs = inherent_consistent_forward(
        feats, params, num_heads, num_classes, modal="labeled")

    for t in feat_maps + updated_Qs:
        jax.block_until_ready(t)

    assert feat_maps[0].shape == (B, num_classes, 8, 8)
    assert feat_maps[1].shape == (B, num_classes, 8, 8)
    assert updated_Qs[0].shape == (1, num_classes, in_chans[0])
    assert updated_Qs[1].shape == (1, num_classes, in_chans[1])
    assert all(bool(jnp.all(jnp.isfinite(t))) for t in feat_maps + updated_Qs)
    print("KERNEL_OK")
</pallas_src>

<mosaic_0001>
module attributes {stable_mosaic.version = 11 : i64} {
  func.func @_decoder_kernel(%arg0: i32, %arg1: memref<1x4x32xf32, #tpu.memory_space<vmem>>, %arg2: memref<1x64x32xf32, #tpu.memory_space<vmem>>, %arg3: memref<32x32xf32, #tpu.memory_space<vmem>>, %arg4: memref<1x32xf32, #tpu.memory_space<vmem>>, %arg5: memref<1x32xf32, #tpu.memory_space<vmem>>, %arg6: memref<1x32xf32, #tpu.memory_space<vmem>>, %arg7: memref<1x32xf32, #tpu.memory_space<vmem>>, %arg8: memref<1x32xf32, #tpu.memory_space<vmem>>, %arg9: memref<1x32xf32, #tpu.memory_space<vmem>>, %arg10: memref<1x32xf32, #tpu.memory_space<vmem>>, %arg11: memref<32x32xf32, #tpu.memory_space<vmem>>, %arg12: memref<1x32xf32, #tpu.memory_space<vmem>>, %arg13: memref<32x64xf32, #tpu.memory_space<vmem>>, %arg14: memref<1x64xf32, #tpu.memory_space<vmem>>, %arg15: memref<32x32xf32, #tpu.memory_space<vmem>>, %arg16: memref<1x32xf32, #tpu.memory_space<vmem>>, %arg17: memref<1x32xf32, #tpu.memory_space<vmem>>, %arg18: memref<1x32xf32, #tpu.memory_space<vmem>>, %arg19: memref<32x128xf32, #tpu.memory_space<vmem>>, %arg20: memref<1x128xf32, #tpu.memory_space<vmem>>, %arg21: memref<128x32xf32, #tpu.memory_space<vmem>>, %arg22: memref<1x32xf32, #tpu.memory_space<vmem>>, %arg23: memref<1x64xf32, #tpu.memory_space<vmem>>, %arg24: memref<1x64xf32, #tpu.memory_space<vmem>>, %arg25: memref<64x64xf32, #tpu.memory_space<vmem>>, %arg26: memref<1x64xf32, #tpu.memory_space<vmem>>, %arg27: memref<64x64xf32, #tpu.memory_space<vmem>>, %arg28: memref<1x64xf32, #tpu.memory_space<vmem>>, %arg29: memref<32x16xf32, #tpu.memory_space<vmem>>, %arg30: memref<1x16xf32, #tpu.memory_space<vmem>>, %arg31: memref<1x4x32xf32, #tpu.memory_space<vmem>>, %arg32: memref<4x1x4x64xf32, #tpu.memory_space<vmem>>, %arg33: memref<1x4x16xf32, #tpu.memory_space<vmem>>, %arg34: memref<64x64xf32, #tpu.memory_space<vmem>>, %arg35: memref<4x32xf32, #tpu.memory_space<vmem>>, %arg36: memref<4x8xf32, #tpu.memory_space<vmem>>, %arg37: memref<4x8xf32, #tpu.memory_space<vmem>>, %arg38: memref<4x32xf32, #tpu.memory_space<vmem>>) attributes {dimension_semantics = [#tpu.dimension_semantics<parallel>], iteration_bounds = array<i64: 2>, scalar_prefetch = 0 : i64, scratch_operands = 5 : i64, tpu.core_type = #tpu.core_type<tc>, window_params = [{transform_indices = @transform_0, window_bounds = array<i64: 1, 4, 32>}, {transform_indices = @transform_1, window_bounds = array<i64: 1, 64, 32>}, {pipeline_mode = #tpu.pipeline_mode<synchronous>, transform_indices = @transform_2, window_bounds = array<i64: 32, 32>}, {pipeline_mode = #tpu.pipeline_mode<synchronous>, transform_indices = @transform_3, window_bounds = array<i64: 1, 32>}, {pipeline_mode = #tpu.pipeline_mode<synchronous>, transform_indices = @transform_4, window_bounds = array<i64: 1, 32>}, {pipeline_mode = #tpu.pipeline_mode<synchronous>, transform_indices = @transform_5, window_bounds = array<i64: 1, 32>}, {pipeline_mode = #tpu.pipeline_mode<synchronous>, transform_indices = @transform_6, window_bounds = array<i64: 1, 32>}, {pipeline_mode = #tpu.pipeline_mode<synchronous>, transform_indices = @transform_7, window_bounds = array<i64: 1, 32>}, {pipeline_mode = #tpu.pipeline_mode<synchronous>, transform_indices = @transform_8, window_bounds = array<i64: 1, 32>}, {pipeline_mode = #tpu.pipeline_mode<synchronous>, transform_indices = @transform_9, window_bounds = array<i64: 1, 32>}, {pipeline_mode = #tpu.pipeline_mode<synchronous>, transform_indices = @transform_10, window_bounds = array<i64: 32, 32>}, {pipeline_mode = #tpu.pipeline_mode<synchronous>, transform_indices = @transform_11, window_bounds = array<i64: 1, 32>}, {pipeline_mode = #tpu.pipeline_mode<synchronous>, transform_indices = @transform_12, window_bounds = array<i64: 32, 64>}, {pipeline_mode = #tpu.pipeline_mode<synchronous>, transform_indices = @transform_13, window_bounds = array<i64: 1, 64>}, {pipeline_mode = #tpu.pipeline_mode<synchronous>, transform_indices = @transform_14, window_bounds = array<i64: 32, 32>}, {pipeline_mode = #tpu.pipeline_mode<synchronous>, transform_indices = @transform_15, window_bounds = array<i64: 1, 32>}, {pipeline_mode = #tpu.pipeline_mode<synchronous>, transform_indices = @transform_16, window_bounds = array<i64: 1, 32>}, {pipeline_mode = #tpu.pipeline_mode<synchronous>, transform_indices = @transform_17, window_bounds = array<i64: 1, 32>}, {pipeline_mode = #tpu.pipeline_mode<synchronous>, transform_indices = @transform_18, window_bounds = array<i64: 32, 128>}, {pipeline_mode = #tpu.pipeline_mode<synchronous>, transform_indices = @transform_19, window_bounds = array<i64: 1, 128>}, {pipeline_mode = #tpu.pipeline_mode<synchronous>, transform_indices = @transform_20, window_bounds = array<i64: 128, 32>}, {pipeline_mode = #tpu.pipeline_mode<synchronous>, transform_indices = @transform_21, window_bounds = array<i64: 1, 32>}, {pipeline_mode = #tpu.pipeline_mode<synchronous>, transform_indices = @transform_22, window_bounds = array<i64: 1, 64>}, {pipeline_mode = #tpu.pipeline_mode<synchronous>, transform_indices = @transform_23, window_bounds = array<i64: 1, 64>}, {pipeline_mode = #tpu.pipeline_mode<synchronous>, transform_indices = @transform_24, window_bounds = array<i64: 64, 64>}, {pipeline_mode = #tpu.pipeline_mode<synchronous>, transform_indices = @transform_25, window_bounds = array<i64: 1, 64>}, {pipeline_mode = #tpu.pipeline_mode<synchronous>, transform_indices = @transform_26, window_bounds = array<i64: 64, 64>}, {pipeline_mode = #tpu.pipeline_mode<synchronous>, transform_indices = @transform_27, window_bounds = array<i64: 1, 64>}, {pipeline_mode = #tpu.pipeline_mode<synchronous>, transform_indices = @transform_28, window_bounds = array<i64: 32, 16>}, {pipeline_mode = #tpu.pipeline_mode<synchronous>, transform_indices = @transform_29, window_bounds = array<i64: 1, 16>}, {transform_indices = @transform_30, window_bounds = array<i64: 1, 4, 32>}, {transform_indices = @transform_31, window_bounds = array<i64: 4, 1, 4, 64>}, {transform_indices = @transform_32, window_bounds = array<i64: 1, 4, 16>}]} {
    %c0 = arith.constant 0 : index
    %c0_0 = arith.constant 0 : index
    %c0_1 = arith.constant 0 : index
    %0 = vector.load %arg2[%c0, %c0_0, %c0_1] : memref<1x64x32xf32, #tpu.memory_space<vmem>>, vector<1x64x32xf32>
    %1 = vector.shape_cast %0 : vector<1x64x32xf32> to vector<64x32xf32>
    %c0_2 = arith.constant 0 : index
    %c0_3 = arith.constant 0 : index
    %2 = vector.load %arg3[%c0_2, %c0_3] : memref<32x32xf32, #tpu.memory_space<vmem>>, vector<32x32xf32>
    %cst = arith.constant dense<0.000000e+00> : vector<64x32xf32>
    %3 = tpu.matmul %1, %2, %cst {dimension_numbers = #tpu.dot_dimension_numbers<[1], [0], [0], [1], [0, 0, 1, 1], [], []>} : vector<64x32xf32>, vector<32x32xf32>, vector<64x32xf32> -> vector<64x32xf32>
    %c0_4 = arith.constant 0 : index
    %c0_5 = arith.constant 0 : index
    %4 = vector.load %arg4[%c0_4, %c0_5] : memref<1x32xf32, #tpu.memory_space<vmem>>, vector<1x32xf32>
    %5 = vector.broadcast %4 : vector<1x32xf32> to vector<64x32xf32>
    %6 = arith.addf %3, %5 : vector<64x32xf32>
    %c0_6 = arith.constant 0 : index
    %c0_7 = arith.constant 0 : index
    %7 = vector.load %arg5[%c0_6, %c0_7] : memref<1x32xf32, #tpu.memory_space<vmem>>, vector<1x32xf32>
    %c0_8 = arith.constant 0 : index
    %c0_9 = arith.constant 0 : index
    %8 = vector.load %arg6[%c0_8, %c0_9] : memref<1x32xf32, #tpu.memory_space<vmem>>, vector<1x32xf32>
    %cst_10 = arith.constant dense<0.000000e+00> : vector<64xf32>
    %9 = vector.multi_reduction <add>, %6, %cst_10 [1] : vector<64x32xf32> to vector<64xf32>
    %10 = vector.shape_cast %9 : vector<64xf32> to vector<64x1xf32>
    %cst_11 = arith.constant 3.200000e+01 : f32
    %11 = vector.broadcast %cst_11 : f32 to vector<64x1xf32>
    %12 = arith.divf %10, %11 : vector<64x1xf32>
    %13 = vector.broadcast %12 : vector<64x1xf32> to vector<64x32xf32>
    %14 = arith.subf %6, %13 : vector<64x32xf32>
    %15 = arith.mulf %14, %14 : vector<64x32xf32>
    %cst_12 = arith.constant dense<0.000000e+00> : vector<64xf32>
    %16 = vector.multi_reduction <add>, %15, %cst_12 [1] : vector<64x32xf32> to vector<64xf32>
    %17 = vector.shape_cast %16 : vector<64xf32> to vector<64x1xf32>
    %cst_13 = arith.constant 3.200000e+01 : f32
    %18 = vector.broadcast %cst_13 : f32 to vector<64x1xf32>
    %19 = arith.divf %17, %18 : vector<64x1xf32>
    %cst_14 = arith.constant 9.99999974E-6 : f32
    %20 = vector.broadcast %cst_14 : f32 to vector<64x1xf32>
    %21 = arith.addf %19, %20 : vector<64x1xf32>
    %22 = math.rsqrt %21 : vector<64x1xf32>
    %23 = vector.broadcast %22 : vector<64x1xf32> to vector<64x32xf32>
    %24 = arith.mulf %14, %23 : vector<64x32xf32>
    %25 = vector.broadcast %7 : vector<1x32xf32> to vector<64x32xf32>
    %26 = arith.mulf %24, %25 : vector<64x32xf32>
    %27 = vector.broadcast %8 : vector<1x32xf32> to vector<64x32xf32>
    %28 = arith.addf %26, %27 : vector<64x32xf32>
    %c0_15 = arith.constant 0 : index
    %c0_16 = arith.constant 0 : index
    %29 = vector.load %arg9[%c0_15, %c0_16] : memref<1x32xf32, #tpu.memory_space<vmem>>, vector<1x32xf32>
    %c0_17 = arith.constant 0 : index
    %c0_18 = arith.constant 0 : index
    %30 = vector.load %arg10[%c0_17, %c0_18] : memref<1x32xf32, #tpu.memory_space<vmem>>, vector<1x32xf32>
    %cst_19 = arith.constant dense<0.000000e+00> : vector<64xf32>
    %31 = vector.multi_reduction <add>, %28, %cst_19 [1] : vector<64x32xf32> to vector<64xf32>
    %32 = vector.shape_cast %31 : vector<64xf32> to vector<64x1xf32>
    %cst_20 = arith.constant 3.200000e+01 : f32
    %33 = vector.broadcast %cst_20 : f32 to vector<64x1xf32>
    %34 = arith.divf %32, %33 : vector<64x1xf32>
    %35 = vector.broadcast %34 : vector<64x1xf32> to vector<64x32xf32>
    %36 = arith.subf %28, %35 : vector<64x32xf32>
    %37 = arith.mulf %36, %36 : vector<64x32xf32>
    %cst_21 = arith.constant dense<0.000000e+00> : vector<64xf32>
    %38 = vector.multi_reduction <add>, %37, %cst_21 [1] : vector<64x32xf32> to vector<64xf32>
    %39 = vector.shape_cast %38 : vector<64xf32> to vector<64x1xf32>
    %cst_22 = arith.constant 3.200000e+01 : f32
    %40 = vector.broadcast %cst_22 : f32 to vector<64x1xf32>
    %41 = arith.divf %39, %40 : vector<64x1xf32>
    %cst_23 = arith.constant 9.99999974E-6 : f32
    %42 = vector.broadcast %cst_23 : f32 to vector<64x1xf32>
    %43 = arith.addf %41, %42 : vector<64x1xf32>
    %44 = math.rsqrt %43 : vector<64x1xf32>
    %45 = vector.broadcast %44 : vector<64x1xf32> to vector<64x32xf32>
    %46 = arith.mulf %36, %45 : vector<64x32xf32>
    %47 = vector.broadcast %29 : vector<1x32xf32> to vector<64x32xf32>
    %48 = arith.mulf %46, %47 : vector<64x32xf32>
    %49 = vector.broadcast %30 : vector<1x32xf32> to vector<64x32xf32>
    %50 = arith.addf %48, %49 : vector<64x32xf32>
    %c0_24 = arith.constant 0 : index
    %c0_25 = arith.constant 0 : index
    %c0_26 = arith.constant 0 : index
    %51 = vector.load %arg1[%c0_24, %c0_25, %c0_26] : memref<1x4x32xf32, #tpu.memory_space<vmem>>, vector<1x4x32xf32>
    %52 = vector.shape_cast %51 : vector<1x4x32xf32> to vector<4x32xf32>
    %c0_27 = arith.constant 0 : index
    %c0_28 = arith.constant 0 : index
    %53 = vector.load %arg7[%c0_27, %c0_28] : memref<1x32xf32, #tpu.memory_space<vmem>>, vector<1x32xf32>
    %c0_29 = arith.constant 0 : index
    %c0_30 = arith.constant 0 : index
    %54 = vector.load %arg8[%c0_29, %c0_30] : memref<1x32xf32, #tpu.memory_space<vmem>>, vector<1x32xf32>
    %cst_31 = arith.constant dense<0.000000e+00> : vector<4xf32>
    %55 = vector.multi_reduction <add>, %52, %cst_31 [1] : vector<4x32xf32> to vector<4xf32>
    %56 = vector.shape_cast %55 : vector<4xf32> to vector<4x1xf32>
    %cst_32 = arith.constant 3.200000e+01 : f32
    %57 = vector.broadcast %cst_32 : f32 to vector<4x1xf32>
    %58 = arith.divf %56, %57 : vector<4x1xf32>
    %59 = vector.broadcast %58 : vector<4x1xf32> to vector<4x32xf32>
    %60 = arith.subf %52, %59 : vector<4x32xf32>
    %61 = arith.mulf %60, %60 : vector<4x32xf32>
    %cst_33 = arith.constant dense<0.000000e+00> : vector<4xf32>
    %62 = vector.multi_reduction <add>, %61, %cst_33 [1] : vector<4x32xf32> to vector<4xf32>
    %63 = vector.shape_cast %62 : vector<4xf32> to vector<4x1xf32>
    %cst_34 = arith.constant 3.200000e+01 : f32
    %64 = vector.broadcast %cst_34 : f32 to vector<4x1xf32>
    %65 = arith.divf %63, %64 : vector<4x1xf32>
    %cst_35 = arith.constant 9.99999974E-6 : f32
    %66 = vector.broadcast %cst_35 : f32 to vector<4x1xf32>
    %67 = arith.addf %65, %66 : vector<4x1xf32>
    %68 = math.rsqrt %67 : vector<4x1xf32>
    %69 = vector.broadcast %68 : vector<4x1xf32> to vector<4x32xf32>
    %70 = arith.mulf %60, %69 : vector<4x32xf32>
    %71 = vector.broadcast %53 : vector<1x32xf32> to vector<4x32xf32>
    %72 = arith.mulf %70, %71 : vector<4x32xf32>
    %73 = vector.broadcast %54 : vector<1x32xf32> to vector<4x32xf32>
    %74 = arith.addf %72, %73 : vector<4x32xf32>
    %c0_36 = arith.constant 0 : index
    %c0_37 = arith.constant 0 : index
    %75 = vector.load %arg11[%c0_36, %c0_37] : memref<32x32xf32, #tpu.memory_space<vmem>>, vector<32x32xf32>
    %cst_38 = arith.constant dense<0.000000e+00> : vector<4x32xf32>
    %76 = tpu.matmul %74, %75, %cst_38 {dimension_numbers = #tpu.dot_dimension_numbers<[1], [0], [0], [1], [0, 0, 1, 1], [], []>} : vector<4x32xf32>, vector<32x32xf32>, vector<4x32xf32> -> vector<4x32xf32>
    %c0_39 = arith.constant 0 : index
    %c0_40 = arith.constant 0 : index
    %77 = vector.load %arg12[%c0_39, %c0_40] : memref<1x32xf32, #tpu.memory_space<vmem>>, vector<1x32xf32>
    %78 = vector.broadcast %77 : vector<1x32xf32> to vector<4x32xf32>
    %79 = arith.addf %76, %78 : vector<4x32xf32>
    %cst_41 = arith.constant 0.353553385 : f32
    %80 = vector.broadcast %cst_41 : f32 to vector<4x32xf32>
    %81 = arith.mulf %79, %80 : vector<4x32xf32>
    %c0_42 = arith.constant 0 : index
    %c0_43 = arith.constant 0 : index
    %82 = vector.load %arg35[%c0_42, %c0_43] : memref<4x32xf32, #tpu.memory_space<vmem>>, vector<4x32xf32>
    tpu.vector_store %arg35[%c0_42, %c0_43], %81 {strides = array<i32>} : memref<4x32xf32, #tpu.memory_space<vmem>>, vector<4x32xf32>,
    %c0_44 = arith.constant 0 : index
    %c0_45 = arith.constant 0 : index
    %83 = vector.load %arg13[%c0_44, %c0_45] : memref<32x64xf32, #tpu.memory_space<vmem>>, vector<32x64xf32>
    %cst_46 = arith.constant dense<0.000000e+00> : vector<64x64xf32>
    %84 = tpu.matmul %50, %83, %cst_46 {dimension_numbers = #tpu.dot_dimension_numbers<[1], [0], [0], [1], [0, 0, 1, 1], [], []>} : vector<64x32xf32>, vector<32x64xf32>, vector<64x64xf32> -> vector<64x64xf32>
    %c0_47 = arith.constant 0 : index
    %c0_48 = arith.constant 0 : index
    %85 = vector.load %arg14[%c0_47, %c0_48] : memref<1x64xf32, #tpu.memory_space<vmem>>, vector<1x64xf32>
    %86 = vector.broadcast %85 : vector<1x64xf32> to vector<64x64xf32>
    %87 = arith.addf %84, %86 : vector<64x64xf32>
    %c0_49 = arith.constant 0 : index
    %c0_50 = arith.constant 0 : index
    %88 = vector.load %arg34[%c0_49, %c0_50] : memref<64x64xf32, #tpu.memory_space<vmem>>, vector<64x64xf32>
    tpu.vector_store %arg34[%c0_49, %c0_50], %87 {strides = array<i32>} : memref<64x64xf32, #tpu.memory_space<vmem>>, vector<64x64xf32>,
    %c0_51 = arith.constant 0 : index
    %c0_52 = arith.constant 0 : index
    %89 = vector.load %arg35[%c0_51, %c0_52] : memref<4x32xf32, #tpu.memory_space<vmem>>, vector<1x8xf32>
    %c0_53 = arith.constant 0 : index
    %c0_54 = arith.constant 0 : index
    %90 = vector.load %arg36[%c0_53, %c0_54] : memref<4x8xf32, #tpu.memory_space<vmem>>, vector<1x8xf32>
    tpu.vector_store %arg36[%c0_53, %c0_54], %89 {strides = array<i32>} : memref<4x8xf32, #tpu.memory_space<vmem>>, vector<1x8xf32>,
    %c0_55 = arith.constant 0 : index
    %c8 = arith.constant 8 : index
    %91 = vector.load %arg35[%c0_55, %c8] : memref<4x32xf32, #tpu.memory_space<vmem>>, vector<1x8xf32>
    %c1 = arith.constant 1 : index
    %c0_56 = arith.constant 0 : index
    %92 = vector.load %arg36[%c1, %c0_56] : memref<4x8xf32, #tpu.memory_space<vmem>>, vector<1x8xf32>
    tpu.vector_store %arg36[%c1, %c0_56], %91 {strides = array<i32>} : memref<4x8xf32, #tpu.memory_space<vmem>>, vector<1x8xf32>,
    %c0_57 = arith.constant 0 : index
    %c16 = arith.constant 16 : index
    %93 = vector.load %arg35[%c0_57, %c16] : memref<4x32xf32, #tpu.memory_space<vmem>>, vector<1x8xf32>
    %c2 = arith.constant 2 : index
    %c0_58 = arith.constant 0 : index
    %94 = vector.load %arg36[%c2, %c0_58] : memref<4x8xf32, #tpu.memory_space<vmem>>, vector<1x8xf32>
    tpu.vector_store %arg36[%c2, %c0_58], %93 {strides = array<i32>} : memref<4x8xf32, #tpu.memory_space<vmem>>, vector<1x8xf32>,
    %c0_59 = arith.constant 0 : index
    %c24 = arith.constant 24 : index
    %95 = vector.load %arg35[%c0_59, %c24] : memref<4x32xf32, #tpu.memory_space<vmem>>, vector<1x8xf32>
    %c3 = arith.constant 3 : index
    %c0_60 = arith.constant 0 : index
    %96 = vector.load %arg36[%c3, %c0_60] : memref<4x8xf32, #tpu.memory_space<vmem>>, vector<1x8xf32>
    tpu.vector_store %arg36[%c3, %c0_60], %95 {strides = array<i32>} : memref<4x8xf32, #tpu.memory_space<vmem>>, vector<1x8xf32>,
    %c0_61 = arith.constant 0 : index
    %c0_62 = arith.constant 0 : index
    %97 = vector.load %arg36[%c0_61, %c0_62] : memref<4x8xf32, #tpu.memory_space<vmem>>, vector<4x8xf32>
    %c0_63 = arith.constant 0 : index
    %c0_64 = arith.constant 0 : index
    %98 = vector.load %arg34[%c0_63, %c0_64] : memref<64x64xf32, #tpu.memory_space<vmem>>, vector<64x8xf32>
    %c0_65 = arith.constant 0 : index
    %c32 = arith.constant 32 : index
    %99 = vector.load %arg34[%c0_65, %c32] : memref<64x64xf32, #tpu.memory_space<vmem>>, vector<64x8xf32>
    %cst_66 = arith.constant dense<0.000000e+00> : vector<4x64xf32>
    %100 = tpu.matmul %97, %98, %cst_66 {dimension_numbers = #tpu.dot_dimension_numbers<[1], [1], [0], [0], [0, 0, 1, 0], [], []>} : vector<4x8xf32>, vector<64x8xf32>, vector<4x64xf32> -> vector<4x64xf32>
    %cst_67 = arith.constant dense<0xFF800000> : vector<4xf32>
    %101 = vector.multi_reduction <maximumf>, %100, %cst_67 [1] : vector<4x64xf32> to vector<4xf32>
    %102 = vector.shape_cast %101 : vector<4xf32> to vector<4x1xf32>
    %103 = vector.broadcast %102 : vector<4x1xf32> to vector<4x64xf32>
    %104 = arith.subf %100, %103 : vector<4x64xf32>
    %105 = math.exp %104 : vector<4x64xf32>
    %cst_68 = arith.constant dense<0.000000e+00> : vector<4xf32>
    %106 = vector.multi_reduction <add>, %105, %cst_68 [1] : vector<4x64xf32> to vector<4xf32>
    %107 = vector.shape_cast %106 : vector<4xf32> to vector<4x1xf32>
    %108 = tpu.reciprocal %107 {approx = true} : vector<4x1xf32> -> vector<4x1xf32>
    %109 = vector.broadcast %108 : vector<4x1xf32> to vector<4x64xf32>
    %110 = arith.mulf %105, %109 : vector<4x64xf32>
    %cst_69 = arith.constant dense<0.000000e+00> : vector<4x8xf32>
    %111 = tpu.matmul %110, %99, %cst_69 {dimension_numbers = #tpu.dot_dimension_numbers<[1], [0], [0], [1], [0, 0, 1, 1], [], []>} : vector<4x64xf32>, vector<64x8xf32>, vector<4x8xf32> -> vector<4x8xf32>
    %c0_70 = arith.constant 0 : index
    %c0_71 = arith.constant 0 : index
    %112 = vector.load %arg37[%c0_70, %c0_71] : memref<4x8xf32, #tpu.memory_space<vmem>>, vector<4x8xf32>
    tpu.vector_store %arg37[%c0_70, %c0_71], %111 {strides = array<i32>} : memref<4x8xf32, #tpu.memory_space<vmem>>, vector<4x8xf32>,
    %c0_72 = arith.constant 0 : index
    %c0_73 = arith.constant 0 : index
    %113 = vector.load %arg37[%c0_72, %c0_73] : memref<4x8xf32, #tpu.memory_space<vmem>>, vector<1x8xf32>
    %c0_74 = arith.constant 0 : index
    %c0_75 = arith.constant 0 : index
    %114 = vector.load %arg38[%c0_74, %c0_75] : memref<4x32xf32, #tpu.memory_space<vmem>>, vector<1x8xf32>
    tpu.vector_store %arg38[%c0_74, %c0_75], %113 {strides = array<i32>} : memref<4x32xf32, #tpu.memory_space<vmem>>, vector<1x8xf32>,
    %c1_76 = arith.constant 1 : index
    %c0_77 = arith.constant 0 : index
    %115 = vector.load %arg37[%c1_76, %c0_77] : memref<4x8xf32, #tpu.memory_space<vmem>>, vector<1x8xf32>
    %c0_78 = arith.constant 0 : index
    %c8_79 = arith.constant 8 : index
    %116 = vector.load %arg38[%c0_78, %c8_79] : memref<4x32xf32, #tpu.memory_space<vmem>>, vector<1x8xf32>
    tpu.vector_store %arg38[%c0_78, %c8_79], %115 {strides = array<i32>} : memref<4x32xf32, #tpu.memory_space<vmem>>, vector<1x8xf32>,
    %c2_80 = arith.constant 2 : index
    %c0_81 = arith.constant 0 : index
    %117 = vector.load %arg37[%c2_80, %c0_81] : memref<4x8xf32, #tpu.memory_space<vmem>>, vector<1x8xf32>
    %c0_82 = arith.constant 0 : index
    %c16_83 = arith.constant 16 : index
    %118 = vector.load %arg38[%c0_82, %c16_83] : memref<4x32xf32, #tpu.memory_space<vmem>>, vector<1x8xf32>
    tpu.vector_store %arg38[%c0_82, %c16_83], %117 {strides = array<i32>} : memref<4x32xf32, #tpu.memory_space<vmem>>, vector<1x8xf32>,
    %c3_84 = arith.constant 3 : index
    %c0_85 = arith.constant 0 : index
    %119 = vector.load %arg37[%c3_84, %c0_85] : memref<4x8xf32, #tpu.memory_space<vmem>>, vector<1x8xf32>
    %c0_86 = arith.constant 0 : index
    %c24_87 = arith.constant 24 : index
    %120 = vector.load %arg38[%c0_86, %c24_87] : memref<4x32xf32, #tpu.memory_space<vmem>>, vector<1x8xf32>
    tpu.vector_store %arg38[%c0_86, %c24_87], %119 {strides = array<i32>} : memref<4x32xf32, #tpu.memory_space<vmem>>, vector<1x8xf32>,
    %121 = arith.addf %100, %100 : vector<4x64xf32>
    %c0_88 = arith.constant 0 : index
    %c0_89 = arith.constant 0 : index
    %122 = vector.load %arg23[%c0_88, %c0_89] : memref<1x64xf32, #tpu.memory_space<vmem>>, vector<1x64xf32>
    %c0_90 = arith.constant 0 : index
    %c0_91 = arith.constant 0 : index
    %123 = vector.load %arg24[%c0_90, %c0_91] : memref<1x64xf32, #tpu.memory_space<vmem>>, vector<1x64xf32>
    %cst_92 = arith.constant dense<0.000000e+00> : vector<4xf32>
    %124 = vector.multi_reduction <add>, %121, %cst_92 [1] : vector<4x64xf32> to vector<4xf32>
    %125 = vector.shape_cast %124 : vector<4xf32> to vector<4x1xf32>
    %cst_93 = arith.constant 6.400000e+01 : f32
    %126 = vector.broadcast %cst_93 : f32 to vector<4x1xf32>
    %127 = arith.divf %125, %126 : vector<4x1xf32>
    %128 = vector.broadcast %127 : vector<4x1xf32> to vector<4x64xf32>
    %129 = arith.subf %121, %128 : vector<4x64xf32>
    %130 = arith.mulf %129, %129 : vector<4x64xf32>
    %cst_94 = arith.constant dense<0.000000e+00> : vector<4xf32>
    %131 = vector.multi_reduction <add>, %130, %cst_94 [1] : vector<4x64xf32> to vector<4xf32>
    %132 = vector.shape_cast %131 : vector<4xf32> to vector<4x1xf32>
    %cst_95 = arith.constant 6.400000e+01 : f32
    %133 = vector.broadcast %cst_95 : f32 to vector<4x1xf32>
    %134 = arith.divf %132, %133 : vector<4x1xf32>
    %cst_96 = arith.constant 9.99999974E-6 : f32
    %135 = vector.broadcast %cst_96 : f32 to vector<4x1xf32>
    %136 = arith.addf %134, %135 : vector<4x1xf32>
    %137 = math.rsqrt %136 : vector<4x1xf32>
    %138 = vector.broadcast %137 : vector<4x1xf32> to vector<4x64xf32>
    %139 = arith.mulf %129, %138 : vector<4x64xf32>
    %140 = vector.broadcast %122 : vector<1x64xf32> to vector<4x64xf32>
    %141 = arith.mulf %139, %140 : vector<4x64xf32>
    %142 = vector.broadcast %123 : vector<1x64xf32> to vector<4x64xf32>
    %143 = arith.addf %141, %142 : vector<4x64xf32>
    %c0_97 = arith.constant 0 : index
    %c0_98 = arith.constant 0 : index
    %144 = vector.load %arg25[%c0_97, %c0_98] : memref<64x64xf32, #tpu.memory_space<vmem>>, vector<64x64xf32>
    %cst_99 = arith.constant dense<0.000000e+00> : vector<4x64xf32>
    %145 = tpu.matmul %143, %144, %cst_99 {dimension_numbers = #tpu.dot_dimension_numbers<[1], [0], [0], [1], [0, 0, 1, 1], [], []>} : vector<4x64xf32>, vector<64x64xf32>, vector<4x64xf32> -> vector<4x64xf32>
    %c0_100 = arith.constant 0 : index
    %c0_101 = arith.constant 0 : index
    %146 = vector.load %arg26[%c0_100, %c0_101] : memref<1x64xf32, #tpu.memory_space<vmem>>, vector<1x64xf32>
    %147 = vector.broadcast %146 : vector<1x64xf32> to vector<4x64xf32>
    %148 = arith.addf %145, %147 : vector<4x64xf32>
    %cst_102 = arith.constant 5.000000e-01 : f32
    %149 = vector.broadcast %cst_102 : f32 to vector<4x64xf32>
    %150 = arith.mulf %149, %148 : vector<4x64xf32>
    %cst_103 = arith.constant 4.471500e-02 : f32
    %151 = vector.broadcast %cst_103 : f32 to vector<4x64xf32>
    %152 = arith.mulf %151, %148 : vector<4x64xf32>
    %153 = arith.mulf %152, %148 : vector<4x64xf32>
    %154 = arith.mulf %153, %148 : vector<4x64xf32>
    %155 = arith.addf %148, %154 : vector<4x64xf32>
    %cst_104 = arith.constant 0.797884583 : f32
    %156 = vector.broadcast %cst_104 : f32 to vector<4x64xf32>
    %157 = arith.mulf %156, %155 : vector<4x64xf32>
    %158 = math.tanh %157 : vector<4x64xf32>
    %cst_105 = arith.constant 1.000000e+00 : f32
    %159 = vector.broadcast %cst_105 : f32 to vector<4x64xf32>
    %160 = arith.addf %159, %158 : vector<4x64xf32>
    %161 = arith.mulf %150, %160 : vector<4x64xf32>
    %c0_106 = arith.constant 0 : index
    %c0_107 = arith.constant 0 : index
    %162 = vector.load %arg27[%c0_106, %c0_107] : memref<64x64xf32, #tpu.memory_space<vmem>>, vector<64x64xf32>
    %cst_108 = arith.constant dense<0.000000e+00> : vector<4x64xf32>
    %163 = tpu.matmul %161, %162, %cst_108 {dimension_numbers = #tpu.dot_dimension_numbers<[1], [0], [0], [1], [0, 0, 1, 1], [], []>} : vector<4x64xf32>, vector<64x64xf32>, vector<4x64xf32> -> vector<4x64xf32>
    %164 = arith.addf %121, %163 : vector<4x64xf32>
    %c0_109 = arith.constant 0 : index
    %c0_110 = arith.constant 0 : index
    %165 = vector.load %arg28[%c0_109, %c0_110] : memref<1x64xf32, #tpu.memory_space<vmem>>, vector<1x64xf32>
    %166 = vector.broadcast %165 : vector<1x64xf32> to vector<4x64xf32>
    %167 = arith.addf %164, %166 : vector<4x64xf32>
    %c0_111 = arith.constant 0 : index
    %c0_112 = arith.constant 0 : index
    %c0_113 = arith.constant 0 : index
    %c0_114 = arith.constant 0 : index
    %168 = vector.load %arg32[%c0_111, %c0_112, %c0_113, %c0_114] : memref<4x1x4x64xf32, #tpu.memory_space<vmem>>, vector<1x1x4x64xf32>
    %169 = vector.shape_cast %168 : vector<1x1x4x64xf32> to vector<4x64xf32>
    %170 = vector.shape_cast %167 : vector<4x64xf32> to vector<1x1x4x64xf32>
    tpu.vector_store %arg32[%c0_111, %c0_112, %c0_113, %c0_114], %170 {strides = array<i32>} : memref<4x1x4x64xf32, #tpu.memory_space<vmem>>, vector<1x1x4x64xf32>,
    %c1_115 = arith.constant 1 : index
    %c0_116 = arith.constant 0 : index
    %171 = vector.load %arg35[%c1_115, %c0_116] : memref<4x32xf32, #tpu.memory_space<vmem>>, vector<1x8xf32>
    %c0_117 = arith.constant 0 : index
    %c0_118 = arith.constant 0 : index
    %172 = vector.load %arg36[%c0_117, %c0_118] : memref<4x8xf32, #tpu.memory_space<vmem>>, vector<1x8xf32>
    tpu.vector_store %arg36[%c0_117, %c0_118], %171 {strides = array<i32>} : memref<4x8xf32, #tpu.memory_space<vmem>>, vector<1x8xf32>,
    %c1_119 = arith.constant 1 : index
    %c8_120 = arith.constant 8 : index
    %173 = vector.load %arg35[%c1_119, %c8_120] : memref<4x32xf32, #tpu.memory_space<vmem>>, vector<1x8xf32>
    %c1_121 = arith.constant 1 : index
    %c0_122 = arith.constant 0 : index
    %174 = vector.load %arg36[%c1_121, %c0_122] : memref<4x8xf32, #tpu.memory_space<vmem>>, vector<1x8xf32>
    tpu.vector_store %arg36[%c1_121, %c0_122], %173 {strides = array<i32>} : memref<4x8xf32, #tpu.memory_space<vmem>>, vector<1x8xf32>,
    %c1_123 = arith.constant 1 : index
    %c16_124 = arith.constant 16 : index
    %175 = vector.load %arg35[%c1_123, %c16_124] : memref<4x32xf32, #tpu.memory_space<vmem>>, vector<1x8xf32>
    %c2_125 = arith.constant 2 : index
    %c0_126 = arith.constant 0 : index
    %176 = vector.load %arg36[%c2_125, %c0_126] : memref<4x8xf32, #tpu.memory_space<vmem>>, vector<1x8xf32>
    tpu.vector_store %arg36[%c2_125, %c0_126], %175 {strides = array<i32>} : memref<4x8xf32, #tpu.memory_space<vmem>>, vector<1x8xf32>,
    %c1_127 = arith.constant 1 : index
    %c24_128 = arith.constant 24 : index
    %177 = vector.load %arg35[%c1_127, %c24_128] : memref<4x32xf32, #tpu.memory_space<vmem>>, vector<1x8xf32>
    %c3_129 = arith.constant 3 : index
    %c0_130 = arith.constant 0 : index
    %178 = vector.load %arg36[%c3_129, %c0_130] : memref<4x8xf32, #tpu.memory_space<vmem>>, vector<1x8xf32>
    tpu.vector_store %arg36[%c3_129, %c0_130], %177 {strides = array<i32>} : memref<4x8xf32, #tpu.memory_space<vmem>>, vector<1x8xf32>,
    %c0_131 = arith.constant 0 : index
    %c0_132 = arith.constant 0 : index
    %179 = vector.load %arg36[%c0_131, %c0_132] : memref<4x8xf32, #tpu.memory_space<vmem>>, vector<4x8xf32>
    %c0_133 = arith.constant 0 : index
    %c8_134 = arith.constant 8 : index
    %180 = vector.load %arg34[%c0_133, %c8_134] : memref<64x64xf32, #tpu.memory_space<vmem>>, vector<64x8xf32>
    %c0_135 = arith.constant 0 : index
    %c40 = arith.constant 40 : index
    %181 = vector.load %arg34[%c0_135, %c40] : memref<64x64xf32, #tpu.memory_space<vmem>>, vector<64x8xf32>
    %cst_136 = arith.constant dense<0.000000e+00> : vector<4x64xf32>
    %182 = tpu.matmul %179, %180, %cst_136 {dimension_numbers = #tpu.dot_dimension_numbers<[1], [1], [0], [0], [0, 0, 1, 0], [], []>} : vector<4x8xf32>, vector<64x8xf32>, vector<4x64xf32> -> vector<4x64xf32>
    %cst_137 = arith.constant dense<0xFF800000> : vector<4xf32>
    %183 = vector.multi_reduction <maximumf>, %182, %cst_137 [1] : vector<4x64xf32> to vector<4xf32>
    %184 = vector.shape_cast %183 : vector<4xf32> to vector<4x1xf32>
    %185 = vector.broadcast %184 : vector<4x1xf32> to vector<4x64xf32>
    %186 = arith.subf %182, %185 : vector<4x64xf32>
    %187 = math.exp %186 : vector<4x64xf32>
    %cst_138 = arith.constant dense<0.000000e+00> : vector<4xf32>
    %188 = vector.multi_reduction <add>, %187, %cst_138 [1] : vector<4x64xf32> to vector<4xf32>
    %189 = vector.shape_cast %188 : vector<4xf32> to vector<4x1xf32>
    %190 = tpu.reciprocal %189 {approx = true} : vector<4x1xf32> -> vector<4x1xf32>
    %191 = vector.broadcast %190 : vector<4x1xf32> to vector<4x64xf32>
    %192 = arith.mulf %187, %191 : vector<4x64xf32>
    %cst_139 = arith.constant dense<0.000000e+00> : vector<4x8xf32>
    %193 = tpu.matmul %192, %181, %cst_139 {dimension_numbers = #tpu.dot_dimension_numbers<[1], [0], [0], [1], [0, 0, 1, 1], [], []>} : vector<4x64xf32>, vector<64x8xf32>, vector<4x8xf32> -> vector<4x8xf32>
    %c0_140 = arith.constant 0 : index
    %c0_141 = arith.constant 0 : index
    %194 = vector.load %arg37[%c0_140, %c0_141] : memref<4x8xf32, #tpu.memory_space<vmem>>, vector<4x8xf32>
    tpu.vector_store %arg37[%c0_140, %c0_141], %193 {strides = array<i32>} : memref<4x8xf32, #tpu.memory_space<vmem>>, vector<4x8xf32>,
    %c0_142 = arith.constant 0 : index
    %c0_143 = arith.constant 0 : index
    %195 = vector.load %arg37[%c0_142, %c0_143] : memref<4x8xf32, #tpu.memory_space<vmem>>, vector<1x8xf32>
    %c1_144 = arith.constant 1 : index
    %c0_145 = arith.constant 0 : index
    %196 = vector.load %arg38[%c1_144, %c0_145] : memref<4x32xf32, #tpu.memory_space<vmem>>, vector<1x8xf32>
    tpu.vector_store %arg38[%c1_144, %c0_145], %195 {strides = array<i32>} : memref<4x32xf32, #tpu.memory_space<vmem>>, vector<1x8xf32>,
    %c1_146 = arith.constant 1 : index
    %c0_147 = arith.constant 0 : index
    %197 = vector.load %arg37[%c1_146, %c0_147] : memref<4x8xf32, #tpu.memory_space<vmem>>, vector<1x8xf32>
    %c1_148 = arith.constant 1 : index
    %c8_149 = arith.constant 8 : index
    %198 = vector.load %arg38[%c1_148, %c8_149] : memref<4x32xf32, #tpu.memory_space<vmem>>, vector<1x8xf32>
    tpu.vector_store %arg38[%c1_148, %c8_149], %197 {strides = array<i32>} : memref<4x32xf32, #tpu.memory_space<vmem>>, vector<1x8xf32>,
    %c2_150 = arith.constant 2 : index
    %c0_151 = arith.constant 0 : index
    %199 = vector.load %arg37[%c2_150, %c0_151] : memref<4x8xf32, #tpu.memory_space<vmem>>, vector<1x8xf32>
    %c1_152 = arith.constant 1 : index
    %c16_153 = arith.constant 16 : index
    %200 = vector.load %arg38[%c1_152, %c16_153] : memref<4x32xf32, #tpu.memory_space<vmem>>, vector<1x8xf32>
    tpu.vector_store %arg38[%c1_152, %c16_153], %199 {strides = array<i32>} : memref<4x32xf32, #tpu.memory_space<vmem>>, vector<1x8xf32>,
    %c3_154 = arith.constant 3 : index
    %c0_155 = arith.constant 0 : index
    %201 = vector.load %arg37[%c3_154, %c0_155] : memref<4x8xf32, #tpu.memory_space<vmem>>, vector<1x8xf32>
    %c1_156 = arith.constant 1 : index
    %c24_157 = arith.constant 24 : index
    %202 = vector.load %arg38[%c1_156, %c24_157] : memref<4x32xf32, #tpu.memory_space<vmem>>, vector<1x8xf32>
    tpu.vector_store %arg38[%c1_156, %c24_157], %201 {strides = array<i32>} : memref<4x32xf32, #tpu.memory_space<vmem>>, vector<1x8xf32>,
    %203 = arith.addf %182, %182 : vector<4x64xf32>
    %c0_158 = arith.constant 0 : index
    %c0_159 = arith.constant 0 : index
    %204 = vector.load %arg23[%c0_158, %c0_159] : memref<1x64xf32, #tpu.memory_space<vmem>>, vector<1x64xf32>
    %c0_160 = arith.constant 0 : index
    %c0_161 = arith.constant 0 : index
    %205 = vector.load %arg24[%c0_160, %c0_161] : memref<1x64xf32, #tpu.memory_space<vmem>>, vector<1x64xf32>
    %cst_162 = arith.constant dense<0.000000e+00> : vector<4xf32>
    %206 = vector.multi_reduction <add>, %203, %cst_162 [1] : vector<4x64xf32> to vector<4xf32>
    %207 = vector.shape_cast %206 : vector<4xf32> to vector<4x1xf32>
    %cst_163 = arith.constant 6.400000e+01 : f32
    %208 = vector.broadcast %cst_163 : f32 to vector<4x1xf32>
    %209 = arith.divf %207, %208 : vector<4x1xf32>
    %210 = vector.broadcast %209 : vector<4x1xf32> to vector<4x64xf32>
    %211 = arith.subf %203, %210 : vector<4x64xf32>
    %212 = arith.mulf %211, %211 : vector<4x64xf32>
    %cst_164 = arith.constant dense<0.000000e+00> : vector<4xf32>
    %213 = vector.multi_reduction <add>, %212, %cst_164 [1] : vector<4x64xf32> to vector<4xf32>
    %214 = vector.shape_cast %213 : vector<4xf32> to vector<4x1xf32>
    %cst_165 = arith.constant 6.400000e+01 : f32
    %215 = vector.broadcast %cst_165 : f32 to vector<4x1xf32>
    %216 = arith.divf %214, %215 : vector<4x1xf32>
    %cst_166 = arith.constant 9.99999974E-6 : f32
    %217 = vector.broadcast %cst_166 : f32 to vector<4x1xf32>
    %218 = arith.addf %216, %217 : vector<4x1xf32>
    %219 = math.rsqrt %218 : vector<4x1xf32>
    %220 = vector.broadcast %219 : vector<4x1xf32> to vector<4x64xf32>
    %221 = arith.mulf %211, %220 : vector<4x64xf32>
    %222 = vector.broadcast %204 : vector<1x64xf32> to vector<4x64xf32>
    %223 = arith.mulf %221, %222 : vector<4x64xf32>
    %224 = vector.broadcast %205 : vector<1x64xf32> to vector<4x64xf32>
    %225 = arith.addf %223, %224 : vector<4x64xf32>
    %c0_167 = arith.constant 0 : index
    %c0_168 = arith.constant 0 : index
    %226 = vector.load %arg25[%c0_167, %c0_168] : memref<64x64xf32, #tpu.memory_space<vmem>>, vector<64x64xf32>
    %cst_169 = arith.constant dense<0.000000e+00> : vector<4x64xf32>
    %227 = tpu.matmul %225, %226, %cst_169 {dimension_numbers = #tpu.dot_dimension_numbers<[1], [0], [0], [1], [0, 0, 1, 1], [], []>} : vector<4x64xf32>, vector<64x64xf32>, vector<4x64xf32> -> vector<4x64xf32>
    %c0_170 = arith.constant 0 : index
    %c0_171 = arith.constant 0 : index
    %228 = vector.load %arg26[%c0_170, %c0_171] : memref<1x64xf32, #tpu.memory_space<vmem>>, vector<1x64xf32>
    %229 = vector.broadcast %228 : vector<1x64xf32> to vector<4x64xf32>
    %230 = arith.addf %227, %229 : vector<4x64xf32>
    %cst_172 = arith.constant 5.000000e-01 : f32
    %231 = vector.broadcast %cst_172 : f32 to vector<4x64xf32>
    %232 = arith.mulf %231, %230 : vector<4x64xf32>
    %cst_173 = arith.constant 4.471500e-02 : f32
    %233 = vector.broadcast %cst_173 : f32 to vector<4x64xf32>
    %234 = arith.mulf %233, %230 : vector<4x64xf32>
    %235 = arith.mulf %234, %230 : vector<4x64xf32>
    %236 = arith.mulf %235, %230 : vector<4x64xf32>
    %237 = arith.addf %230, %236 : vector<4x64xf32>
    %cst_174 = arith.constant 0.797884583 : f32
    %238 = vector.broadcast %cst_174 : f32 to vector<4x64xf32>
    %239 = arith.mulf %238, %237 : vector<4x64xf32>
    %240 = math.tanh %239 : vector<4x64xf32>
    %cst_175 = arith.constant 1.000000e+00 : f32
    %241 = vector.broadcast %cst_175 : f32 to vector<4x64xf32>
    %242 = arith.addf %241, %240 : vector<4x64xf32>
    %243 = arith.mulf %232, %242 : vector<4x64xf32>
    %c0_176 = arith.constant 0 : index
    %c0_177 = arith.constant 0 : index
    %244 = vector.load %arg27[%c0_176, %c0_177] : memref<64x64xf32, #tpu.memory_space<vmem>>, vector<64x64xf32>
    %cst_178 = arith.constant dense<0.000000e+00> : vector<4x64xf32>
    %245 = tpu.matmul %243, %244, %cst_178 {dimension_numbers = #tpu.dot_dimension_numbers<[1], [0], [0], [1], [0, 0, 1, 1], [], []>} : vector<4x64xf32>, vector<64x64xf32>, vector<4x64xf32> -> vector<4x64xf32>
    %246 = arith.addf %203, %245 : vector<4x64xf32>
    %c0_179 = arith.constant 0 : index
    %c0_180 = arith.constant 0 : index
    %247 = vector.load %arg28[%c0_179, %c0_180] : memref<1x64xf32, #tpu.memory_space<vmem>>, vector<1x64xf32>
    %248 = vector.broadcast %247 : vector<1x64xf32> to vector<4x64xf32>
    %249 = arith.addf %246, %248 : vector<4x64xf32>
    %c1_181 = arith.constant 1 : index
    %c0_182 = arith.constant 0 : index
    %c0_183 = arith.constant 0 : index
    %c0_184 = arith.constant 0 : index
    %250 = vector.load %arg32[%c1_181, %c0_182, %c0_183, %c0_184] : memref<4x1x4x64xf32, #tpu.memory_space<vmem>>, vector<1x1x4x64xf32>
    %251 = vector.shape_cast %250 : vector<1x1x4x64xf32> to vector<4x64xf32>
    %252 = vector.shape_cast %249 : vector<4x64xf32> to vector<1x1x4x64xf32>
    tpu.vector_store %arg32[%c1_181, %c0_182, %c0_183, %c0_184], %252 {strides = array<i32>} : memref<4x1x4x64xf32, #tpu.memory_space<vmem>>, vector<1x1x4x64xf32>,
    %c2_185 = arith.constant 2 : index
    %c0_186 = arith.constant 0 : index
    %253 = vector.load %arg35[%c2_185, %c0_186] : memref<4x32xf32, #tpu.memory_space<vmem>>, vector<1x8xf32>
    %c0_187 = arith.constant 0 : index
    %c0_188 = arith.constant 0 : index
    %254 = vector.load %arg36[%c0_187, %c0_188] : memref<4x8xf32, #tpu.memory_space<vmem>>, vector<1x8xf32>
    tpu.vector_store %arg36[%c0_187, %c0_188], %253 {strides = array<i32>} : memref<4x8xf32, #tpu.memory_space<vmem>>, vector<1x8xf32>,
    %c2_189 = arith.constant 2 : index
    %c8_190 = arith.constant 8 : index
    %255 = vector.load %arg35[%c2_189, %c8_190] : memref<4x32xf32, #tpu.memory_space<vmem>>, vector<1x8xf32>
    %c1_191 = arith.constant 1 : index
    %c0_192 = arith.constant 0 : index
    %256 = vector.load %arg36[%c1_191, %c0_192] : memref<4x8xf32, #tpu.memory_space<vmem>>, vector<1x8xf32>
    tpu.vector_store %arg36[%c1_191, %c0_192], %255 {strides = array<i32>} : memref<4x8xf32, #tpu.memory_space<vmem>>, vector<1x8xf32>,
    %c2_193 = arith.constant 2 : index
    %c16_194 = arith.constant 16 : index
    %257 = vector.load %arg35[%c2_193, %c16_194] : memref<4x32xf32, #tpu.memory_space<vmem>>, vector<1x8xf32>
    %c2_195 = arith.constant 2 : index
    %c0_196 = arith.constant 0 : index
    %258 = vector.load %arg36[%c2_195, %c0_196] : memref<4x8xf32, #tpu.memory_space<vmem>>, vector<1x8xf32>
    tpu.vector_store %arg36[%c2_195, %c0_196], %257 {strides = array<i32>} : memref<4x8xf32, #tpu.memory_space<vmem>>, vector<1x8xf32>,
    %c2_197 = arith.constant 2 : index
    %c24_198 = arith.constant 24 : index
    %259 = vector.load %arg35[%c2_197, %c24_198] : memref<4x32xf32, #tpu.memory_space<vmem>>, vector<1x8xf32>
    %c3_199 = arith.constant 3 : index
    %c0_200 = arith.constant 0 : index
    %260 = vector.load %arg36[%c3_199, %c0_200] : memref<4x8xf32, #tpu.memory_space<vmem>>, vector<1x8xf32>
    tpu.vector_store %arg36[%c3_199, %c0_200], %259 {strides = array<i32>} : memref<4x8xf32, #tpu.memory_space<vmem>>, vector<1x8xf32>,
    %c0_201 = arith.constant 0 : index
    %c0_202 = arith.constant 0 : index
    %261 = vector.load %arg36[%c0_201, %c0_202] : memref<4x8xf32, #tpu.memory_space<vmem>>, vector<4x8xf32>
    %c0_203 = arith.constant 0 : index
    %c16_204 = arith.constant 16 : index
    %262 = vector.load %arg34[%c0_203, %c16_204] : memref<64x64xf32, #tpu.memory_space<vmem>>, vector<64x8xf32>
    %c0_205 = arith.constant 0 : index
    %c48 = arith.constant 48 : index
    %263 = vector.load %arg34[%c0_205, %c48] : memref<64x64xf32, #tpu.memory_space<vmem>>, vector<64x8xf32>
    %cst_206 = arith.constant dense<0.000000e+00> : vector<4x64xf32>
    %264 = tpu.matmul %261, %262, %cst_206 {dimension_numbers = #tpu.dot_dimension_numbers<[1], [1], [0], [0], [0, 0, 1, 0], [], []>} : vector<4x8xf32>, vector<64x8xf32>, vector<4x64xf32> -> vector<4x64xf32>
    %cst_207 = arith.constant dense<0xFF800000> : vector<4xf32>
    %265 = vector.multi_reduction <maximumf>, %264, %cst_207 [1] : vector<4x64xf32> to vector<4xf32>
    %266 = vector.shape_cast %265 : vector<4xf32> to vector<4x1xf32>
    %267 = vector.broadcast %266 : vector<4x1xf32> to vector<4x64xf32>
    %268 = arith.subf %264, %267 : vector<4x64xf32>
    %269 = math.exp %268 : vector<4x64xf32>
    %cst_208 = arith.constant dense<0.000000e+00> : vector<4xf32>
    %270 = vector.multi_reduction <add>, %269, %cst_208 [1] : vector<4x64xf32> to vector<4xf32>
    %271 = vector.shape_cast %270 : vector<4xf32> to vector<4x1xf32>
    %272 = tpu.reciprocal %271 {approx = true} : vector<4x1xf32> -> vector<4x1xf32>
    %273 = vector.broadcast %272 : vector<4x1xf32> to vector<4x64xf32>
    %274 = arith.mulf %269, %273 : vector<4x64xf32>
    %cst_209 = arith.constant dense<0.000000e+00> : vector<4x8xf32>
    %275 = tpu.matmul %274, %263, %cst_209 {dimension_numbers = #tpu.dot_dimension_numbers<[1], [0], [0], [1], [0, 0, 1, 1], [], []>} : vector<4x64xf32>, vector<64x8xf32>, vector<4x8xf32> -> vector<4x8xf32>
    %c0_210 = arith.constant 0 : index
    %c0_211 = arith.constant 0 : index
    %276 = vector.load %arg37[%c0_210, %c0_211] : memref<4x8xf32, #tpu.memory_space<vmem>>, vector<4x8xf32>
    tpu.vector_store %arg37[%c0_210, %c0_211], %275 {strides = array<i32>} : memref<4x8xf32, #tpu.memory_space<vmem>>, vector<4x8xf32>,
    %c0_212 = arith.constant 0 : index
    %c0_213 = arith.constant 0 : index
    %277 = vector.load %arg37[%c0_212, %c0_213] : memref<4x8xf32, #tpu.memory_space<vmem>>, vector<1x8xf32>
    %c2_214 = arith.constant 2 : index
    %c0_215 = arith.constant 0 : index
    %278 = vector.load %arg38[%c2_214, %c0_215] : memref<4x32xf32, #tpu.memory_space<vmem>>, vector<1x8xf32>
    tpu.vector_store %arg38[%c2_214, %c0_215], %277 {strides = array<i32>} : memref<4x32xf32, #tpu.memory_space<vmem>>, vector<1x8xf32>,
    %c1_216 = arith.constant 1 : index
    %c0_217 = arith.constant 0 : index
    %279 = vector.load %arg37[%c1_216, %c0_217] : memref<4x8xf32, #tpu.memory_space<vmem>>, vector<1x8xf32>
    %c2_218 = arith.constant 2 : index
    %c8_219 = arith.constant 8 : index
    %280 = vector.load %arg38[%c2_218, %c8_219] : memref<4x32xf32, #tpu.memory_space<vmem>>, vector<1x8xf32>
    tpu.vector_store %arg38[%c2_218, %c8_219], %279 {strides = array<i32>} : memref<4x32xf32, #tpu.memory_space<vmem>>, vector<1x8xf32>,
    %c2_220 = arith.constant 2 : index
    %c0_221 = arith.constant 0 : index
    %281 = vector.load %arg37[%c2_220, %c0_221] : memref<4x8xf32, #tpu.memory_space<vmem>>, vector<1x8xf32>
    %c2_222 = arith.constant 2 : index
    %c16_223 = arith.constant 16 : index
    %282 = vector.load %arg38[%c2_222, %c16_223] : memref<4x32xf32, #tpu.memory_space<vmem>>, vector<1x8xf32>
    tpu.vector_store %arg38[%c2_222, %c16_223], %281 {strides = array<i32>} : memref<4x32xf32, #tpu.memory_space<vmem>>, vector<1x8xf32>,
    %c3_224 = arith.constant 3 : index
    %c0_225 = arith.constant 0 : index
    %283 = vector.load %arg37[%c3_224, %c0_225] : memref<4x8xf32, #tpu.memory_space<vmem>>, vector<1x8xf32>
    %c2_226 = arith.constant 2 : index
    %c24_227 = arith.constant 24 : index
    %284 = vector.load %arg38[%c2_226, %c24_227] : memref<4x32xf32, #tpu.memory_space<vmem>>, vector<1x8xf32>
    tpu.vector_store %arg38[%c2_226, %c24_227], %283 {strides = array<i32>} : memref<4x32xf32, #tpu.memory_space<vmem>>, vector<1x8xf32>,
    %285 = arith.addf %264, %264 : vector<4x64xf32>
    %c0_228 = arith.constant 0 : index
    %c0_229 = arith.constant 0 : index
    %286 = vector.load %arg23[%c0_228, %c0_229] : memref<1x64xf32, #tpu.memory_space<vmem>>, vector<1x64xf32>
    %c0_230 = arith.constant 0 : index
    %c0_231 = arith.constant 0 : index
    %287 = vector.load %arg24[%c0_230, %c0_231] : memref<1x64xf32, #tpu.memory_space<vmem>>, vector<1x64xf32>
    %cst_232 = arith.constant dense<0.000000e+00> : vector<4xf32>
    %288 = vector.multi_reduction <add>, %285, %cst_232 [1] : vector<4x64xf32> to vector<4xf32>
    %289 = vector.shape_cast %288 : vector<4xf32> to vector<4x1xf32>
    %cst_233 = arith.constant 6.400000e+01 : f32
    %290 = vector.broadcast %cst_233 : f32 to vector<4x1xf32>
    %291 = arith.divf %289, %290 : vector<4x1xf32>
    %292 = vector.broadcast %291 : vector<4x1xf32> to vector<4x64xf32>
    %293 = arith.subf %285, %292 : vector<4x64xf32>
    %294 = arith.mulf %293, %293 : vector<4x64xf32>
    %cst_234 = arith.constant dense<0.000000e+00> : vector<4xf32>
    %295 = vector.multi_reduction <add>, %294, %cst_234 [1] : vector<4x64xf32> to vector<4xf32>
    %296 = vector.shape_cast %295 : vector<4xf32> to vector<4x1xf32>
    %cst_235 = arith.constant 6.400000e+01 : f32
    %297 = vector.broadcast %cst_235 : f32 to vector<4x1xf32>
    %298 = arith.divf %296, %297 : vector<4x1xf32>
    %cst_236 = arith.constant 9.99999974E-6 : f32
    %299 = vector.broadcast %cst_236 : f32 to vector<4x1xf32>
    %300 = arith.addf %298, %299 : vector<4x1xf32>
    %301 = math.rsqrt %300 : vector<4x1xf32>
    %302 = vector.broadcast %301 : vector<4x1xf32> to vector<4x64xf32>
    %303 = arith.mulf %293, %302 : vector<4x64xf32>
    %304 = vector.broadcast %286 : vector<1x64xf32> to vector<4x64xf32>
    %305 = arith.mulf %303, %304 : vector<4x64xf32>
    %306 = vector.broadcast %287 : vector<1x64xf32> to vector<4x64xf32>
    %307 = arith.addf %305, %306 : vector<4x64xf32>
    %c0_237 = arith.constant 0 : index
    %c0_238 = arith.constant 0 : index
    %308 = vector.load %arg25[%c0_237, %c0_238] : memref<64x64xf32, #tpu.memory_space<vmem>>, vector<64x64xf32>
    %cst_239 = arith.constant dense<0.000000e+00> : vector<4x64xf32>
    %309 = tpu.matmul %307, %308, %cst_239 {dimension_numbers = #tpu.dot_dimension_numbers<[1], [0], [0], [1], [0, 0, 1, 1], [], []>} : vector<4x64xf32>, vector<64x64xf32>, vector<4x64xf32> -> vector<4x64xf32>
    %c0_240 = arith.constant 0 : index
    %c0_241 = arith.constant 0 : index
    %310 = vector.load %arg26[%c0_240, %c0_241] : memref<1x64xf32, #tpu.memory_space<vmem>>, vector<1x64xf32>
    %311 = vector.broadcast %310 : vector<1x64xf32> to vector<4x64xf32>
    %312 = arith.addf %309, %311 : vector<4x64xf32>
    %cst_242 = arith.constant 5.000000e-01 : f32
    %313 = vector.broadcast %cst_242 : f32 to vector<4x64xf32>
    %314 = arith.mulf %313, %312 : vector<4x64xf32>
    %cst_243 = arith.constant 4.471500e-02 : f32
    %315 = vector.broadcast %cst_243 : f32 to vector<4x64xf32>
    %316 = arith.mulf %315, %312 : vector<4x64xf32>
    %317 = arith.mulf %316, %312 : vector<4x64xf32>
    %318 = arith.mulf %317, %312 : vector<4x64xf32>
    %319 = arith.addf %312, %318 : vector<4x64xf32>
    %cst_244 = arith.constant 0.797884583 : f32
    %320 = vector.broadcast %cst_244 : f32 to vector<4x64xf32>
    %321 = arith.mulf %320, %319 : vector<4x64xf32>
    %322 = math.tanh %321 : vector<4x64xf32>
    %cst_245 = arith.constant 1.000000e+00 : f32
    %323 = vector.broadcast %cst_245 : f32 to vector<4x64xf32>
    %324 = arith.addf %323, %322 : vector<4x64xf32>
    %325 = arith.mulf %314, %324 : vector<4x64xf32>
    %c0_246 = arith.constant 0 : index
    %c0_247 = arith.constant 0 : index
    %326 = vector.load %arg27[%c0_246, %c0_247] : memref<64x64xf32, #tpu.memory_space<vmem>>, vector<64x64xf32>
    %cst_248 = arith.constant dense<0.000000e+00> : vector<4x64xf32>
    %327 = tpu.matmul %325, %326, %cst_248 {dimension_numbers = #tpu.dot_dimension_numbers<[1], [0], [0], [1], [0, 0, 1, 1], [], []>} : vector<4x64xf32>, vector<64x64xf32>, vector<4x64xf32> -> vector<4x64xf32>
    %328 = arith.addf %285, %327 : vector<4x64xf32>
    %c0_249 = arith.constant 0 : index
    %c0_250 = arith.constant 0 : index
    %329 = vector.load %arg28[%c0_249, %c0_250] : memref<1x64xf32, #tpu.memory_space<vmem>>, vector<1x64xf32>
    %330 = vector.broadcast %329 : vector<1x64xf32> to vector<4x64xf32>
    %331 = arith.addf %328, %330 : vector<4x64xf32>
    %c2_251 = arith.constant 2 : index
    %c0_252 = arith.constant 0 : index
    %c0_253 = arith.constant 0 : index
    %c0_254 = arith.constant 0 : index
    %332 = vector.load %arg32[%c2_251, %c0_252, %c0_253, %c0_254] : memref<4x1x4x64xf32, #tpu.memory_space<vmem>>, vector<1x1x4x64xf32>
    %333 = vector.shape_cast %332 : vector<1x1x4x64xf32> to vector<4x64xf32>
    %334 = vector.shape_cast %331 : vector<4x64xf32> to vector<1x1x4x64xf32>
    tpu.vector_store %arg32[%c2_251, %c0_252, %c0_253, %c0_254], %334 {strides = array<i32>} : memref<4x1x4x64xf32, #tpu.memory_space<vmem>>, vector<1x1x4x64xf32>,
    %c3_255 = arith.constant 3 : index
    %c0_256 = arith.constant 0 : index
    %335 = vector.load %arg35[%c3_255, %c0_256] : memref<4x32xf32, #tpu.memory_space<vmem>>, vector<1x8xf32>
    %c0_257 = arith.constant 0 : index
    %c0_258 = arith.constant 0 : index
    %336 = vector.load %arg36[%c0_257, %c0_258] : memref<4x8xf32, #tpu.memory_space<vmem>>, vector<1x8xf32>
    tpu.vector_store %arg36[%c0_257, %c0_258], %335 {strides = array<i32>} : memref<4x8xf32, #tpu.memory_space<vmem>>, vector<1x8xf32>,
    %c3_259 = arith.constant 3 : index
    %c8_260 = arith.constant 8 : index
    %337 = vector.load %arg35[%c3_259, %c8_260] : memref<4x32xf32, #tpu.memory_space<vmem>>, vector<1x8xf32>
    %c1_261 = arith.constant 1 : index
    %c0_262 = arith.constant 0 : index
    %338 = vector.load %arg36[%c1_261, %c0_262] : memref<4x8xf32, #tpu.memory_space<vmem>>, vector<1x8xf32>
    tpu.vector_store %arg36[%c1_261, %c0_262], %337 {strides = array<i32>} : memref<4x8xf32, #tpu.memory_space<vmem>>, vector<1x8xf32>,
    %c3_263 = arith.constant 3 : index
    %c16_264 = arith.constant 16 : index
    %339 = vector.load %arg35[%c3_263, %c16_264] : memref<4x32xf32, #tpu.memory_space<vmem>>, vector<1x8xf32>
    %c2_265 = arith.constant 2 : index
    %c0_266 = arith.constant 0 : index
    %340 = vector.load %arg36[%c2_265, %c0_266] : memref<4x8xf32, #tpu.memory_space<vmem>>, vector<1x8xf32>
    tpu.vector_store %arg36[%c2_265, %c0_266], %339 {strides = array<i32>} : memref<4x8xf32, #tpu.memory_space<vmem>>, vector<1x8xf32>,
    %c3_267 = arith.constant 3 : index
    %c24_268 = arith.constant 24 : index
    %341 = vector.load %arg35[%c3_267, %c24_268] : memref<4x32xf32, #tpu.memory_space<vmem>>, vector<1x8xf32>
    %c3_269 = arith.constant 3 : index
    %c0_270 = arith.constant 0 : index
    %342 = vector.load %arg36[%c3_269, %c0_270] : memref<4x8xf32, #tpu.memory_space<vmem>>, vector<1x8xf32>
    tpu.vector_store %arg36[%c3_269, %c0_270], %341 {strides = array<i32>} : memref<4x8xf32, #tpu.memory_space<vmem>>, vector<1x8xf32>,
    %c0_271 = arith.constant 0 : index
    %c0_272 = arith.constant 0 : index
    %343 = vector.load %arg36[%c0_271, %c0_272] : memref<4x8xf32, #tpu.memory_space<vmem>>, vector<4x8xf32>
    %c0_273 = arith.constant 0 : index
    %c24_274 = arith.constant 24 : index
    %344 = vector.load %arg34[%c0_273, %c24_274] : memref<64x64xf32, #tpu.memory_space<vmem>>, vector<64x8xf32>
    %c0_275 = arith.constant 0 : index
    %c56 = arith.constant 56 : index
    %345 = vector.load %arg34[%c0_275, %c56] : memref<64x64xf32, #tpu.memory_space<vmem>>, vector<64x8xf32>
    %cst_276 = arith.constant dense<0.000000e+00> : vector<4x64xf32>
    %346 = tpu.matmul %343, %344, %cst_276 {dimension_numbers = #tpu.dot_dimension_numbers<[1], [1], [0], [0], [0, 0, 1, 0], [], []>} : vector<4x8xf32>, vector<64x8xf32>, vector<4x64xf32> -> vector<4x64xf32>
    %cst_277 = arith.constant dense<0xFF800000> : vector<4xf32>
    %347 = vector.multi_reduction <maximumf>, %346, %cst_277 [1] : vector<4x64xf32> to vector<4xf32>
    %348 = vector.shape_cast %347 : vector<4xf32> to vector<4x1xf32>
    %349 = vector.broadcast %348 : vector<4x1xf32> to vector<4x64xf32>
    %350 = arith.subf %346, %349 : vector<4x64xf32>
    %351 = math.exp %350 : vector<4x64xf32>
    %cst_278 = arith.constant dense<0.000000e+00> : vector<4xf32>
    %352 = vector.multi_reduction <add>, %351, %cst_278 [1] : vector<4x64xf32> to vector<4xf32>
    %353 = vector.shape_cast %352 : vector<4xf32> to vector<4x1xf32>
    %354 = tpu.reciprocal %353 {approx = true} : vector<4x1xf32> -> vector<4x1xf32>
    %355 = vector.broadcast %354 : vector<4x1xf32> to vector<4x64xf32>
    %356 = arith.mulf %351, %355 : vector<4x64xf32>
    %cst_279 = arith.constant dense<0.000000e+00> : vector<4x8xf32>
    %357 = tpu.matmul %356, %345, %cst_279 {dimension_numbers = #tpu.dot_dimension_numbers<[1], [0], [0], [1], [0, 0, 1, 1], [], []>} : vector<4x64xf32>, vector<64x8xf32>, vector<4x8xf32> -> vector<4x8xf32>
    %c0_280 = arith.constant 0 : index
    %c0_281 = arith.constant 0 : index
    %358 = vector.load %arg37[%c0_280, %c0_281] : memref<4x8xf32, #tpu.memory_space<vmem>>, vector<4x8xf32>
    tpu.vector_store %arg37[%c0_280, %c0_281], %357 {strides = array<i32>} : memref<4x8xf32, #tpu.memory_space<vmem>>, vector<4x8xf32>,
    %c0_282 = arith.constant 0 : index
    %c0_283 = arith.constant 0 : index
    %359 = vector.load %arg37[%c0_282, %c0_283] : memref<4x8xf32, #tpu.memory_space<vmem>>, vector<1x8xf32>
    %c3_284 = arith.constant 3 : index
    %c0_285 = arith.constant 0 : index
    %360 = vector.load %arg38[%c3_284, %c0_285] : memref<4x32xf32, #tpu.memory_space<vmem>>, vector<1x8xf32>
    tpu.vector_store %arg38[%c3_284, %c0_285], %359 {strides = array<i32>} : memref<4x32xf32, #tpu.memory_space<vmem>>, vector<1x8xf32>,
    %c1_286 = arith.constant 1 : index
    %c0_287 = arith.constant 0 : index
    %361 = vector.load %arg37[%c1_286, %c0_287] : memref<4x8xf32, #tpu.memory_space<vmem>>, vector<1x8xf32>
    %c3_288 = arith.constant 3 : index
    %c8_289 = arith.constant 8 : index
    %362 = vector.load %arg38[%c3_288, %c8_289] : memref<4x32xf32, #tpu.memory_space<vmem>>, vector<1x8xf32>
    tpu.vector_store %arg38[%c3_288, %c8_289], %361 {strides = array<i32>} : memref<4x32xf32, #tpu.memory_space<vmem>>, vector<1x8xf32>,
    %c2_290 = arith.constant 2 : index
    %c0_291 = arith.constant 0 : index
    %363 = vector.load %arg37[%c2_290, %c0_291] : memref<4x8xf32, #tpu.memory_space<vmem>>, vector<1x8xf32>
    %c3_292 = arith.constant 3 : index
    %c16_293 = arith.constant 16 : index
    %364 = vector.load %arg38[%c3_292, %c16_293] : memref<4x32xf32, #tpu.memory_space<vmem>>, vector<1x8xf32>
    tpu.vector_store %arg38[%c3_292, %c16_293], %363 {strides = array<i32>} : memref<4x32xf32, #tpu.memory_space<vmem>>, vector<1x8xf32>,
    %c3_294 = arith.constant 3 : index
    %c0_295 = arith.constant 0 : index
    %365 = vector.load %arg37[%c3_294, %c0_295] : memref<4x8xf32, #tpu.memory_space<vmem>>, vector<1x8xf32>
    %c3_296 = arith.constant 3 : index
    %c24_297 = arith.constant 24 : index
    %366 = vector.load %arg38[%c3_296, %c24_297] : memref<4x32xf32, #tpu.memory_space<vmem>>, vector<1x8xf32>
    tpu.vector_store %arg38[%c3_296, %c24_297], %365 {strides = array<i32>} : memref<4x32xf32, #tpu.memory_space<vmem>>, vector<1x8xf32>,
    %367 = arith.addf %346, %346 : vector<4x64xf32>
    %c0_298 = arith.constant 0 : index
    %c0_299 = arith.constant 0 : index
    %368 = vector.load %arg23[%c0_298, %c0_299] : memref<1x64xf32, #tpu.memory_space<vmem>>, vector<1x64xf32>
    %c0_300 = arith.constant 0 : index
    %c0_301 = arith.constant 0 : index
    %369 = vector.load %arg24[%c0_300, %c0_301] : memref<1x64xf32, #tpu.memory_space<vmem>>, vector<1x64xf32>
    %cst_302 = arith.constant dense<0.000000e+00> : vector<4xf32>
    %370 = vector.multi_reduction <add>, %367, %cst_302 [1] : vector<4x64xf32> to vector<4xf32>
    %371 = vector.shape_cast %370 : vector<4xf32> to vector<4x1xf32>
    %cst_303 = arith.constant 6.400000e+01 : f32
    %372 = vector.broadcast %cst_303 : f32 to vector<4x1xf32>
    %373 = arith.divf %371, %372 : vector<4x1xf32>
    %374 = vector.broadcast %373 : vector<4x1xf32> to vector<4x64xf32>
    %375 = arith.subf %367, %374 : vector<4x64xf32>
    %376 = arith.mulf %375, %375 : vector<4x64xf32>
    %cst_304 = arith.constant dense<0.000000e+00> : vector<4xf32>
    %377 = vector.multi_reduction <add>, %376, %cst_304 [1] : vector<4x64xf32> to vector<4xf32>
    %378 = vector.shape_cast %377 : vector<4xf32> to vector<4x1xf32>
    %cst_305 = arith.constant 6.400000e+01 : f32
    %379 = vector.broadcast %cst_305 : f32 to vector<4x1xf32>
    %380 = arith.divf %378, %379 : vector<4x1xf32>
    %cst_306 = arith.constant 9.99999974E-6 : f32
    %381 = vector.broadcast %cst_306 : f32 to vector<4x1xf32>
    %382 = arith.addf %380, %381 : vector<4x1xf32>
    %383 = math.rsqrt %382 : vector<4x1xf32>
    %384 = vector.broadcast %383 : vector<4x1xf32> to vector<4x64xf32>
    %385 = arith.mulf %375, %384 : vector<4x64xf32>
    %386 = vector.broadcast %368 : vector<1x64xf32> to vector<4x64xf32>
    %387 = arith.mulf %385, %386 : vector<4x64xf32>
    %388 = vector.broadcast %369 : vector<1x64xf32> to vector<4x64xf32>
    %389 = arith.addf %387, %388 : vector<4x64xf32>
    %c0_307 = arith.constant 0 : index
    %c0_308 = arith.constant 0 : index
    %390 = vector.load %arg25[%c0_307, %c0_308] : memref<64x64xf32, #tpu.memory_space<vmem>>, vector<64x64xf32>
    %cst_309 = arith.constant dense<0.000000e+00> : vector<4x64xf32>
    %391 = tpu.matmul %389, %390, %cst_309 {dimension_numbers = #tpu.dot_dimension_numbers<[1], [0], [0], [1], [0, 0, 1, 1], [], []>} : vector<4x64xf32>, vector<64x64xf32>, vector<4x64xf32> -> vector<4x64xf32>
    %c0_310 = arith.constant 0 : index
    %c0_311 = arith.constant 0 : index
    %392 = vector.load %arg26[%c0_310, %c0_311] : memref<1x64xf32, #tpu.memory_space<vmem>>, vector<1x64xf32>
    %393 = vector.broadcast %392 : vector<1x64xf32> to vector<4x64xf32>
    %394 = arith.addf %391, %393 : vector<4x64xf32>
    %cst_312 = arith.constant 5.000000e-01 : f32
    %395 = vector.broadcast %cst_312 : f32 to vector<4x64xf32>
    %396 = arith.mulf %395, %394 : vector<4x64xf32>
    %cst_313 = arith.constant 4.471500e-02 : f32
    %397 = vector.broadcast %cst_313 : f32 to vector<4x64xf32>
    %398 = arith.mulf %397, %394 : vector<4x64xf32>
    %399 = arith.mulf %398, %394 : vector<4x64xf32>
    %400 = arith.mulf %399, %394 : vector<4x64xf32>
    %401 = arith.addf %394, %400 : vector<4x64xf32>
    %cst_314 = arith.constant 0.797884583 : f32
    %402 = vector.broadcast %cst_314 : f32 to vector<4x64xf32>
    %403 = arith.mulf %402, %401 : vector<4x64xf32>
    %404 = math.tanh %403 : vector<4x64xf32>
    %cst_315 = arith.constant 1.000000e+00 : f32
    %405 = vector.broadcast %cst_315 : f32 to vector<4x64xf32>
    %406 = arith.addf %405, %404 : vector<4x64xf32>
    %407 = arith.mulf %396, %406 : vector<4x64xf32>
    %c0_316 = arith.constant 0 : index
    %c0_317 = arith.constant 0 : index
    %408 = vector.load %arg27[%c0_316, %c0_317] : memref<64x64xf32, #tpu.memory_space<vmem>>, vector<64x64xf32>
    %cst_318 = arith.constant dense<0.000000e+00> : vector<4x64xf32>
    %409 = tpu.matmul %407, %408, %cst_318 {dimension_numbers = #tpu.dot_dimension_numbers<[1], [0], [0], [1], [0, 0, 1, 1], [], []>} : vector<4x64xf32>, vector<64x64xf32>, vector<4x64xf32> -> vector<4x64xf32>
    %410 = arith.addf %367, %409 : vector<4x64xf32>
    %c0_319 = arith.constant 0 : index
    %c0_320 = arith.constant 0 : index
    %411 = vector.load %arg28[%c0_319, %c0_320] : memref<1x64xf32, #tpu.memory_space<vmem>>, vector<1x64xf32>
    %412 = vector.broadcast %411 : vector<1x64xf32> to vector<4x64xf32>
    %413 = arith.addf %410, %412 : vector<4x64xf32>
    %c3_321 = arith.constant 3 : index
    %c0_322 = arith.constant 0 : index
    %c0_323 = arith.constant 0 : index
    %c0_324 = arith.constant 0 : index
    %414 = vector.load %arg32[%c3_321, %c0_322, %c0_323, %c0_324] : memref<4x1x4x64xf32, #tpu.memory_space<vmem>>, vector<1x1x4x64xf32>
    %415 = vector.shape_cast %414 : vector<1x1x4x64xf32> to vector<4x64xf32>
    %416 = vector.shape_cast %413 : vector<4x64xf32> to vector<1x1x4x64xf32>
    tpu.vector_store %arg32[%c3_321, %c0_322, %c0_323, %c0_324], %416 {strides = array<i32>} : memref<4x1x4x64xf32, #tpu.memory_space<vmem>>, vector<1x1x4x64xf32>,
    %c0_325 = arith.constant 0 : index
    %c0_326 = arith.constant 0 : index
    %417 = vector.load %arg38[%c0_325, %c0_326] : memref<4x32xf32, #tpu.memory_space<vmem>>, vector<4x32xf32>
    %c0_327 = arith.constant 0 : index
    %c0_328 = arith.constant 0 : index
    %418 = vector.load %arg15[%c0_327, %c0_328] : memref<32x32xf32, #tpu.memory_space<vmem>>, vector<32x32xf32>
    %cst_329 = arith.constant dense<0.000000e+00> : vector<4x32xf32>
    %419 = tpu.matmul %417, %418, %cst_329 {dimension_numbers = #tpu.dot_dimension_numbers<[1], [0], [0], [1], [0, 0, 1, 1], [], []>} : vector<4x32xf32>, vector<32x32xf32>, vector<4x32xf32> -> vector<4x32xf32>
    %c0_330 = arith.constant 0 : index
    %c0_331 = arith.constant 0 : index
    %420 = vector.load %arg16[%c0_330, %c0_331] : memref<1x32xf32, #tpu.memory_space<vmem>>, vector<1x32xf32>
    %421 = vector.broadcast %420 : vector<1x32xf32> to vector<4x32xf32>
    %422 = arith.addf %419, %421 : vector<4x32xf32>
    %423 = arith.addf %422, %422 : vector<4x32xf32>
    %c0_332 = arith.constant 0 : index
    %c0_333 = arith.constant 0 : index
    %424 = vector.load %arg17[%c0_332, %c0_333] : memref<1x32xf32, #tpu.memory_space<vmem>>, vector<1x32xf32>
    %c0_334 = arith.constant 0 : index
    %c0_335 = arith.constant 0 : index
    %425 = vector.load %arg18[%c0_334, %c0_335] : memref<1x32xf32, #tpu.memory_space<vmem>>, vector<1x32xf32>
    %cst_336 = arith.constant dense<0.000000e+00> : vector<4xf32>
    %426 = vector.multi_reduction <add>, %423, %cst_336 [1] : vector<4x32xf32> to vector<4xf32>
    %427 = vector.shape_cast %426 : vector<4xf32> to vector<4x1xf32>
    %cst_337 = arith.constant 3.200000e+01 : f32
    %428 = vector.broadcast %cst_337 : f32 to vector<4x1xf32>
    %429 = arith.divf %427, %428 : vector<4x1xf32>
    %430 = vector.broadcast %429 : vector<4x1xf32> to vector<4x32xf32>
    %431 = arith.subf %423, %430 : vector<4x32xf32>
    %432 = arith.mulf %431, %431 : vector<4x32xf32>
    %cst_338 = arith.constant dense<0.000000e+00> : vector<4xf32>
    %433 = vector.multi_reduction <add>, %432, %cst_338 [1] : vector<4x32xf32> to vector<4xf32>
    %434 = vector.shape_cast %433 : vector<4xf32> to vector<4x1xf32>
    %cst_339 = arith.constant 3.200000e+01 : f32
    %435 = vector.broadcast %cst_339 : f32 to vector<4x1xf32>
    %436 = arith.divf %434, %435 : vector<4x1xf32>
    %cst_340 = arith.constant 9.99999974E-6 : f32
    %437 = vector.broadcast %cst_340 : f32 to vector<4x1xf32>
    %438 = arith.addf %436, %437 : vector<4x1xf32>
    %439 = math.rsqrt %438 : vector<4x1xf32>
    %440 = vector.broadcast %439 : vector<4x1xf32> to vector<4x32xf32>
    %441 = arith.mulf %431, %440 : vector<4x32xf32>
    %442 = vector.broadcast %424 : vector<1x32xf32> to vector<4x32xf32>
    %443 = arith.mulf %441, %442 : vector<4x32xf32>
    %444 = vector.broadcast %425 : vector<1x32xf32> to vector<4x32xf32>
    %445 = arith.addf %443, %444 : vector<4x32xf32>
    %c0_341 = arith.constant 0 : index
    %c0_342 = arith.constant 0 : index
    %446 = vector.load %arg19[%c0_341, %c0_342] : memref<32x128xf32, #tpu.memory_space<vmem>>, vector<32x128xf32>
    %cst_343 = arith.constant dense<0.000000e+00> : vector<4x128xf32>
    %447 = tpu.matmul %445, %446, %cst_343 {dimension_numbers = #tpu.dot_dimension_numbers<[1], [0], [0], [1], [0, 0, 1, 1], [], []>} : vector<4x32xf32>, vector<32x128xf32>, vector<4x128xf32> -> vector<4x128xf32>
    %c0_344 = arith.constant 0 : index
    %c0_345 = arith.constant 0 : index
    %448 = vector.load %arg20[%c0_344, %c0_345] : memref<1x128xf32, #tpu.memory_space<vmem>>, vector<1x128xf32>
    %449 = vector.broadcast %448 : vector<1x128xf32> to vector<4x128xf32>
    %450 = arith.addf %447, %449 : vector<4x128xf32>
    %cst_346 = arith.constant 5.000000e-01 : f32
    %451 = vector.broadcast %cst_346 : f32 to vector<4x128xf32>
    %452 = arith.mulf %451, %450 : vector<4x128xf32>
    %cst_347 = arith.constant 4.471500e-02 : f32
    %453 = vector.broadcast %cst_347 : f32 to vector<4x128xf32>
    %454 = arith.mulf %453, %450 : vector<4x128xf32>
    %455 = arith.mulf %454, %450 : vector<4x128xf32>
    %456 = arith.mulf %455, %450 : vector<4x128xf32>
    %457 = arith.addf %450, %456 : vector<4x128xf32>
    %cst_348 = arith.constant 0.797884583 : f32
    %458 = vector.broadcast %cst_348 : f32 to vector<4x128xf32>
    %459 = arith.mulf %458, %457 : vector<4x128xf32>
    %460 = math.tanh %459 : vector<4x128xf32>
    %cst_349 = arith.constant 1.000000e+00 : f32
    %461 = vector.broadcast %cst_349 : f32 to vector<4x128xf32>
    %462 = arith.addf %461, %460 : vector<4x128xf32>
    %463 = arith.mulf %452, %462 : vector<4x128xf32>
    %c0_350 = arith.constant 0 : index
    %c0_351 = arith.constant 0 : index
    %464 = vector.load %arg21[%c0_350, %c0_351] : memref<128x32xf32, #tpu.memory_space<vmem>>, vector<128x32xf32>
    %cst_352 = arith.constant dense<0.000000e+00> : vector<4x32xf32>
    %465 = tpu.matmul %463, %464, %cst_352 {dimension_numbers = #tpu.dot_dimension_numbers<[1], [0], [0], [1], [0, 0, 1, 1], [], []>} : vector<4x128xf32>, vector<128x32xf32>, vector<4x32xf32> -> vector<4x32xf32>
    %466 = arith.addf %423, %465 : vector<4x32xf32>
    %c0_353 = arith.constant 0 : index
    %c0_354 = arith.constant 0 : index
    %467 = vector.load %arg22[%c0_353, %c0_354] : memref<1x32xf32, #tpu.memory_space<vmem>>, vector<1x32xf32>
    %468 = vector.broadcast %467 : vector<1x32xf32> to vector<4x32xf32>
    %469 = arith.addf %466, %468 : vector<4x32xf32>
    %c0_355 = arith.constant 0 : index
    %c0_356 = arith.constant 0 : index
    %c0_357 = arith.constant 0 : index
    %470 = vector.load %arg31[%c0_355, %c0_356, %c0_357] : memref<1x4x32xf32, #tpu.memory_space<vmem>>, vector<1x4x32xf32>
    %471 = vector.shape_cast %470 : vector<1x4x32xf32> to vector<4x32xf32>
    %472 = vector.shape_cast %469 : vector<4x32xf32> to vector<1x4x32xf32>
    tpu.vector_store %arg31[%c0_355, %c0_356, %c0_357], %472 {strides = array<i32>} : memref<1x4x32xf32, #tpu.memory_space<vmem>>, vector<1x4x32xf32>,
    %c0_358 = arith.constant 0 : index
    %c0_359 = arith.constant 0 : index
    %473 = vector.load %arg29[%c0_358, %c0_359] : memref<32x16xf32, #tpu.memory_space<vmem>>, vector<32x16xf32>
    %cst_360 = arith.constant dense<0.000000e+00> : vector<4x16xf32>
    %474 = tpu.matmul %469, %473, %cst_360 {dimension_numbers = #tpu.dot_dimension_numbers<[1], [0], [0], [1], [0, 0, 1, 1], [], []>} : vector<4x32xf32>, vector<32x16xf32>, vector<4x16xf32> -> vector<4x16xf32>
    %c0_361 = arith.constant 0 : index
    %c0_362 = arith.constant 0 : index
    %475 = vector.load %arg30[%c0_361, %c0_362] : memref<1x16xf32, #tpu.memory_space<vmem>>, vector<1x16xf32>
    %476 = vector.broadcast %475 : vector<1x16xf32> to vector<4x16xf32>
    %477 = arith.addf %474, %476 : vector<4x16xf32>
    %c0_363 = arith.constant 0 : index
    %c0_364 = arith.constant 0 : index
    %c0_365 = arith.constant 0 : index
    %478 = vector.load %arg33[%c0_363, %c0_364, %c0_365] : memref<1x4x16xf32, #tpu.memory_space<vmem>>, vector<1x4x16xf32>
    %479 = vector.shape_cast %478 : vector<1x4x16xf32> to vector<4x16xf32>
    %480 = vector.shape_cast %477 : vector<4x16xf32> to vector<1x4x16xf32>
    tpu.vector_store %arg33[%c0_363, %c0_364, %c0_365], %480 {strides = array<i32>} : memref<1x4x16xf32, #tpu.memory_space<vmem>>, vector<1x4x16xf32>,
    return
  }
  func.func @transform_0(%arg0: i32) -> (i32, i32, i32) {
    %c0_i32 = arith.constant 0 : i32
    %c0_i32_0 = arith.constant 0 : i32
    %c0_i32_1 = arith.constant 0 : i32
    return %arg0, %c0_i32, %c0_i32_0 : i32, i32, i32
  }
  func.func @transform_1(%arg0: i32) -> (i32, i32, i32) {
    %c0_i32 = arith.constant 0 : i32
    %c0_i32_0 = arith.constant 0 : i32
    %c0_i32_1 = arith.constant 0 : i32
    return %arg0, %c0_i32, %c0_i32_0 : i32, i32, i32
  }
  func.func @transform_2(%arg0: i32) -> (i32, i32) {
    %c0_i32 = arith.constant 0 : i32
    %c0_i32_0 = arith.constant 0 : i32
    %c0_i32_1 = arith.constant 0 : i32
    return %c0_i32, %c0_i32_0 : i32, i32
  }
  func.func @transform_3(%arg0: i32) -> (i32, i32) {
    %c0_i32 = arith.constant 0 : i32
    %c0_i32_0 = arith.constant 0 : i32
    %c0_i32_1 = arith.constant 0 : i32
    return %c0_i32, %c0_i32_0 : i32, i32
  }
  func.func @transform_4(%arg0: i32) -> (i32, i32) {
    %c0_i32 = arith.constant 0 : i32
    %c0_i32_0 = arith.constant 0 : i32
    %c0_i32_1 = arith.constant 0 : i32
    return %c0_i32, %c0_i32_0 : i32, i32
  }
  func.func @transform_5(%arg0: i32) -> (i32, i32) {
    %c0_i32 = arith.constant 0 : i32
    %c0_i32_0 = arith.constant 0 : i32
    %c0_i32_1 = arith.constant 0 : i32
    return %c0_i32, %c0_i32_0 : i32, i32
  }
  func.func @transform_6(%arg0: i32) -> (i32, i32) {
    %c0_i32 = arith.constant 0 : i32
    %c0_i32_0 = arith.constant 0 : i32
    %c0_i32_1 = arith.constant 0 : i32
    return %c0_i32, %c0_i32_0 : i32, i32
  }
  func.func @transform_7(%arg0: i32) -> (i32, i32) {
    %c0_i32 = arith.constant 0 : i32
    %c0_i32_0 = arith.constant 0 : i32
    %c0_i32_1 = arith.constant 0 : i32
    return %c0_i32, %c0_i32_0 : i32, i32
  }
  func.func @transform_8(%arg0: i32) -> (i32, i32) {
    %c0_i32 = arith.constant 0 : i32
    %c0_i32_0 = arith.constant 0 : i32
    %c0_i32_1 = arith.constant 0 : i32
    return %c0_i32, %c0_i32_0 : i32, i32
  }
  func.func @transform_9(%arg0: i32) -> (i32, i32) {
    %c0_i32 = arith.constant 0 : i32
    %c0_i32_0 = arith.constant 0 : i32
    %c0_i32_1 = arith.constant 0 : i32
    return %c0_i32, %c0_i32_0 : i32, i32
  }
  func.func @transform_10(%arg0: i32) -> (i32, i32) {
    %c0_i32 = arith.constant 0 : i32
    %c0_i32_0 = arith.constant 0 : i32
    %c0_i32_1 = arith.constant 0 : i32
    return %c0_i32, %c0_i32_0 : i32, i32
  }
  func.func @transform_11(%arg0: i32) -> (i32, i32) {
    %c0_i32 = arith.constant 0 : i32
    %c0_i32_0 = arith.constant 0 : i32
    %c0_i32_1 = arith.constant 0 : i32
    return %c0_i32, %c0_i32_0 : i32, i32
  }
  func.func @transform_12(%arg0: i32) -> (i32, i32) {
    %c0_i32 = arith.constant 0 : i32
    %c0_i32_0 = arith.constant 0 : i32
    %c0_i32_1 = arith.constant 0 : i32
    return %c0_i32, %c0_i32_0 : i32, i32
  }
  func.func @transform_13(%arg0: i32) -> (i32, i32) {
    %c0_i32 = arith.constant 0 : i32
    %c0_i32_0 = arith.constant 0 : i32
    %c0_i32_1 = arith.constant 0 : i32
    return %c0_i32, %c0_i32_0 : i32, i32
  }
  func.func @transform_14(%arg0: i32) -> (i32, i32) {
    %c0_i32 = arith.constant 0 : i32
    %c0_i32_0 = arith.constant 0 : i32
    %c0_i32_1 = arith.constant 0 : i32
    return %c0_i32, %c0_i32_0 : i32, i32
  }
  func.func @transform_15(%arg0: i32) -> (i32, i32) {
    %c0_i32 = arith.constant 0 : i32
    %c0_i32_0 = arith.constant 0 : i32
    %c0_i32_1 = arith.constant 0 : i32
    return %c0_i32, %c0_i32_0 : i32, i32
  }
  func.func @transform_16(%arg0: i32) -> (i32, i32) {
    %c0_i32 = arith.constant 0 : i32
    %c0_i32_0 = arith.constant 0 : i32
    %c0_i32_1 = arith.constant 0 : i32
    return %c0_i32, %c0_i32_0 : i32, i32
  }
  func.func @transform_17(%arg0: i32) -> (i32, i32) {
    %c0_i32 = arith.constant 0 : i32
    %c0_i32_0 = arith.constant 0 : i32
    %c0_i32_1 = arith.constant 0 : i32
    return %c0_i32, %c0_i32_0 : i32, i32
  }
  func.func @transform_18(%arg0: i32) -> (i32, i32) {
    %c0_i32 = arith.constant 0 : i32
    %c0_i32_0 = arith.constant 0 : i32
    %c0_i32_1 = arith.constant 0 : i32
    return %c0_i32, %c0_i32_0 : i32, i32
  }
  func.func @transform_19(%arg0: i32) -> (i32, i32) {
    %c0_i32 = arith.constant 0 : i32
    %c0_i32_0 = arith.constant 0 : i32
    %c0_i32_1 = arith.constant 0 : i32
    return %c0_i32, %c0_i32_0 : i32, i32
  }
  func.func @transform_20(%arg0: i32) -> (i32, i32) {
    %c0_i32 = arith.constant 0 : i32
    %c0_i32_0 = arith.constant 0 : i32
    %c0_i32_1 = arith.constant 0 : i32
    return %c0_i32, %c0_i32_0 : i32, i32
  }
  func.func @transform_21(%arg0: i32) -> (i32, i32) {
    %c0_i32 = arith.constant 0 : i32
    %c0_i32_0 = arith.constant 0 : i32
    %c0_i32_1 = arith.constant 0 : i32
    return %c0_i32, %c0_i32_0 : i32, i32
  }
  func.func @transform_22(%arg0: i32) -> (i32, i32) {
    %c0_i32 = arith.constant 0 : i32
    %c0_i32_0 = arith.constant 0 : i32
    %c0_i32_1 = arith.constant 0 : i32
    return %c0_i32, %c0_i32_0 : i32, i32
  }
  func.func @transform_23(%arg0: i32) -> (i32, i32) {
    %c0_i32 = arith.constant 0 : i32
    %c0_i32_0 = arith.constant 0 : i32
    %c0_i32_1 = arith.constant 0 : i32
    return %c0_i32, %c0_i32_0 : i32, i32
  }
  func.func @transform_24(%arg0: i32) -> (i32, i32) {
    %c0_i32 = arith.constant 0 : i32
    %c0_i32_0 = arith.constant 0 : i32
    %c0_i32_1 = arith.constant 0 : i32
    return %c0_i32, %c0_i32_0 : i32, i32
  }
  func.func @transform_25(%arg0: i32) -> (i32, i32) {
    %c0_i32 = arith.constant 0 : i32
    %c0_i32_0 = arith.constant 0 : i32
    %c0_i32_1 = arith.constant 0 : i32
    return %c0_i32, %c0_i32_0 : i32, i32
  }
  func.func @transform_26(%arg0: i32) -> (i32, i32) {
    %c0_i32 = arith.constant 0 : i32
    %c0_i32_0 = arith.constant 0 : i32
    %c0_i32_1 = arith.constant 0 : i32
    return %c0_i32, %c0_i32_0 : i32, i32
  }
  func.func @transform_27(%arg0: i32) -> (i32, i32) {
    %c0_i32 = arith.constant 0 : i32
    %c0_i32_0 = arith.constant 0 : i32
    %c0_i32_1 = arith.constant 0 : i32
    return %c0_i32, %c0_i32_0 : i32, i32
  }
  func.func @transform_28(%arg0: i32) -> (i32, i32) {
    %c0_i32 = arith.constant 0 : i32
    %c0_i32_0 = arith.constant 0 : i32
    %c0_i32_1 = arith.constant 0 : i32
    return %c0_i32, %c0_i32_0 : i32, i32
  }
  func.func @transform_29(%arg0: i32) -> (i32, i32) {
    %c0_i32 = arith.constant 0 : i32
    %c0_i32_0 = arith.constant 0 : i32
    %c0_i32_1 = arith.constant 0 : i32
    return %c0_i32, %c0_i32_0 : i32, i32
  }
  func.func @transform_30(%arg0: i32) -> (i32, i32, i32) {
    %c0_i32 = arith.constant 0 : i32
    %c0_i32_0 = arith.constant 0 : i32
    %c0_i32_1 = arith.constant 0 : i32
    return %arg0, %c0_i32, %c0_i32_0 : i32, i32, i32
  }
  func.func @transform_31(%arg0: i32) -> (i32, i32, i32, i32) {
    %c0_i32 = arith.constant 0 : i32
    %c0_i32_0 = arith.constant 0 : i32
    %c0_i32_1 = arith.constant 0 : i32
    %c0_i32_2 = arith.constant 0 : i32
    return %c0_i32, %arg0, %c0_i32_0, %c0_i32_1 : i32, i32, i32, i32
  }
  func.func @transform_32(%arg0: i32) -> (i32, i32, i32) {
    %c0_i32 = arith.constant 0 : i32
    %c0_i32_0 = arith.constant 0 : i32
    %c0_i32_1 = arith.constant 0 : i32
    return %arg0, %c0_i32, %c0_i32_0 : i32, i32, i32
  }
}

</mosaic_0001>

<llo_original>
// kernel: tpu_custom_call.1
$region0: #{tpu_custom_call.1}
  #allocation0 [shape = 'u32[]', space=smem, size = 0x4, offset = 0x4, fixed_abs, tag = 'smem constant byte address 0x4 - core index']
  #allocation1 [shape = 'u32[144,128]{1,0:T(1,128)}', space=vmem, size = 0x12000, scoped, tag = 'internal scratch']
  #allocation2 [shape = 'f32[64,64]{1,0:T(8,128)}', space=vmem, size = 0x8000, scoped, tag = 'scratch operand']
  #allocation3 [shape = 'f32[4,32]{1,0:T(4,128)}', space=vmem, size = 0x800, scoped, tag = 'scratch operand']
  #allocation4 [shape = 'f32[4,8]{1,0:T(4,128)}', space=vmem, size = 0x800, scoped, tag = 'scratch operand']
  #allocation5 [shape = 'f32[4,8]{1,0:T(4,128)}', space=vmem, size = 0x800, scoped, tag = 'scratch operand']
  #allocation6 [shape = 'f32[4,32]{1,0:T(4,128)}', space=vmem, size = 0x800, scoped, tag = 'scratch operand']
  %s0 = inlined_call_operand.smem [shape: u32[33], index: -1, kind: input, shape index: {}]
  %s1 = sld [smem:[%s0]]
  %s2 = scalar_lea.smem %s0, 1
  %s3 = sld [smem:[%s2]]
  %s4 = scalar_lea.smem %s0, 2
  %s5 = sld [smem:[%s4]]
  %s6 = scalar_lea.smem %s0, 3
  %s7 = sld [smem:[%s6]]
  %s8 = scalar_lea.smem %s0, 4
  %s9 = sld [smem:[%s8]]
  %s10 = scalar_lea.smem %s0, 5
  %s11 = sld [smem:[%s10]]
  %s12 = scalar_lea.smem %s0, 6
  %s13 = sld [smem:[%s12]]
  %s14 = scalar_lea.smem %s0, 7
  %s15 = sld [smem:[%s14]]
  %s16 = scalar_lea.smem %s0, 8
  %s17 = sld [smem:[%s16]]
  %s18 = scalar_lea.smem %s0, 9
  %s19 = sld [smem:[%s18]]
  %s20 = scalar_lea.smem %s0, 10
  %s21 = sld [smem:[%s20]]
  %s22 = scalar_lea.smem %s0, 11
  %s23 = sld [smem:[%s22]]
  %s24 = scalar_lea.smem %s0, 12
  %s25 = sld [smem:[%s24]]
  %s26 = scalar_lea.smem %s0, 13
  %s27 = sld [smem:[%s26]]
  %s28 = scalar_lea.smem %s0, 14
  %s29 = sld [smem:[%s28]]
  %s30 = scalar_lea.smem %s0, 15
  %s31 = sld [smem:[%s30]]
  %s32 = scalar_lea.smem %s0, 16
  %s33 = sld [smem:[%s32]]
  %s34 = scalar_lea.smem %s0, 17
  %s35 = sld [smem:[%s34]]
  %s36 = scalar_lea.smem %s0, 18
  %s37 = sld [smem:[%s36]]
  %s38 = scalar_lea.smem %s0, 19
  %s39 = sld [smem:[%s38]]
  %s40 = scalar_lea.smem %s0, 20
  %s41 = sld [smem:[%s40]]
  %s42 = scalar_lea.smem %s0, 21
  %s43 = sld [smem:[%s42]]
  %s44 = scalar_lea.smem %s0, 22
  %s45 = sld [smem:[%s44]]
  %s46 = scalar_lea.smem %s0, 23
  %s47 = sld [smem:[%s46]]
  %s48 = scalar_lea.smem %s0, 24
  %s49 = sld [smem:[%s48]]
  %s50 = scalar_lea.smem %s0, 25
  %s51 = sld [smem:[%s50]]
  %s52 = scalar_lea.smem %s0, 26
  %s53 = sld [smem:[%s52]]
  %s54 = scalar_lea.smem %s0, 27
  %s55 = sld [smem:[%s54]]
  %s56 = scalar_lea.smem %s0, 28
  %s57 = sld [smem:[%s56]]
  %s58 = scalar_lea.smem %s0, 29
  %s59 = sld [smem:[%s58]]
  %s60 = scalar_lea.smem %s0, 30
  %s61 = sld [smem:[%s60]]
  %s62 = scalar_lea.smem %s0, 31
  %s63 = sld [smem:[%s62]]
  %s64 = scalar_lea.smem %s0, 32
  %s65 = sld [smem:[%s64]]
  %66 = xla_tuple %s61, %s63, %s65
  %s67 = sld [smem:[#allocation0]]
  $region169: #{tpu_custom_call.1} parent=0
    _
  %s69 = ssub.s32 1, %s67
  %s70 = scalar_select 0, %s69, %s67
  $region1: #{tpu_custom_call.1} parent=0
    #allocation7 [shape = 'u8[4096]{0}', space=vmem, size = 0x1000, scoped, tag = 'output window, operand 0']
    #allocation8 [shape = 's32[2]{0}', space=sflag, size = 0x8, scoped, tag = 'scoped memory for tpu_custom_call.1']
    #allocation9 [shape = 'u8[16384]{0}', space=vmem, size = 0x4000, scoped, tag = 'output window, operand 1']
    #allocation10 [shape = 's32[2]{0}', space=sflag, size = 0x8, scoped, tag = 'scoped memory for tpu_custom_call.1']
    #allocation11 [shape = 'u8[4096]{0}', space=vmem, size = 0x1000, scoped, tag = 'output window, operand 2']
    %71 = vsyncpa [#allocation8], 0
    %s72 = scalar_lea.sflag [#allocation8], 1
    %73 = vsyncpa %s72, 0
    %74 = vsyncpa [#allocation10], 0
    %s75 = scalar_lea.sflag [#allocation10], 1
    %76 = vsyncpa %s75, 0
    loop: start=0, step=1, limit=4
    $region2: #{tpu_custom_call.1} parent=1 // loop_pre_header
      _
    $region3: #{tpu_custom_call.1} parent=1 // loop_header
      %s78 = sphi 0, %s82
      %p79 = scmp.ge.s32.totalorder %s78, 4
      %s88 = sphi 0, %s90
      %s91 = sphi 0, %s88
      %s92 = sphi 0, %s91
      %s108 = sphi 0, %s92
      %s114 = sphi 0, %s116
      %s117 = sphi 0, %s114
      %s118 = sphi 0, %s117
      %s134 = sphi 0, %s118
      %s138 = sphi 0, %s138
      %s140 = sphi 0, %s138
      %s141 = sphi 0, %s140
      %s155 = sphi 0, %s141
      %s159 = sphi 0, %s159
      %s161 = sphi 0, %s159
      %s162 = sphi 0, %s161
      %s176 = sphi 0, %s162
      %s180 = sphi 0, %s180
      %s182 = sphi 0, %s180
      %s183 = sphi 0, %s182
      %s197 = sphi 0, %s183
      %s201 = sphi 0, %s201
      %s203 = sphi 0, %s201
      %s204 = sphi 0, %s203
      %s218 = sphi 0, %s204
      %s222 = sphi 0, %s222
      %s224 = sphi 0, %s222
      %s225 = sphi 0, %s224
      %s239 = sphi 0, %s225
      %s243 = sphi 0, %s243
      %s245 = sphi 0, %s243
      %s246 = sphi 0, %s245
      %s260 = sphi 0, %s246
      %s264 = sphi 0, %s264
      %s266 = sphi 0, %s264
      %s267 = sphi 0, %s266
      %s281 = sphi 0, %s267
      %s285 = sphi 0, %s285
      %s287 = sphi 0, %s285
      %s288 = sphi 0, %s287
      %s302 = sphi 0, %s288
      %s306 = sphi 0, %s306
      %s308 = sphi 0, %s306
      %s309 = sphi 0, %s308
      %s323 = sphi 0, %s309
      %s327 = sphi 0, %s327
      %s329 = sphi 0, %s327
      %s330 = sphi 0, %s329
      %s344 = sphi 0, %s330
      %s348 = sphi 0, %s348
      %s350 = sphi 0, %s348
      %s351 = sphi 0, %s350
      %s365 = sphi 0, %s351
      %s369 = sphi 0, %s369
      %s371 = sphi 0, %s369
      %s372 = sphi 0, %s371
      %s386 = sphi 0, %s372
      %s390 = sphi 0, %s390
      %s392 = sphi 0, %s390
      %s393 = sphi 0, %s392
      %s407 = sphi 0, %s393
      %s411 = sphi 0, %s411
      %s413 = sphi 0, %s411
      %s414 = sphi 0, %s413
      %s428 = sphi 0, %s414
      %s432 = sphi 0, %s432
      %s434 = sphi 0, %s432
      %s435 = sphi 0, %s434
      %s449 = sphi 0, %s435
      %s453 = sphi 0, %s453
      %s455 = sphi 0, %s453
      %s456 = sphi 0, %s455
      %s470 = sphi 0, %s456
      %s474 = sphi 0, %s474
      %s476 = sphi 0, %s474
      %s477 = sphi 0, %s476
      %s491 = sphi 0, %s477
      %s495 = sphi 0, %s495
      %s497 = sphi 0, %s495
      %s498 = sphi 0, %s497
      %s512 = sphi 0, %s498
      %s516 = sphi 0, %s516
      %s518 = sphi 0, %s516
      %s519 = sphi 0, %s518
      %s533 = sphi 0, %s519
      %s537 = sphi 0, %s537
      %s539 = sphi 0, %s537
      %s540 = sphi 0, %s539
      %s554 = sphi 0, %s540
      %s558 = sphi 0, %s558
      %s560 = sphi 0, %s558
      %s561 = sphi 0, %s560
      %s575 = sphi 0, %s561
      %s579 = sphi 0, %s579
      %s581 = sphi 0, %s579
      %s582 = sphi 0, %s581
      %s596 = sphi 0, %s582
      %s600 = sphi 0, %s600
      %s602 = sphi 0, %s600
      %s603 = sphi 0, %s602
      %s617 = sphi 0, %s603
      %s621 = sphi 0, %s621
      %s623 = sphi 0, %s621
      %s624 = sphi 0, %s623
      %s638 = sphi 0, %s624
      %s642 = sphi 0, %s642
      %s644 = sphi 0, %s642
      %s645 = sphi 0, %s644
      %s659 = sphi 0, %s645
      %s663 = sphi 0, %s663
      %s665 = sphi 0, %s663
      %s666 = sphi 0, %s665
      %s680 = sphi 0, %s666
      %s684 = sphi 0, %s684
      %s686 = sphi 0, %s684
      %s687 = sphi 0, %s686
      %s701 = sphi 0, %s687
      %s705 = sphi 0, %s705
      %s707 = sphi 0, %s705
      %s708 = sphi 0, %s707
      %s722 = sphi 0, %s708
      %s728 = sphi 0, %s730
      %s731 = sphi 0, %s728
      %s732 = sphi 0, %s731
      %s748 = sphi 0, %s732
      %s754 = sphi 0, %s756
      %s757 = sphi 0, %s754
      %s758 = sphi 0, %s757
      %s774 = sphi 0, %s758
      %s780 = sphi 0, %s782
      %s783 = sphi 0, %s780
      %s784 = sphi 0, %s783
      %s800 = sphi 0, %s784
    $region4: #{tpu_custom_call.1} parent=1 // loop_header_branch
      %81 = sbr.rel (%p79) target = $region8
    $region5: #{tpu_custom_call.1} parent=1 // loop_body
      %s83 = ssub.s32 %s78, 1
      %s84 = ssub.s32 %s78, 2
      %s85 = sadd.s32 %s78, 1
      %s86 = ssub.s32 %s78, %s85
      %p87 = scmp.eq.s32.totalorder %s86, 0
      %s89 = sadd.s32 %s88, 1
      %s90 = scalar_select %p87, %s88, %s89
      %p93 = pneg %p87
      %p94 = scmp.eq.s32.totalorder %s78, 1
      %p95 = por %p93, %p94
      %p96 = scmp.ne.s32.totalorder %s88, %s91
      %p97 = scmp.eq.s32.totalorder %s78, 0
      %p98 = por %p96, %p97
      %p99 = scmp.ne.s32.totalorder %s88, %s91
      %p100 = scmp.eq.s32.totalorder %s83, 1
      %p101 = por %p99, %p100
      %p102 = scmp.ne.s32.totalorder %s91, %s92
      %p103 = scmp.eq.s32.totalorder %s83, 0
      %p104 = por %p102, %p103
      %p105 = scmp.ne.s32.totalorder %s91, %s92
      %p106 = scmp.eq.s32.totalorder %s84, 1
      %p107 = por %p105, %p106
      %p109 = scmp.ne.s32.totalorder %s92, %s108
      %p110 = scmp.eq.s32.totalorder %s84, 0
      %p111 = por %p109, %p110
      %s112 = ssub.s32 %s78, %s85
      %p113 = scmp.eq.s32.totalorder %s112, 0
      %s115 = sadd.s32 %s114, 1
      %s116 = scalar_select %p113, %s114, %s115
      %p119 = pneg %p113
      %p120 = scmp.eq.s32.totalorder %s78, 1
      %p121 = por %p119, %p120
      %p122 = scmp.ne.s32.totalorder %s114, %s117
      %p123 = scmp.eq.s32.totalorder %s78, 0
      %p124 = por %p122, %p123
      %p125 = scmp.ne.s32.totalorder %s114, %s117
      %p126 = scmp.eq.s32.totalorder %s83, 1
      %p127 = por %p125, %p126
      %p128 = scmp.ne.s32.totalorder %s117, %s118
      %p129 = scmp.eq.s32.totalorder %s83, 0
      %p130 = por %p128, %p129
      %p131 = scmp.ne.s32.totalorder %s117, %s118
      %p132 = scmp.eq.s32.totalorder %s84, 1
      %p133 = por %p131, %p132
      %p135 = scmp.ne.s32.totalorder %s118, %s134
      %p136 = scmp.eq.s32.totalorder %s84, 0
      %p137 = por %p135, %p136
      %s139 = sadd.s32 %s138, 1
      %p142 = scmp.eq.s32.totalorder %s78, 1
      %p143 = scmp.ne.s32.totalorder %s138, %s140
      %p144 = scmp.eq.s32.totalorder %s78, 0
      %p145 = por %p143, %p144
      %p146 = scmp.ne.s32.totalorder %s138, %s140
      %p147 = scmp.eq.s32.totalorder %s83, 1
      %p148 = por %p146, %p147
      %p149 = scmp.ne.s32.totalorder %s140, %s141
      %p150 = scmp.eq.s32.totalorder %s83, 0
      %p151 = por %p149, %p150
      %p152 = scmp.ne.s32.totalorder %s140, %s141
      %p153 = scmp.eq.s32.totalorder %s84, 1
      %p154 = por %p152, %p153
      %p156 = scmp.ne.s32.totalorder %s141, %s155
      %p157 = scmp.eq.s32.totalorder %s84, 0
      %p158 = por %p156, %p157
      %s160 = sadd.s32 %s159, 1
      %p163 = scmp.eq.s32.totalorder %s78, 1
      %p164 = scmp.ne.s32.totalorder %s159, %s161
      %p165 = scmp.eq.s32.totalorder %s78, 0
      %p166 = por %p164, %p165
      %p167 = scmp.ne.s32.totalorder %s159, %s161
      %p168 = scmp.eq.s32.totalorder %s83, 1
      %p169 = por %p167, %p168
      %p170 = scmp.ne.s32.totalorder %s161, %s162
      %p171 = scmp.eq.s32.totalorder %s83, 0
      %p172 = por %p170, %p171
      %p173 = scmp.ne.s32.totalorder %s161, %s162
      %p174 = scmp.eq.s32.totalorder %s84, 1
      %p175 = por %p173, %p174
      %p177 = scmp.ne.s32.totalorder %s162, %s176
      %p178 = scmp.eq.s32.totalorder %s84, 0
      %p179 = por %p177, %p178
      %s181 = sadd.s32 %s180, 1
      %p184 = scmp.eq.s32.totalorder %s78, 1
      %p185 = scmp.ne.s32.totalorder %s180, %s182
      %p186 = scmp.eq.s32.totalorder %s78, 0
      %p187 = por %p185, %p186
      %p188 = scmp.ne.s32.totalorder %s180, %s182
      %p189 = scmp.eq.s32.totalorder %s83, 1
      %p190 = por %p188, %p189
      %p191 = scmp.ne.s32.totalorder %s182, %s183
      %p192 = scmp.eq.s32.totalorder %s83, 0
      %p193 = por %p191, %p192
      %p194 = scmp.ne.s32.totalorder %s182, %s183
      %p195 = scmp.eq.s32.totalorder %s84, 1
      %p196 = por %p194, %p195
      %p198 = scmp.ne.s32.totalorder %s183, %s197
      %p199 = scmp.eq.s32.totalorder %s84, 0
      %p200 = por %p198, %p199
      %s202 = sadd.s32 %s201, 1
      %p205 = scmp.eq.s32.totalorder %s78, 1
      %p206 = scmp.ne.s32.totalorder %s201, %s203
      %p207 = scmp.eq.s32.totalorder %s78, 0
      %p208 = por %p206, %p207
      %p209 = scmp.ne.s32.totalorder %s201, %s203
      %p210 = scmp.eq.s32.totalorder %s83, 1
      %p211 = por %p209, %p210
      %p212 = scmp.ne.s32.totalorder %s203, %s204
      %p213 = scmp.eq.s32.totalorder %s83, 0
      %p214 = por %p212, %p213
      %p215 = scmp.ne.s32.totalorder %s203, %s204
      %p216 = scmp.eq.s32.totalorder %s84, 1
      %p217 = por %p215, %p216
      %p219 = scmp.ne.s32.totalorder %s204, %s218
      %p220 = scmp.eq.s32.totalorder %s84, 0
      %p221 = por %p219, %p220
      %s223 = sadd.s32 %s222, 1
      %p226 = scmp.eq.s32.totalorder %s78, 1
      %p227 = scmp.ne.s32.totalorder %s222, %s224
      %p228 = scmp.eq.s32.totalorder %s78, 0
      %p229 = por %p227, %p228
      %p230 = scmp.ne.s32.totalorder %s222, %s224
      %p231 = scmp.eq.s32.totalorder %s83, 1
      %p232 = por %p230, %p231
      %p233 = scmp.ne.s32.totalorder %s224, %s225
      %p234 = scmp.eq.s32.totalorder %s83, 0
      %p235 = por %p233, %p234
      %p236 = scmp.ne.s32.totalorder %s224, %s225
      %p237 = scmp.eq.s32.totalorder %s84, 1
      %p238 = por %p236, %p237
      %p240 = scmp.ne.s32.totalorder %s225, %s239
      %p241 = scmp.eq.s32.totalorder %s84, 0
      %p242 = por %p240, %p241
      %s244 = sadd.s32 %s243, 1
      %p247 = scmp.eq.s32.totalorder %s78, 1
      %p248 = scmp.ne.s32.totalorder %s243, %s245
      %p249 = scmp.eq.s32.totalorder %s78, 0
      %p250 = por %p248, %p249
      %p251 = scmp.ne.s32.totalorder %s243, %s245
      %p252 = scmp.eq.s32.totalorder %s83, 1
      %p253 = por %p251, %p252
      %p254 = scmp.ne.s32.totalorder %s245, %s246
      %p255 = scmp.eq.s32.totalorder %s83, 0
      %p256 = por %p254, %p255
      %p257 = scmp.ne.s32.totalorder %s245, %s246
      %p258 = scmp.eq.s32.totalorder %s84, 1
      %p259 = por %p257, %p258
      %p261 = scmp.ne.s32.totalorder %s246, %s260
      %p262 = scmp.eq.s32.totalorder %s84, 0
      %p263 = por %p261, %p262
      %s265 = sadd.s32 %s264, 1
      %p268 = scmp.eq.s32.totalorder %s78, 1
      %p269 = scmp.ne.s32.totalorder %s264, %s266
      %p270 = scmp.eq.s32.totalorder %s78, 0
      %p271 = por %p269, %p270
      %p272 = scmp.ne.s32.totalorder %s264, %s266
      %p273 = scmp.eq.s32.totalorder %s83, 1
      %p274 = por %p272, %p273
      %p275 = scmp.ne.s32.totalorder %s266, %s267
      %p276 = scmp.eq.s32.totalorder %s83, 0
      %p277 = por %p275, %p276
      %p278 = scmp.ne.s32.totalorder %s266, %s267
      %p279 = scmp.eq.s32.totalorder %s84, 1
      %p280 = por %p278, %p279
      %p282 = scmp.ne.s32.totalorder %s267, %s281
      %p283 = scmp.eq.s32.totalorder %s84, 0
      %p284 = por %p282, %p283
      %s286 = sadd.s32 %s285, 1
      %p289 = scmp.eq.s32.totalorder %s78, 1
      %p290 = scmp.ne.s32.totalorder %s285, %s287
      %p291 = scmp.eq.s32.totalorder %s78, 0
      %p292 = por %p290, %p291
      %p293 = scmp.ne.s32.totalorder %s285, %s287
      %p294 = scmp.eq.s32.totalorder %s83, 1
      %p295 = por %p293, %p294
      %p296 = scmp.ne.s32.totalorder %s287, %s288
      %p297 = scmp.eq.s32.totalorder %s83, 0
      %p298 = por %p296, %p297
      %p299 = scmp.ne.s32.totalorder %s287, %s288
      %p300 = scmp.eq.s32.totalorder %s84, 1
      %p301 = por %p299, %p300
      %p303 = scmp.ne.s32.totalorder %s288, %s302
      %p304 = scmp.eq.s32.totalorder %s84, 0
      %p305 = por %p303, %p304
      %s307 = sadd.s32 %s306, 1
      %p310 = scmp.eq.s32.totalorder %s78, 1
      %p311 = scmp.ne.s32.totalorder %s306, %s308
      %p312 = scmp.eq.s32.totalorder %s78, 0
      %p313 = por %p311, %p312
      %p314 = scmp.ne.s32.totalorder %s306, %s308
      %p315 = scmp.eq.s32.totalorder %s83, 1
      %p316 = por %p314, %p315
      %p317 = scmp.ne.s32.totalorder %s308, %s309
      %p318 = scmp.eq.s32.totalorder %s83, 0
      %p319 = por %p317, %p318
      %p320 = scmp.ne.s32.totalorder %s308, %s309
      %p321 = scmp.eq.s32.totalorder %s84, 1
      %p322 = por %p320, %p321
      %p324 = scmp.ne.s32.totalorder %s309, %s323
      %p325 = scmp.eq.s32.totalorder %s84, 0
      %p326 = por %p324, %p325
      %s328 = sadd.s32 %s327, 1
      %p331 = scmp.eq.s32.totalorder %s78, 1
      %p332 = scmp.ne.s32.totalorder %s327, %s329
      %p333 = scmp.eq.s32.totalorder %s78, 0
      %p334 = por %p332, %p333
      %p335 = scmp.ne.s32.totalorder %s327, %s329
      %p336 = scmp.eq.s32.totalorder %s83, 1
      %p337 = por %p335, %p336
      %p338 = scmp.ne.s32.totalorder %s329, %s330
      %p339 = scmp.eq.s32.totalorder %s83, 0
      %p340 = por %p338, %p339
      %p341 = scmp.ne.s32.totalorder %s329, %s330
      %p342 = scmp.eq.s32.totalorder %s84, 1
      %p343 = por %p341, %p342
      %p345 = scmp.ne.s32.totalorder %s330, %s344
      %p346 = scmp.eq.s32.totalorder %s84, 0
      %p347 = por %p345, %p346
      %s349 = sadd.s32 %s348, 1
      %p352 = scmp.eq.s32.totalorder %s78, 1
      %p353 = scmp.ne.s32.totalorder %s348, %s350
      %p354 = scmp.eq.s32.totalorder %s78, 0
      %p355 = por %p353, %p354
      %p356 = scmp.ne.s32.totalorder %s348, %s350
      %p357 = scmp.eq.s32.totalorder %s83, 1
      %p358 = por %p356, %p357
      %p359 = scmp.ne.s32.totalorder %s350, %s351
      %p360 = scmp.eq.s32.totalorder %s83, 0
      %p361 = por %p359, %p360
      %p362 = scmp.ne.s32.totalorder %s350, %s351
      %p363 = scmp.eq.s32.totalorder %s84, 1
      %p364 = por %p362, %p363
      %p366 = scmp.ne.s32.totalorder %s351, %s365
      %p367 = scmp.eq.s32.totalorder %s84, 0
      %p368 = por %p366, %p367
      %s370 = sadd.s32 %s369, 1
      %p373 = scmp.eq.s32.totalorder %s78, 1
      %p374 = scmp.ne.s32.totalorder %s369, %s371
      %p375 = scmp.eq.s32.totalorder %s78, 0
      %p376 = por %p374, %p375
      %p377 = scmp.ne.s32.totalorder %s369, %s371
      %p378 = scmp.eq.s32.totalorder %s83, 1
      %p379 = por %p377, %p378
      %p380 = scmp.ne.s32.totalorder %s371, %s372
      %p381 = scmp.eq.s32.totalorder %s83, 0
      %p382 = por %p380, %p381
      %p383 = scmp.ne.s32.totalorder %s371, %s372
      %p384 = scmp.eq.s32.totalorder %s84, 1
      %p385 = por %p383, %p384
      %p387 = scmp.ne.s32.totalorder %s372, %s386
      %p388 = scmp.eq.s32.totalorder %s84, 0
      %p389 = por %p387, %p388
      %s391 = sadd.s32 %s390, 1
      %p394 = scmp.eq.s32.totalorder %s78, 1
      %p395 = scmp.ne.s32.totalorder %s390, %s392
      %p396 = scmp.eq.s32.totalorder %s78, 0
      %p397 = por %p395, %p396
      %p398 = scmp.ne.s32.totalorder %s390, %s392
      %p399 = scmp.eq.s32.totalorder %s83, 1
      %p400 = por %p398, %p399
      %p401 = scmp.ne.s32.totalorder %s392, %s393
      %p402 = scmp.eq.s32.totalorder %s83, 0
      %p403 = por %p401, %p402
      %p404 = scmp.ne.s32.totalorder %s392, %s393
      %p405 = scmp.eq.s32.totalorder %s84, 1
      %p406 = por %p404, %p405
      %p408 = scmp.ne.s32.totalorder %s393, %s407
      %p409 = scmp.eq.s32.totalorder %s84, 0
      %p410 = por %p408, %p409
      %s412 = sadd.s32 %s411, 1
      %p415 = scmp.eq.s32.totalorder %s78, 1
      %p416 = scmp.ne.s32.totalorder %s411, %s413
      %p417 = scmp.eq.s32.totalorder %s78, 0
      %p418 = por %p416, %p417
      %p419 = scmp.ne.s32.totalorder %s411, %s413
      %p420 = scmp.eq.s32.totalorder %s83, 1
      %p421 = por %p419, %p420
      %p422 = scmp.ne.s32.totalorder %s413, %s414
      %p423 = scmp.eq.s32.totalorder %s83, 0
      %p424 = por %p422, %p423
      %p425 = scmp.ne.s32.totalorder %s413, %s414
      %p426 = scmp.eq.s32.totalorder %s84, 1
      %p427 = por %p425, %p426
      %p429 = scmp.ne.s32.totalorder %s414, %s428
      %p430 = scmp.eq.s32.totalorder %s84, 0
      %p431 = por %p429, %p430
      %s433 = sadd.s32 %s432, 1
      %p436 = scmp.eq.s32.totalorder %s78, 1
      %p437 = scmp.ne.s32.totalorder %s432, %s434
      %p438 = scmp.eq.s32.totalorder %s78, 0
      %p439 = por %p437, %p438
      %p440 = scmp.ne.s32.totalorder %s432, %s434
      %p441 = scmp.eq.s32.totalorder %s83, 1
      %p442 = por %p440, %p441
      %p443 = scmp.ne.s32.totalorder %s434, %s435
      %p444 = scmp.eq.s32.totalorder %s83, 0
      %p445 = por %p443, %p444
      %p446 = scmp.ne.s32.totalorder %s434, %s435
      %p447 = scmp.eq.s32.totalorder %s84, 1
      %p448 = por %p446, %p447
      %p450 = scmp.ne.s32.totalorder %s435, %s449
      %p451 = scmp.eq.s32.totalorder %s84, 0
      %p452 = por %p450, %p451
      %s454 = sadd.s32 %s453, 1
      %p457 = scmp.eq.s32.totalorder %s78, 1
      %p458 = scmp.ne.s32.totalorder %s453, %s455
      %p459 = scmp.eq.s32.totalorder %s78, 0
      %p460 = por %p458, %p459
      %p461 = scmp.ne.s32.totalorder %s453, %s455
      %p462 = scmp.eq.s32.totalorder %s83, 1
      %p463 = por %p461, %p462
      %p464 = scmp.ne.s32.totalorder %s455, %s456
      %p465 = scmp.eq.s32.totalorder %s83, 0
      %p466 = por %p464, %p465
      %p467 = scmp.ne.s32.totalorder %s455, %s456
      %p468 = scmp.eq.s32.totalorder %s84, 1
      %p469 = por %p467, %p468
      %p471 = scmp.ne.s32.totalorder %s456, %s470
      %p472 = scmp.eq.s32.totalorder %s84, 0
      %p473 = por %p471, %p472
      %s475 = sadd.s32 %s474, 1
      %p478 = scmp.eq.s32.totalorder %s78, 1
      %p479 = scmp.ne.s32.totalorder %s474, %s476
      %p480 = scmp.eq.s32.totalorder %s78, 0
      %p481 = por %p479, %p480
      %p482 = scmp.ne.s32.totalorder %s474, %s476
      %p483 = scmp.eq.s32.totalorder %s83, 1
      %p484 = por %p482, %p483
      %p485 = scmp.ne.s32.totalorder %s476, %s477
      %p486 = scmp.eq.s32.totalorder %s83, 0
      %p487 = por %p485, %p486
      %p488 = scmp.ne.s32.totalorder %s476, %s477
      %p489 = scmp.eq.s32.totalorder %s84, 1
      %p490 = por %p488, %p489
      %p492 = scmp.ne.s32.totalorder %s477, %s491
      %p493 = scmp.eq.s32.totalorder %s84, 0
      %p494 = por %p492, %p493
      %s496 = sadd.s32 %s495, 1
      %p499 = scmp.eq.s32.totalorder %s78, 1
      %p500 = scmp.ne.s32.totalorder %s495, %s497
      %p501 = scmp.eq.s32.totalorder %s78, 0
      %p502 = por %p500, %p501
      %p503 = scmp.ne.s32.totalorder %s495, %s497
      %p504 = scmp.eq.s32.totalorder %s83, 1
      %p505 = por %p503, %p504
      %p506 = scmp.ne.s32.totalorder %s497, %s498
      %p507 = scmp.eq.s32.totalorder %s83, 0
      %p508 = por %p506, %p507
      %p509 = scmp.ne.s32.totalorder %s497, %s498
      %p510 = scmp.eq.s32.totalorder %s84, 1
      %p511 = por %p509, %p510
      %p513 = scmp.ne.s32.totalorder %s498, %s512
      %p514 = scmp.eq.s32.totalorder %s84, 0
      %p515 = por %p513, %p514
      %s517 = sadd.s32 %s516, 1
      %p520 = scmp.eq.s32.totalorder %s78, 1
      %p521 = scmp.ne.s32.totalorder %s516, %s518
      %p522 = scmp.eq.s32.totalorder %s78, 0
      %p523 = por %p521, %p522
      %p524 = scmp.ne.s32.totalorder %s516, %s518
      %p525 = scmp.eq.s32.totalorder %s83, 1
      %p526 = por %p524, %p525
      %p527 = scmp.ne.s32.totalorder %s518, %s519
      %p528 = scmp.eq.s32.totalorder %s83, 0
      %p529 = por %p527, %p528
      %p530 = scmp.ne.s32.totalorder %s518, %s519
      %p531 = scmp.eq.s32.totalorder %s84, 1
      %p532 = por %p530, %p531
      %p534 = scmp.ne.s32.totalorder %s519, %s533
      %p535 = scmp.eq.s32.totalorder %s84, 0
      %p536 = por %p534, %p535
      %s538 = sadd.s32 %s537, 1
      %p541 = scmp.eq.s32.totalorder %s78, 1
      %p542 = scmp.ne.s32.totalorder %s537, %s539
      %p543 = scmp.eq.s32.totalorder %s78, 0
      %p544 = por %p542, %p543
      %p545 = scmp.ne.s32.totalorder %s537, %s539
      %p546 = scmp.eq.s32.totalorder %s83, 1
      %p547 = por %p545, %p546
      %p548 = scmp.ne.s32.totalorder %s539, %s540
      %p549 = scmp.eq.s32.totalorder %s83, 0
      %p550 = por %p548, %p549
      %p551 = scmp.ne.s32.totalorder %s539, %s540
      %p552 = scmp.eq.s32.totalorder %s84, 1
      %p553 = por %p551, %p552
      %p555 = scmp.ne.s32.totalorder %s540, %s554
      %p556 = scmp.eq.s32.totalorder %s84, 0
      %p557 = por %p555, %p556
      %s559 = sadd.s32 %s558, 1
      %p562 = scmp.eq.s32.totalorder %s78, 1
      %p563 = scmp.ne.s32.totalorder %s558, %s560
      %p564 = scmp.eq.s32.totalorder %s78, 0
      %p565 = por %p563, %p564
      %p566 = scmp.ne.s32.totalorder %s558, %s560
      %p567 = scmp.eq.s32.totalorder %s83, 1
      %p568 = por %p566, %p567
      %p569 = scmp.ne.s32.totalorder %s560, %s561
      %p570 = scmp.eq.s32.totalorder %s83, 0
      %p571 = por %p569, %p570
      %p572 = scmp.ne.s32.totalorder %s560, %s561
      %p573 = scmp.eq.s32.totalorder %s84, 1
      %p574 = por %p572, %p573
      %p576 = scmp.ne.s32.totalorder %s561, %s575
      %p577 = scmp.eq.s32.totalorder %s84, 0
      %p578 = por %p576, %p577
      %s580 = sadd.s32 %s579, 1
      %p583 = scmp.eq.s32.totalorder %s78, 1
      %p584 = scmp.ne.s32.totalorder %s579, %s581
      %p585 = scmp.eq.s32.totalorder %s78, 0
      %p586 = por %p584, %p585
      %p587 = scmp.ne.s32.totalorder %s579, %s581
      %p588 = scmp.eq.s32.totalorder %s83, 1
      %p589 = por %p587, %p588
      %p590 = scmp.ne.s32.totalorder %s581, %s582
      %p591 = scmp.eq.s32.totalorder %s83, 0
      %p592 = por %p590, %p591
      %p593 = scmp.ne.s32.totalorder %s581, %s582
      %p594 = scmp.eq.s32.totalorder %s84, 1
      %p595 = por %p593, %p594
      %p597 = scmp.ne.s32.totalorder %s582, %s596
      %p598 = scmp.eq.s32.totalorder %s84, 0
      %p599 = por %p597, %p598
      %s601 = sadd.s32 %s600, 1
      %p604 = scmp.eq.s32.totalorder %s78, 1
      %p605 = scmp.ne.s32.totalorder %s600, %s602
      %p606 = scmp.eq.s32.totalorder %s78, 0
      %p607 = por %p605, %p606
      %p608 = scmp.ne.s32.totalorder %s600, %s602
      %p609 = scmp.eq.s32.totalorder %s83, 1
      %p610 = por %p608, %p609
      %p611 = scmp.ne.s32.totalorder %s602, %s603
      %p612 = scmp.eq.s32.totalorder %s83, 0
      %p613 = por %p611, %p612
      %p614 = scmp.ne.s32.totalorder %s602, %s603
      %p615 = scmp.eq.s32.totalorder %s84, 1
      %p616 = por %p614, %p615
      %p618 = scmp.ne.s32.totalorder %s603, %s617
      %p619 = scmp.eq.s32.totalorder %s84, 0
      %p620 = por %p618, %p619
      %s622 = sadd.s32 %s621, 1
      %p625 = scmp.eq.s32.totalorder %s78, 1
      %p626 = scmp.ne.s32.totalorder %s621, %s623
      %p627 = scmp.eq.s32.totalorder %s78, 0
      %p628 = por %p626, %p627
      %p629 = scmp.ne.s32.totalorder %s621, %s623
      %p630 = scmp.eq.s32.totalorder %s83, 1
      %p631 = por %p629, %p630
      %p632 = scmp.ne.s32.totalorder %s623, %s624
      %p633 = scmp.eq.s32.totalorder %s83, 0
      %p634 = por %p632, %p633
      %p635 = scmp.ne.s32.totalorder %s623, %s624
      %p636 = scmp.eq.s32.totalorder %s84, 1
      %p637 = por %p635, %p636
      %p639 = scmp.ne.s32.totalorder %s624, %s638
      %p640 = scmp.eq.s32.totalorder %s84, 0
      %p641 = por %p639, %p640
      %s643 = sadd.s32 %s642, 1
      %p646 = scmp.eq.s32.totalorder %s78, 1
      %p647 = scmp.ne.s32.totalorder %s642, %s644
      %p648 = scmp.eq.s32.totalorder %s78, 0
      %p649 = por %p647, %p648
      %p650 = scmp.ne.s32.totalorder %s642, %s644
      %p651 = scmp.eq.s32.totalorder %s83, 1
      %p652 = por %p650, %p651
      %p653 = scmp.ne.s32.totalorder %s644, %s645
      %p654 = scmp.eq.s32.totalorder %s83, 0
      %p655 = por %p653, %p654
      %p656 = scmp.ne.s32.totalorder %s644, %s645
      %p657 = scmp.eq.s32.totalorder %s84, 1
      %p658 = por %p656, %p657
      %p660 = scmp.ne.s32.totalorder %s645, %s659
      %p661 = scmp.eq.s32.totalorder %s84, 0
      %p662 = por %p660, %p661
      %s664 = sadd.s32 %s663, 1
      %p667 = scmp.eq.s32.totalorder %s78, 1
      %p668 = scmp.ne.s32.totalorder %s663, %s665
      %p669 = scmp.eq.s32.totalorder %s78, 0
      %p670 = por %p668, %p669
      %p671 = scmp.ne.s32.totalorder %s663, %s665
      %p672 = scmp.eq.s32.totalorder %s83, 1
      %p673 = por %p671, %p672
      %p674 = scmp.ne.s32.totalorder %s665, %s666
      %p675 = scmp.eq.s32.totalorder %s83, 0
      %p676 = por %p674, %p675
      %p677 = scmp.ne.s32.totalorder %s665, %s666
      %p678 = scmp.eq.s32.totalorder %s84, 1
      %p679 = por %p677, %p678
      %p681 = scmp.ne.s32.totalorder %s666, %s680
      %p682 = scmp.eq.s32.totalorder %s84, 0
      %p683 = por %p681, %p682
      %s685 = sadd.s32 %s684, 1
      %p688 = scmp.eq.s32.totalorder %s78, 1
      %p689 = scmp.ne.s32.totalorder %s684, %s686
      %p690 = scmp.eq.s32.totalorder %s78, 0
      %p691 = por %p689, %p690
      %p692 = scmp.ne.s32.totalorder %s684, %s686
      %p693 = scmp.eq.s32.totalorder %s83, 1
      %p694 = por %p692, %p693
      %p695 = scmp.ne.s32.totalorder %s686, %s687
      %p696 = scmp.eq.s32.totalorder %s83, 0
      %p697 = por %p695, %p696
      %p698 = scmp.ne.s32.totalorder %s686, %s687
      %p699 = scmp.eq.s32.totalorder %s84, 1
      %p700 = por %p698, %p699
      %p702 = scmp.ne.s32.totalorder %s687, %s701
      %p703 = scmp.eq.s32.totalorder %s84, 0
      %p704 = por %p702, %p703
      %s706 = sadd.s32 %s705, 1
      %p709 = scmp.eq.s32.totalorder %s78, 1
      %p710 = scmp.ne.s32.totalorder %s705, %s707
      %p711 = scmp.eq.s32.totalorder %s78, 0
      %p712 = por %p710, %p711
      %p713 = scmp.ne.s32.totalorder %s705, %s707
      %p714 = scmp.eq.s32.totalorder %s83, 1
      %p715 = por %p713, %p714
      %p716 = scmp.ne.s32.totalorder %s707, %s708
      %p717 = scmp.eq.s32.totalorder %s83, 0
      %p718 = por %p716, %p717
      %p719 = scmp.ne.s32.totalorder %s707, %s708
      %p720 = scmp.eq.s32.totalorder %s84, 1
      %p721 = por %p719, %p720
      %p723 = scmp.ne.s32.totalorder %s708, %s722
      %p724 = scmp.eq.s32.totalorder %s84, 0
      %p725 = por %p723, %p724
      %s726 = ssub.s32 %s78, %s85
      %p727 = scmp.eq.s32.totalorder %s726, 0
      %s729 = sadd.s32 %s728, 1
      %s730 = scalar_select %p727, %s728, %s729
      %p733 = pneg %p727
      %p734 = scmp.eq.s32.totalorder %s78, 1
      %p735 = por %p733, %p734
      %p736 = scmp.ne.s32.totalorder %s728, %s731
      %p737 = scmp.eq.s32.totalorder %s78, 0
      %p738 = por %p736, %p737
      %p739 = scmp.ne.s32.totalorder %s728, %s731
      %p740 = scmp.eq.s32.totalorder %s83, 1
      %p741 = por %p739, %p740
      %p742 = scmp.ne.s32.totalorder %s731, %s732
      %p743 = scmp.eq.s32.totalorder %s83, 0
      %p744 = por %p742, %p743
      %p745 = scmp.ne.s32.totalorder %s731, %s732
      %p746 = scmp.eq.s32.totalorder %s84, 1
      %p747 = por %p745, %p746
      %p749 = scmp.ne.s32.totalorder %s732, %s748
      %p750 = scmp.eq.s32.totalorder %s84, 0
      %p751 = por %p749, %p750
      %s752 = ssub.s32 %s78, %s85
      %p753 = scmp.eq.s32.totalorder %s752, 0
      %s755 = sadd.s32 %s754, 1
      %s756 = scalar_select %p753, %s754, %s755
      %p759 = pneg %p753
      %p760 = scmp.eq.s32.totalorder %s78, 1
      %p761 = por %p759, %p760
      %p762 = scmp.ne.s32.totalorder %s754, %s757
      %p763 = scmp.eq.s32.totalorder %s78, 0
      %p764 = por %p762, %p763
      %p765 = scmp.ne.s32.totalorder %s754, %s757
      %p766 = scmp.eq.s32.totalorder %s83, 1
      %p767 = por %p765, %p766
      %p768 = scmp.ne.s32.totalorder %s757, %s758
      %p769 = scmp.eq.s32.totalorder %s83, 0
      %p770 = por %p768, %p769
      %p771 = scmp.ne.s32.totalorder %s757, %s758
      %p772 = scmp.eq.s32.totalorder %s84, 1
      %p773 = por %p771, %p772
      %p775 = scmp.ne.s32.totalorder %s758, %s774
      %p776 = scmp.eq.s32.totalorder %s84, 0
      %p777 = por %p775, %p776
      %s778 = ssub.s32 %s78, %s85
      %p779 = scmp.eq.s32.totalorder %s778, 0
      %s781 = sadd.s32 %s780, 1
      %s782 = scalar_select %p779, %s780, %s781
      %p785 = pneg %p779
      %p786 = scmp.eq.s32.totalorder %s78, 1
      %p787 = por %p785, %p786
      %p788 = scmp.ne.s32.totalorder %s780, %s783
      %p789 = scmp.eq.s32.totalorder %s78, 0
      %p790 = por %p788, %p789
      %p791 = scmp.ne.s32.totalorder %s780, %s783
      %p792 = scmp.eq.s32.totalorder %s83, 1
      %p793 = por %p791, %p792
      %p794 = scmp.ne.s32.totalorder %s783, %s784
      %p795 = scmp.eq.s32.totalorder %s83, 0
      %p796 = por %p794, %p795
      %p797 = scmp.ne.s32.totalorder %s783, %s784
      %p798 = scmp.eq.s32.totalorder %s84, 1
      %p799 = por %p797, %p798
      %p801 = scmp.ne.s32.totalorder %s784, %s800
      %p802 = scmp.eq.s32.totalorder %s84, 0
      %p803 = por %p801, %p802
      %p804 = scmp.le.s32.totalorder 1, %s78
      %p805 = scmp.lt.s32.totalorder %s78, 3
      %p806 = pnand %p804, %p805
      %p807 = pneg %p806
      // Predicated region
      $region9: #{tpu_custom_call.1} parent=5 // pred_check
        _
      $region10: #{tpu_custom_call.1} parent=5 // pred_check_branch
        %809 = sbr.rel (%p806) target = $region12
      $region11: #{tpu_custom_call.1} parent=5 // pred_region
        %s810 = ssub.s32 %s78, 1
        // Predicated region
        $region13: #{tpu_custom_call.1} parent=11 // pred_check
          %p811 = pneg %p151
        $region14: #{tpu_custom_call.1} parent=11 // pred_check_branch
          %813 = sbr.rel (%p811) target = $region16
        $region15: #{tpu_custom_call.1} parent=11 // pred_region
          _
        $region16: #{tpu_custom_call.1} parent=11 // pred_fallthru
          _
        // Predicated region
        $region17: #{tpu_custom_call.1} parent=11 // pred_check
          %p814 = pneg %p172
        $region18: #{tpu_custom_call.1} parent=11 // pred_check_branch
          %816 = sbr.rel (%p814) target = $region20
        $region19: #{tpu_custom_call.1} parent=11 // pred_region
          _
        $region20: #{tpu_custom_call.1} parent=11 // pred_fallthru
          _
        // Predicated region
        $region21: #{tpu_custom_call.1} parent=11 // pred_check
          %p817 = pneg %p193
        $region22: #{tpu_custom_call.1} parent=11 // pred_check_branch
          %819 = sbr.rel (%p817) target = $region24
        $region23: #{tpu_custom_call.1} parent=11 // pred_region
          _
        $region24: #{tpu_custom_call.1} parent=11 // pred_fallthru
          _
        // Predicated region
        $region25: #{tpu_custom_call.1} parent=11 // pred_check
          %p820 = pneg %p214
        $region26: #{tpu_custom_call.1} parent=11 // pred_check_branch
          %822 = sbr.rel (%p820) target = $region28
        $region27: #{tpu_custom_call.1} parent=11 // pred_region
          _
        $region28: #{tpu_custom_call.1} parent=11 // pred_fallthru
          _
        // Predicated region
        $region29: #{tpu_custom_call.1} parent=11 // pred_check
          %p823 = pneg %p235
        $region30: #{tpu_custom_call.1} parent=11 // pred_check_branch
          %825 = sbr.rel (%p823) target = $region32
        $region31: #{tpu_custom_call.1} parent=11 // pred_region
          _
        $region32: #{tpu_custom_call.1} parent=11 // pred_fallthru
          _
        // Predicated region
        $region33: #{tpu_custom_call.1} parent=11 // pred_check
          %p826 = pneg %p256
        $region34: #{tpu_custom_call.1} parent=11 // pred_check_branch
          %828 = sbr.rel (%p826) target = $region36
        $region35: #{tpu_custom_call.1} parent=11 // pred_region
          _
        $region36: #{tpu_custom_call.1} parent=11 // pred_fallthru
          _
        // Predicated region
        $region37: #{tpu_custom_call.1} parent=11 // pred_check
          %p829 = pneg %p277
        $region38: #{tpu_custom_call.1} parent=11 // pred_check_branch
          %831 = sbr.rel (%p829) target = $region40
        $region39: #{tpu_custom_call.1} parent=11 // pred_region
          _
        $region40: #{tpu_custom_call.1} parent=11 // pred_fallthru
          _
        // Predicated region
        $region41: #{tpu_custom_call.1} parent=11 // pred_check
          %p832 = pneg %p298
        $region42: #{tpu_custom_call.1} parent=11 // pred_check_branch
          %834 = sbr.rel (%p832) target = $region44
        $region43: #{tpu_custom_call.1} parent=11 // pred_region
          _
        $region44: #{tpu_custom_call.1} parent=11 // pred_fallthru
          _
        // Predicated region
        $region45: #{tpu_custom_call.1} parent=11 // pred_check
          %p835 = pneg %p319
        $region46: #{tpu_custom_call.1} parent=11 // pred_check_branch
          %837 = sbr.rel (%p835) target = $region48
        $region47: #{tpu_custom_call.1} parent=11 // pred_region
          _
        $region48: #{tpu_custom_call.1} parent=11 // pred_fallthru
          _
        // Predicated region
        $region49: #{tpu_custom_call.1} parent=11 // pred_check
          %p838 = pneg %p340
        $region50: #{tpu_custom_call.1} parent=11 // pred_check_branch
          %840 = sbr.rel (%p838) target = $region52
        $region51: #{tpu_custom_call.1} parent=11 // pred_region
          _
        $region52: #{tpu_custom_call.1} parent=11 // pred_fallthru
          _
        // Predicated region
        $region53: #{tpu_custom_call.1} parent=11 // pred_check
          %p841 = pneg %p361
        $region54: #{tpu_custom_call.1} parent=11 // pred_check_branch
          %843 = sbr.rel (%p841) target = $region56
        $region55: #{tpu_custom_call.1} parent=11 // pred_region
          _
        $region56: #{tpu_custom_call.1} parent=11 // pred_fallthru
          _
        // Predicated region
        $region57: #{tpu_custom_call.1} parent=11 // pred_check
          %p844 = pneg %p382
        $region58: #{tpu_custom_call.1} parent=11 // pred_check_branch
          %846 = sbr.rel (%p844) target = $region60
        $region59: #{tpu_custom_call.1} parent=11 // pred_region
          _
        $region60: #{tpu_custom_call.1} parent=11 // pred_fallthru
          _
        // Predicated region
        $region61: #{tpu_custom_call.1} parent=11 // pred_check
          %p847 = pneg %p403
        $region62: #{tpu_custom_call.1} parent=11 // pred_check_branch
          %849 = sbr.rel (%p847) target = $region64
        $region63: #{tpu_custom_call.1} parent=11 // pred_region
          _
        $region64: #{tpu_custom_call.1} parent=11 // pred_fallthru
          _
        // Predicated region
        $region65: #{tpu_custom_call.1} parent=11 // pred_check
          %p850 = pneg %p424
        $region66: #{tpu_custom_call.1} parent=11 // pred_check_branch
          %852 = sbr.rel (%p850) target = $region68
        $region67: #{tpu_custom_call.1} parent=11 // pred_region
          _
        $region68: #{tpu_custom_call.1} parent=11 // pred_fallthru
          _
        // Predicated region
        $region69: #{tpu_custom_call.1} parent=11 // pred_check
          %p853 = pneg %p445
        $region70: #{tpu_custom_call.1} parent=11 // pred_check_branch
          %855 = sbr.rel (%p853) target = $region72
        $region71: #{tpu_custom_call.1} parent=11 // pred_region
          _
        $region72: #{tpu_custom_call.1} parent=11 // pred_fallthru
          _
        // Predicated region
        $region73: #{tpu_custom_call.1} parent=11 // pred_check
          %p856 = pneg %p466
        $region74: #{tpu_custom_call.1} parent=11 // pred_check_branch
          %858 = sbr.rel (%p856) target = $region76
        $region75: #{tpu_custom_call.1} parent=11 // pred_region
          _
        $region76: #{tpu_custom_call.1} parent=11 // pred_fallthru
          _
        // Predicated region
        $region77: #{tpu_custom_call.1} parent=11 // pred_check
          %p859 = pneg %p487
        $region78: #{tpu_custom_call.1} parent=11 // pred_check_branch
          %861 = sbr.rel (%p859) target = $region80
        $region79: #{tpu_custom_call.1} parent=11 // pred_region
          _
        $region80: #{tpu_custom_call.1} parent=11 // pred_fallthru
          _
        // Predicated region
        $region81: #{tpu_custom_call.1} parent=11 // pred_check
          %p862 = pneg %p508
        $region82: #{tpu_custom_call.1} parent=11 // pred_check_branch
          %864 = sbr.rel (%p862) target = $region84
        $region83: #{tpu_custom_call.1} parent=11 // pred_region
          _
        $region84: #{tpu_custom_call.1} parent=11 // pred_fallthru
          _
        // Predicated region
        $region85: #{tpu_custom_call.1} parent=11 // pred_check
          %p865 = pneg %p529
        $region86: #{tpu_custom_call.1} parent=11 // pred_check_branch
          %867 = sbr.rel (%p865) target = $region88
        $region87: #{tpu_custom_call.1} parent=11 // pred_region
          _
        $region88: #{tpu_custom_call.1} parent=11 // pred_fallthru
          _
        // Predicated region
        $region89: #{tpu_custom_call.1} parent=11 // pred_check
          %p868 = pneg %p550
        $region90: #{tpu_custom_call.1} parent=11 // pred_check_branch
          %870 = sbr.rel (%p868) target = $region92
        $region91: #{tpu_custom_call.1} parent=11 // pred_region
          _
        $region92: #{tpu_custom_call.1} parent=11 // pred_fallthru
          _
        // Predicated region
        $region93: #{tpu_custom_call.1} parent=11 // pred_check
          %p871 = pneg %p571
        $region94: #{tpu_custom_call.1} parent=11 // pred_check_branch
          %873 = sbr.rel (%p871) target = $region96
        $region95: #{tpu_custom_call.1} parent=11 // pred_region
          _
        $region96: #{tpu_custom_call.1} parent=11 // pred_fallthru
          _
        // Predicated region
        $region97: #{tpu_custom_call.1} parent=11 // pred_check
          %p874 = pneg %p592
        $region98: #{tpu_custom_call.1} parent=11 // pred_check_branch
          %876 = sbr.rel (%p874) target = $region100
        $region99: #{tpu_custom_call.1} parent=11 // pred_region
          _
        $region100: #{tpu_custom_call.1} parent=11 // pred_fallthru
          _
        // Predicated region
        $region101: #{tpu_custom_call.1} parent=11 // pred_check
          %p877 = pneg %p613
        $region102: #{tpu_custom_call.1} parent=11 // pred_check_branch
          %879 = sbr.rel (%p877) target = $region104
        $region103: #{tpu_custom_call.1} parent=11 // pred_region
          _
        $region104: #{tpu_custom_call.1} parent=11 // pred_fallthru
          _
        // Predicated region
        $region105: #{tpu_custom_call.1} parent=11 // pred_check
          %p880 = pneg %p634
        $region106: #{tpu_custom_call.1} parent=11 // pred_check_branch
          %882 = sbr.rel (%p880) target = $region108
        $region107: #{tpu_custom_call.1} parent=11 // pred_region
          _
        $region108: #{tpu_custom_call.1} parent=11 // pred_fallthru
          _
        // Predicated region
        $region109: #{tpu_custom_call.1} parent=11 // pred_check
          %p883 = pneg %p655
        $region110: #{tpu_custom_call.1} parent=11 // pred_check_branch
          %885 = sbr.rel (%p883) target = $region112
        $region111: #{tpu_custom_call.1} parent=11 // pred_region
          _
        $region112: #{tpu_custom_call.1} parent=11 // pred_fallthru
          _
        // Predicated region
        $region113: #{tpu_custom_call.1} parent=11 // pred_check
          %p886 = pneg %p676
        $region114: #{tpu_custom_call.1} parent=11 // pred_check_branch
          %888 = sbr.rel (%p886) target = $region116
        $region115: #{tpu_custom_call.1} parent=11 // pred_region
          _
        $region116: #{tpu_custom_call.1} parent=11 // pred_fallthru
          _
        // Predicated region
        $region117: #{tpu_custom_call.1} parent=11 // pred_check
          %p889 = pneg %p697
        $region118: #{tpu_custom_call.1} parent=11 // pred_check_branch
          %891 = sbr.rel (%p889) target = $region120
        $region119: #{tpu_custom_call.1} parent=11 // pred_region
          _
        $region120: #{tpu_custom_call.1} parent=11 // pred_fallthru
          _
        // Predicated region
        $region121: #{tpu_custom_call.1} parent=11 // pred_check
          %p892 = pneg %p718
        $region122: #{tpu_custom_call.1} parent=11 // pred_check_branch
          %894 = sbr.rel (%p892) target = $region124
        $region123: #{tpu_custom_call.1} parent=11 // pred_region
          _
        $region124: #{tpu_custom_call.1} parent=11 // pred_fallthru
          _
      $region12: #{tpu_custom_call.1} parent=5 // pred_fallthru
        _
      %p895 = scmp.lt.s32.totalorder %s78, 2
      // Predicated region
      $region125: #{tpu_custom_call.1} parent=5 // pred_check
        %p896 = pneg %p895
      $region126: #{tpu_custom_call.1} parent=5 // pred_check_branch
        %898 = sbr.rel (%p896) target = $region128
      $region127: #{tpu_custom_call.1} parent=5 // pred_region
        // Predicated region
        $region129: #{tpu_custom_call.1} parent=127 // pred_check
          %p899 = pneg %p98
        $region130: #{tpu_custom_call.1} parent=127 // pred_check_branch
          %901 = sbr.rel (%p899) target = $region132
        $region131: #{tpu_custom_call.1} parent=127 // pred_region
          %p902 = scmp.lt.s32.totalorder %s78, 1
          %s903 = scalar_select %p902, %s78, 1
          %s904 = smul.addr %s903, 4
          %s905 = scalar_lea.vmem %s1, %s904
        $region132: #{tpu_custom_call.1} parent=127 // pred_fallthru
          _
        // Predicated region
        $region133: #{tpu_custom_call.1} parent=127 // pred_check
          %p906 = pneg %p124
        $region134: #{tpu_custom_call.1} parent=127 // pred_check_branch
          %908 = sbr.rel (%p906) target = $region136
        $region135: #{tpu_custom_call.1} parent=127 // pred_region
          %p909 = scmp.lt.s32.totalorder %s78, 1
          %s910 = scalar_select %p909, %s78, 1
          %s911 = smul.addr %s910, 8
          %s912 = smul.addr %s911, 8
          %s913 = scalar_lea.vmem %s3, %s912
        $region136: #{tpu_custom_call.1} parent=127 // pred_fallthru
          _
      $region128: #{tpu_custom_call.1} parent=5 // pred_fallthru
        _
      %p914 = scmp.le.s32.totalorder 1, %s78
      %p915 = scmp.lt.s32.totalorder %s78, 3
      %p916 = pnand %p914, %p915
      %p917 = pneg %p916
      // Predicated region
      $region137: #{tpu_custom_call.1} parent=5 // pred_check
        _
      $region138: #{tpu_custom_call.1} parent=5 // pred_check_branch
        %919 = sbr.rel (%p916) target = $region140
      $region139: #{tpu_custom_call.1} parent=5 // pred_region
        %s920 = ssub.s32 %s78, 1
        %p921 = scmp.lt.s32.totalorder %s83, 1
        %s922 = scalar_select %p921, %s83, 1
        %s923 = smul.addr %s922, 4
        %s924 = scalar_lea.vmem %s1, %s923
        %p925 = pneg %p104
        %p926 = pneg %p101
        %p927 = scmp.lt.s32.totalorder %s83, 1
        %s928 = scalar_select %p927, %s83, 1
        %s929 = smul.addr %s928, 8
        %s930 = smul.addr %s929, 8
        %s931 = scalar_lea.vmem %s3, %s930
        %p932 = pneg %p130
        %p933 = pneg %p127
        %p934 = pneg %p151
        %p935 = pneg %p148
        %p936 = pneg %p172
        %p937 = pneg %p169
        %p938 = pneg %p193
        %p939 = pneg %p190
        %p940 = pneg %p214
        %p941 = pneg %p211
        %p942 = pneg %p235
        %p943 = pneg %p232
        %p944 = pneg %p256
        %p945 = pneg %p253
        %p946 = pneg %p277
        %p947 = pneg %p274
        %p948 = pneg %p298
        %p949 = pneg %p295
        %p950 = pneg %p319
        %p951 = pneg %p316
        %p952 = pneg %p340
        %p953 = pneg %p337
        %p954 = pneg %p361
        %p955 = pneg %p358
        %p956 = pneg %p382
        %p957 = pneg %p379
        %p958 = pneg %p403
        %p959 = pneg %p400
        %p960 = pneg %p424
        %p961 = pneg %p421
        %p962 = pneg %p445
        %p963 = pneg %p442
        %p964 = pneg %p466
        %p965 = pneg %p463
        %p966 = pneg %p487
        %p967 = pneg %p484
        %p968 = pneg %p508
        %p969 = pneg %p505
        %p970 = pneg %p529
        %p971 = pneg %p526
        %p972 = pneg %p550
        %p973 = pneg %p547
        %p974 = pneg %p571
        %p975 = pneg %p568
        %p976 = pneg %p592
        %p977 = pneg %p589
        %p978 = pneg %p613
        %p979 = pneg %p610
        %p980 = pneg %p634
        %p981 = pneg %p631
        %p982 = pneg %p655
        %p983 = pneg %p652
        %p984 = pneg %p676
        %p985 = pneg %p673
        %p986 = pneg %p697
        %p987 = pneg %p694
        %p988 = pneg %p718
        %p989 = pneg %p715
        %p990 = pneg %p744
        %p991 = pneg %p741
        %s992 = sand.u32 %s731, 1
        %s993 = scalar_lea.sflag [#allocation8], %s992
        %s994 = sand.u32 %s731, 1
        %s995 = smul.addr %s994, 4
        %s996 = scalar_lea.vmem [#allocation7], %s995
        %p997 = pneg %p770
        %p998 = pneg %p767
        %s999 = sand.u32 %s83, 1
        %s1000 = scalar_lea.sflag [#allocation10], %s999
        %s1001 = sand.u32 %s757, 1
        %s1002 = smul.addr %s1001, 16
        %s1003 = scalar_lea.vmem [#allocation9], %s1002
        %p1004 = pneg %p796
        %p1005 = pneg %p793
        %s1006 = sand.u32 %s83, 1
        %s1007 = scalar_lea.sflag [#allocation10], %s1006
        %s1008 = sand.u32 %s783, 1
        %s1009 = smul.addr %s1008, 4
        %s1010 = scalar_lea.vmem [#allocation11], %s1009
        %p1011 = scmp.lt.s32.totalorder %s83, 1
        %s1012 = scalar_select %p1011, %s83, 1
        %s1013 = smul.addr %s1012, 4
        %s1014 = scalar_lea.vmem %s1, %s1013
        %p1015 = scmp.lt.s32.totalorder %s83, 1
        %s1016 = scalar_select %p1015, %s83, 1
        %s1017 = smul.addr %s1016, 8
        %s1018 = smul.addr %s1017, 8
        %s1019 = scalar_lea.vmem %s3, %s1018
        %v1020 = vld [vmem:[%s1019] sm:$0xff]
        %v1021 = vld [vmem:[%s1019 + $0x8] sm:$0xff]
        %v1022 = vld [vmem:[%s1019 + $0x10] sm:$0xff]
        %v1023 = vld [vmem:[%s1019 + $0x18] sm:$0xff]
        %v1024 = vld [vmem:[%s1019 + $0x20] sm:$0xff]
        %v1025 = vld [vmem:[%s1019 + $0x28] sm:$0xff]
        %v1026 = vld [vmem:[%s1019 + $0x30] sm:$0xff]
        %v1027 = vld [vmem:[%s1019 + $0x38] sm:$0xff]
        %v1028 = vld [vmem:[%s5] sm:$0xff]
        %v1029 = vld [vmem:[%s5 + $0x8] sm:$0xff]
        %v1030 = vld [vmem:[%s5 + $0x10] sm:$0xff]
        %v1031 = vld [vmem:[%s5 + $0x18] sm:$0xff]
        %v1032 = vld [vmem:[%s7] sm:$0x1]
        %v1034 = vlaneseq
        %v1035 = vshrl.u32 %v1034, 7
        %v1036 = vsub.s32 0, %v1035
        %v1037 = vrot.slane %v1032, %v1036
        %vm1039 = vcmask 261120
        %v1041 = vsel %vm1039, %v1020, 0
        %v1044 = vsel %vm1039, %v1021, 0
        %v1047 = vsel %vm1039, %v1022, 0
        %v1050 = vsel %vm1039, %v1023, 0
        %v1053 = vsel %vm1039, %v1024, 0
        %v1056 = vsel %vm1039, %v1025, 0
        %v1059 = vsel %vm1039, %v1026, 0
        %v1062 = vsel %vm1039, %v1027, 0
        %1064 = vmatprep.subr.mxu0 0.0
        %1065 = vmatpush1.msra.mxu0 %v1028
        %1066 = vmatprep.subr.mxu0 0.0
        %1067 = vmatpush1.msra.mxu0 %v1029
        %1068 = vmatprep.subr.mxu0 0.0
        %1069 = vmatpush1.msra.mxu0 %v1030
        %1070 = vmatprep.subr.mxu0 0.0
        %1071 = vmatpush1.msra.mxu0 %v1031
        %1072 = vmatprep.subr.mxu0 0.0
        %1073 = vmatpush1.msra.mxu0 0.0
        %1074 = vmatprep.subr.mxu0 0.0
        %1075 = vmatpush1.msra.mxu0 0.0
        %1076 = vmatprep.subr.mxu0 0.0
        %1077 = vmatpush1.msra.mxu0 0.0
        %1078 = vmatprep.subr.mxu0 0.0
        %1079 = vmatpush1.msra.mxu0 0.0
        %1080 = vmatprep.subr.mxu0 0.0
        %1081 = vmatpush1.msra.mxu0 0.0
        %1082 = vmatprep.subr.mxu0 0.0
        %1083 = vmatpush1.msra.mxu0 0.0
        %1084 = vmatprep.subr.mxu0 0.0
        %1085 = vmatpush1.msra.mxu0 0.0
        %1086 = vmatprep.subr.mxu0 0.0
        %1087 = vmatpush1.msra.mxu0 0.0
        %1088 = vmatprep.subr.mxu0 0.0
        %1089 = vmatpush1.msra.mxu0 0.0
        %1090 = vmatprep.subr.mxu0 0.0
        %1091 = vmatpush1.msra.mxu0 0.0
        %1092 = vmatprep.subr.mxu0 0.0
        %1093 = vmatpush1.msra.mxu0 0.0
        %1094 = vmatprep.subr.mxu0 0.0
        %1095 = vmatpush1.msra.mxu0 0.0
        %1096 = vmatprep.subr.mxu0 0.0
        %1097 = vmatpush1.msra.mxu0 0.0
        %1098 = vmatprep.subr.mxu0 0.0
        %1099 = vmatpush1.msra.mxu0 0.0
        %1100 = vmatprep.subr.mxu0 0.0
        %1101 = vmatpush1.msra.mxu0 0.0
        %1102 = vmatprep.subr.mxu0 0.0
        %1103 = vmatpush1.msra.mxu0 0.0
        %1104 = vmatprep.subr.mxu0 0.0
        %1105 = vmatpush1.msra.mxu0 0.0
        %1106 = vmatprep.subr.mxu0 0.0
        %1107 = vmatpush1.msra.mxu0 0.0
        %1108 = vmatprep.subr.mxu0 0.0
        %1109 = vmatpush1.msra.mxu0 0.0
        %1110 = vmatprep.subr.mxu0 0.0
        %1111 = vmatpush1.msra.mxu0 0.0
        %1112 = vmatprep.subr.mxu0 0.0
        %1113 = vmatpush1.msra.mxu0 0.0
        %1114 = vmatprep.subr.mxu0 0.0
        %1115 = vmatpush1.msra.mxu0 0.0
        %1116 = vmatprep.subr.mxu0 0.0
        %1117 = vmatpush1.msra.mxu0 0.0
        %1118 = vmatprep.subr.mxu0 0.0
        %1119 = vmatpush1.msra.mxu0 0.0
        %1120 = vmatprep.subr.mxu0 0.0
        %1121 = vmatpush1.msra.mxu0 0.0
        %1122 = vmatprep.subr.mxu0 0.0
        %1123 = vmatpush1.msra.mxu0 0.0
        %1124 = vmatprep.subr.mxu0 0.0
        %1125 = vmatpush1.msra.mxu0 0.0
        %1126 = vmatprep.subr.mxu0 0.0
        %1127 = vmatpush1.msra.mxu0 0.0
        %1128 = vmatprep.mubr.f32.mxu0 0.0
        %1129 = vmatmul.mubr.f32.gmra.mrb[0].mxu0 %v1041
        %v1130 = vpop.f32.mrb[0].mxu0
        %v1131 = vadd.f32 %v1037, %v1130
        %v1132 = vpop.f32.mrb[0].mxu0
        %1133 = vmatprep.mubr.f32.mxu0 0.0
        %1134 = vmatmul.mubr.f32.gmra.mrb[0].mxu0 %v1044
        %v1135 = vpop.f32.mrb[0].mxu0
        %v1136 = vadd.f32 %v1037, %v1135
        %v1137 = vpop.f32.mrb[0].mxu0
        %1138 = vmatprep.mubr.f32.mxu0 0.0
        %1139 = vmatmul.mubr.f32.gmra.mrb[0].mxu0 %v1047
        %v1140 = vpop.f32.mrb[0].mxu0
        %v1141 = vadd.f32 %v1037, %v1140
        %v1142 = vpop.f32.mrb[0].mxu0
        %1143 = vmatprep.mubr.f32.mxu0 0.0
        %1144 = vmatmul.mubr.f32.gmra.mrb[0].mxu0 %v1050
        %v1145 = vpop.f32.mrb[0].mxu0
        %v1146 = vadd.f32 %v1037, %v1145
        %v1147 = vpop.f32.mrb[0].mxu0
        %1148 = vmatprep.mubr.f32.mxu0 0.0
        %1149 = vmatmul.mubr.f32.gmra.mrb[0].mxu0 %v1053
        %v1150 = vpop.f32.mrb[0].mxu0
        %v1151 = vadd.f32 %v1037, %v1150
        %v1152 = vpop.f32.mrb[0].mxu0
        %1153 = vmatprep.mubr.f32.mxu0 0.0
        %1154 = vmatmul.mubr.f32.gmra.mrb[0].mxu0 %v1056
        %v1155 = vpop.f32.mrb[0].mxu0
        %v1156 = vadd.f32 %v1037, %v1155
        %v1157 = vpop.f32.mrb[0].mxu0
        %1158 = vmatprep.mubr.f32.mxu0 0.0
        %1159 = vmatmul.mubr.f32.gmra.mrb[0].mxu0 %v1059
        %v1160 = vpop.f32.mrb[0].mxu0
        %v1161 = vadd.f32 %v1037, %v1160
        %v1162 = vpop.f32.mrb[0].mxu0
        %1163 = vmatprep.mubr.f32.mxu0 0.0
        %1164 = vmatmul.mubr.f32.gmra.mrb[0].mxu0 %v1062
        %v1165 = vpop.f32.mrb[0].mxu0
        %v1166 = vadd.f32 %v1037, %v1165
        %v1167 = vpop.f32.mrb[0].mxu0
        %1168 = vdwg.mxu0
        %v1169 = vld [vmem:[%s9] sm:$0x1]
        %v1170 = vld [vmem:[%s11] sm:$0x1]
        %v1171 = vsel %vm1039, %v1131, 0.0
        %1172 = vadd.xlane.f32.xlu0 %v1171
        %v1173 = vpop.xlane.xlu0 %1172
        %v1174 = vsel %vm1039, %v1136, 0.0
        %1175 = vadd.xlane.f32.xlu0 %v1174
        %v1176 = vpop.xlane.xlu0 %1175
        %v1177 = vsel %vm1039, %v1141, 0.0
        %1178 = vadd.xlane.f32.xlu0 %v1177
        %v1179 = vpop.xlane.xlu0 %1178
        %v1180 = vsel %vm1039, %v1146, 0.0
        %1181 = vadd.xlane.f32.xlu0 %v1180
        %v1182 = vpop.xlane.xlu0 %1181
        %v1183 = vsel %vm1039, %v1151, 0.0
        %1184 = vadd.xlane.f32.xlu0 %v1183
        %v1185 = vpop.xlane.xlu0 %1184
        %v1186 = vsel %vm1039, %v1156, 0.0
        %1187 = vadd.xlane.f32.xlu0 %v1186
        %v1188 = vpop.xlane.xlu0 %1187
        %v1189 = vsel %vm1039, %v1161, 0.0
        %1190 = vadd.xlane.f32.xlu0 %v1189
        %v1191 = vpop.xlane.xlu0 %1190
        %v1192 = vsel %vm1039, %v1166, 0.0
        %1193 = vadd.xlane.f32.xlu0 %v1192
        %v1194 = vpop.xlane.xlu0 %1193
        %v1195 = vrcp.pop 32.0
        %v1196 = vmul.f32 %v1173, %v1195
        %v1197 = vmul.f32 %v1176, %v1195
        %v1198 = vmul.f32 %v1179, %v1195
        %v1199 = vmul.f32 %v1182, %v1195
        %v1200 = vmul.f32 %v1185, %v1195
        %v1201 = vmul.f32 %v1188, %v1195
        %v1202 = vmul.f32 %v1191, %v1195
        %v1203 = vmul.f32 %v1194, %v1195
        %v1204 = vsub.f32 %v1131, %v1196
        %v1205 = vsub.f32 %v1136, %v1197
        %v1206 = vsub.f32 %v1141, %v1198
        %v1207 = vsub.f32 %v1146, %v1199
        %v1208 = vsub.f32 %v1151, %v1200
        %v1209 = vsub.f32 %v1156, %v1201
        %v1210 = vsub.f32 %v1161, %v1202
        %v1211 = vsub.f32 %v1166, %v1203
        %v1212 = vmul.f32 %v1204, %v1204
        %v1213 = vmul.f32 %v1205, %v1205
        %v1214 = vmul.f32 %v1206, %v1206
        %v1215 = vmul.f32 %v1207, %v1207
        %v1216 = vmul.f32 %v1208, %v1208
        %v1217 = vmul.f32 %v1209, %v1209
        %v1218 = vmul.f32 %v1210, %v1210
        %v1219 = vmul.f32 %v1211, %v1211
        %v1220 = vsel %vm1039, %v1212, 0.0
        %1221 = vadd.xlane.f32.xlu0 %v1220
        %v1222 = vpop.xlane.xlu0 %1221
        %v1223 = vsel %vm1039, %v1213, 0.0
        %1224 = vadd.xlane.f32.xlu0 %v1223
        %v1225 = vpop.xlane.xlu0 %1224
        %v1226 = vsel %vm1039, %v1214, 0.0
        %1227 = vadd.xlane.f32.xlu0 %v1226
        %v1228 = vpop.xlane.xlu0 %1227
        %v1229 = vsel %vm1039, %v1215, 0.0
        %1230 = vadd.xlane.f32.xlu0 %v1229
        %v1231 = vpop.xlane.xlu0 %1230
        %v1232 = vsel %vm1039, %v1216, 0.0
        %1233 = vadd.xlane.f32.xlu0 %v1232
        %v1234 = vpop.xlane.xlu0 %1233
        %v1235 = vsel %vm1039, %v1217, 0.0
        %1236 = vadd.xlane.f32.xlu0 %v1235
        %v1237 = vpop.xlane.xlu0 %1236
        %v1238 = vsel %vm1039, %v1218, 0.0
        %1239 = vadd.xlane.f32.xlu0 %v1238
        %v1240 = vpop.xlane.xlu0 %1239
        %v1241 = vsel %vm1039, %v1219, 0.0
        %1242 = vadd.xlane.f32.xlu0 %v1241
        %v1243 = vpop.xlane.xlu0 %1242
        %v1244 = vmul.f32 %v1222, %v1195
        %v1245 = vmul.f32 %v1225, %v1195
        %v1246 = vmul.f32 %v1228, %v1195
        %v1247 = vmul.f32 %v1231, %v1195
        %v1248 = vmul.f32 %v1234, %v1195
        %v1249 = vmul.f32 %v1237, %v1195
        %v1250 = vmul.f32 %v1240, %v1195
        %v1251 = vmul.f32 %v1243, %v1195
        %v1252 = vadd.f32 %v1244, 1e-05
        %v1253 = vadd.f32 %v1245, 1e-05
        %v1254 = vadd.f32 %v1246, 1e-05
        %v1255 = vadd.f32 %v1247, 1e-05
        %v1256 = vadd.f32 %v1248, 1e-05
        %v1257 = vadd.f32 %v1249, 1e-05
        %v1258 = vadd.f32 %v1250, 1e-05
        %v1259 = vadd.f32 %v1251, 1e-05
        %v1260 = vrsqrt.pop %v1252
        %v1261 = vrsqrt.pop %v1253
        %v1262 = vrsqrt.pop %v1254
        %v1263 = vrsqrt.pop %v1255
        %v1264 = vrsqrt.pop %v1256
        %v1265 = vrsqrt.pop %v1257
        %v1266 = vrsqrt.pop %v1258
        %v1267 = vrsqrt.pop %v1259
        %v1268 = vmul.f32 %v1204, %v1260
        %v1269 = vmul.f32 %v1205, %v1261
        %v1270 = vmul.f32 %v1206, %v1262
        %v1271 = vmul.f32 %v1207, %v1263
        %v1272 = vmul.f32 %v1208, %v1264
        %v1273 = vmul.f32 %v1209, %v1265
        %v1274 = vmul.f32 %v1210, %v1266
        %v1275 = vmul.f32 %v1211, %v1267
        %v1277 = vlaneseq
        %v1278 = vshrl.u32 %v1277, 7
        %v1279 = vsub.s32 0, %v1278
        %v1280 = vrot.slane %v1169, %v1279
        %v1282 = vmul.f32 %v1268, %v1280
        %v1283 = vmul.f32 %v1269, %v1280
        %v1284 = vmul.f32 %v1270, %v1280
        %v1285 = vmul.f32 %v1271, %v1280
        %v1286 = vmul.f32 %v1272, %v1280
        %v1287 = vmul.f32 %v1273, %v1280
        %v1288 = vmul.f32 %v1274, %v1280
        %v1289 = vmul.f32 %v1275, %v1280
        %v1291 = vlaneseq
        %v1292 = vshrl.u32 %v1291, 7
        %v1293 = vsub.s32 0, %v1292
        %v1294 = vrot.slane %v1170, %v1293
        %v1296 = vadd.f32 %v1282, %v1294
        %v1297 = vadd.f32 %v1283, %v1294
        %v1298 = vadd.f32 %v1284, %v1294
        %v1299 = vadd.f32 %v1285, %v1294
        %v1300 = vadd.f32 %v1286, %v1294
        %v1301 = vadd.f32 %v1287, %v1294
        %v1302 = vadd.f32 %v1288, %v1294
        %v1303 = vadd.f32 %v1289, %v1294
        %v1304 = vld [vmem:[%s17] sm:$0x1]
        %v1305 = vld [vmem:[%s19] sm:$0x1]
        %v1306 = vsel %vm1039, %v1296, 0.0
        %1307 = vadd.xlane.f32.xlu0 %v1306
        %v1308 = vpop.xlane.xlu0 %1307
        %v1309 = vsel %vm1039, %v1297, 0.0
        %1310 = vadd.xlane.f32.xlu0 %v1309
        %v1311 = vpop.xlane.xlu0 %1310
        %v1312 = vsel %vm1039, %v1298, 0.0
        %1313 = vadd.xlane.f32.xlu0 %v1312
        %v1314 = vpop.xlane.xlu0 %1313
        %v1315 = vsel %vm1039, %v1299, 0.0
        %1316 = vadd.xlane.f32.xlu0 %v1315
        %v1317 = vpop.xlane.xlu0 %1316
        %v1318 = vsel %vm1039, %v1300, 0.0
        %1319 = vadd.xlane.f32.xlu0 %v1318
        %v1320 = vpop.xlane.xlu0 %1319
        %v1321 = vsel %vm1039, %v1301, 0.0
        %1322 = vadd.xlane.f32.xlu0 %v1321
        %v1323 = vpop.xlane.xlu0 %1322
        %v1324 = vsel %vm1039, %v1302, 0.0
        %1325 = vadd.xlane.f32.xlu0 %v1324
        %v1326 = vpop.xlane.xlu0 %1325
        %v1327 = vsel %vm1039, %v1303, 0.0
        %1328 = vadd.xlane.f32.xlu0 %v1327
        %v1329 = vpop.xlane.xlu0 %1328
        %v1330 = vmul.f32 %v1308, %v1195
        %v1331 = vmul.f32 %v1311, %v1195
        %v1332 = vmul.f32 %v1314, %v1195
        %v1333 = vmul.f32 %v1317, %v1195
        %v1334 = vmul.f32 %v1320, %v1195
        %v1335 = vmul.f32 %v1323, %v1195
        %v1336 = vmul.f32 %v1326, %v1195
        %v1337 = vmul.f32 %v1329, %v1195
        %v1338 = vsub.f32 %v1296, %v1330
        %v1339 = vsub.f32 %v1297, %v1331
        %v1340 = vsub.f32 %v1298, %v1332
        %v1341 = vsub.f32 %v1299, %v1333
        %v1342 = vsub.f32 %v1300, %v1334
        %v1343 = vsub.f32 %v1301, %v1335
        %v1344 = vsub.f32 %v1302, %v1336
        %v1345 = vsub.f32 %v1303, %v1337
        %v1346 = vmul.f32 %v1338, %v1338
        %v1347 = vmul.f32 %v1339, %v1339
        %v1348 = vmul.f32 %v1340, %v1340
        %v1349 = vmul.f32 %v1341, %v1341
        %v1350 = vmul.f32 %v1342, %v1342
        %v1351 = vmul.f32 %v1343, %v1343
        %v1352 = vmul.f32 %v1344, %v1344
        %v1353 = vmul.f32 %v1345, %v1345
        %v1354 = vsel %vm1039, %v1346, 0.0
        %1355 = vadd.xlane.f32.xlu0 %v1354
        %v1356 = vpop.xlane.xlu0 %1355
        %v1357 = vsel %vm1039, %v1347, 0.0
        %1358 = vadd.xlane.f32.xlu0 %v1357
        %v1359 = vpop.xlane.xlu0 %1358
        %v1360 = vsel %vm1039, %v1348, 0.0
        %1361 = vadd.xlane.f32.xlu0 %v1360
        %v1362 = vpop.xlane.xlu0 %1361
        %v1363 = vsel %vm1039, %v1349, 0.0
        %1364 = vadd.xlane.f32.xlu0 %v1363
        %v1365 = vpop.xlane.xlu0 %1364
        %v1366 = vsel %vm1039, %v1350, 0.0
        %1367 = vadd.xlane.f32.xlu0 %v1366
        %v1368 = vpop.xlane.xlu0 %1367
        %v1369 = vsel %vm1039, %v1351, 0.0
        %1370 = vadd.xlane.f32.xlu0 %v1369
        %v1371 = vpop.xlane.xlu0 %1370
        %v1372 = vsel %vm1039, %v1352, 0.0
        %1373 = vadd.xlane.f32.xlu0 %v1372
        %v1374 = vpop.xlane.xlu0 %1373
        %v1375 = vsel %vm1039, %v1353, 0.0
        %1376 = vadd.xlane.f32.xlu0 %v1375
        %v1377 = vpop.xlane.xlu0 %1376
        %v1378 = vmul.f32 %v1356, %v1195
        %v1379 = vmul.f32 %v1359, %v1195
        %v1380 = vmul.f32 %v1362, %v1195
        %v1381 = vmul.f32 %v1365, %v1195
        %v1382 = vmul.f32 %v1368, %v1195
        %v1383 = vmul.f32 %v1371, %v1195
        %v1384 = vmul.f32 %v1374, %v1195
        %v1385 = vmul.f32 %v1377, %v1195
        %v1386 = vadd.f32 %v1378, 1e-05
        %v1387 = vadd.f32 %v1379, 1e-05
        %v1388 = vadd.f32 %v1380, 1e-05
        %v1389 = vadd.f32 %v1381, 1e-05
        %v1390 = vadd.f32 %v1382, 1e-05
        %v1391 = vadd.f32 %v1383, 1e-05
        %v1392 = vadd.f32 %v1384, 1e-05
        %v1393 = vadd.f32 %v1385, 1e-05
        %v1394 = vrsqrt.pop %v1386
        %v1395 = vrsqrt.pop %v1387
        %v1396 = vrsqrt.pop %v1388
        %v1397 = vrsqrt.pop %v1389
        %v1398 = vrsqrt.pop %v1390
        %v1399 = vrsqrt.pop %v1391
        %v1400 = vrsqrt.pop %v1392
        %v1401 = vrsqrt.pop %v1393
        %v1402 = vmul.f32 %v1338, %v1394
        %v1403 = vmul.f32 %v1339, %v1395
        %v1404 = vmul.f32 %v1340, %v1396
        %v1405 = vmul.f32 %v1341, %v1397
        %v1406 = vmul.f32 %v1342, %v1398
        %v1407 = vmul.f32 %v1343, %v1399
        %v1408 = vmul.f32 %v1344, %v1400
        %v1409 = vmul.f32 %v1345, %v1401
        %v1411 = vlaneseq
        %v1412 = vshrl.u32 %v1411, 7
        %v1413 = vsub.s32 0, %v1412
        %v1414 = vrot.slane %v1304, %v1413
        %v1416 = vmul.f32 %v1402, %v1414
        %v1417 = vmul.f32 %v1403, %v1414
        %v1418 = vmul.f32 %v1404, %v1414
        %v1419 = vmul.f32 %v1405, %v1414
        %v1420 = vmul.f32 %v1406, %v1414
        %v1421 = vmul.f32 %v1407, %v1414
        %v1422 = vmul.f32 %v1408, %v1414
        %v1423 = vmul.f32 %v1409, %v1414
        %v1425 = vlaneseq
        %v1426 = vshrl.u32 %v1425, 7
        %v1427 = vsub.s32 0, %v1426
        %v1428 = vrot.slane %v1305, %v1427
        %v1430 = vadd.f32 %v1416, %v1428
        %v1431 = vadd.f32 %v1417, %v1428
        %v1432 = vadd.f32 %v1418, %v1428
        %v1433 = vadd.f32 %v1419, %v1428
        %v1434 = vadd.f32 %v1420, %v1428
        %v1435 = vadd.f32 %v1421, %v1428
        %v1436 = vadd.f32 %v1422, %v1428
        %v1437 = vadd.f32 %v1423, %v1428
        %v1438 = vld [vmem:[%s1014] sm:$0xf]
        %v1439 = vld [vmem:[%s13] sm:$0x1]
        %v1440 = vld [vmem:[%s15] sm:$0x1]
        %vm1441 = vcmask 257024
        %v1442 = vsel %vm1441, %v1438, 0.0
        %1443 = vadd.xlane.f32.xlu0 %v1442
        %v1444 = vpop.xlane.xlu0 %1443
        %v1445 = vmul.f32 %v1444, %v1195
        %v1446 = vsub.f32 %v1438, %v1445
        %v1447 = vmul.f32 %v1446, %v1446
        %v1448 = vsel %vm1441, %v1447, 0.0
        %1449 = vadd.xlane.f32.xlu0 %v1448
        %v1450 = vpop.xlane.xlu0 %1449
        %v1451 = vmul.f32 %v1450, %v1195
        %v1452 = vadd.f32 %v1451, 1e-05
        %v1453 = vrsqrt.pop %v1452
        %v1454 = vmul.f32 %v1446, %v1453
        %v1456 = vlaneseq
        %v1457 = vshrl.u32 %v1456, 7
        %v1458 = vsub.s32 0, %v1457
        %v1459 = vrot.slane %v1439, %v1458
        %v1461 = vmul.f32 %v1454, %v1459
        %v1463 = vlaneseq
        %v1464 = vshrl.u32 %v1463, 7
        %v1465 = vsub.s32 0, %v1464
        %v1466 = vrot.slane %v1440, %v1465
        %v1468 = vadd.f32 %v1461, %v1466
        %v1469 = vld [vmem:[%s21] sm:$0xff]
        %v1470 = vld [vmem:[%s21 + $0x8] sm:$0xff]
        %v1471 = vld [vmem:[%s21 + $0x10] sm:$0xff]
        %v1472 = vld [vmem:[%s21 + $0x18] sm:$0xff]
        %v1473 = vld [vmem:[%s23] sm:$0x1]
        %v1475 = vlaneseq
        %v1476 = vshrl.u32 %v1475, 7
        %v1477 = vsub.s32 0, %v1476
        %v1478 = vrot.slane %v1473, %v1477
        %v1481 = vsel %vm1039, %v1468, 0
        %1483 = vmatprep.subr.mxu0 0.0
        %1484 = vmatpush1.msra.mxu0 %v1469
        %1485 = vmatprep.subr.mxu0 0.0
        %1486 = vmatpush1.msra.mxu0 %v1470
        %1487 = vmatprep.subr.mxu0 0.0
        %1488 = vmatpush1.msra.mxu0 %v1471
        %1489 = vmatprep.subr.mxu0 0.0
        %1490 = vmatpush1.msra.mxu0 %v1472
        %1491 = vmatprep.subr.mxu0 0.0
        %1492 = vmatpush1.msra.mxu0 0.0
        %1493 = vmatprep.subr.mxu0 0.0
        %1494 = vmatpush1.msra.mxu0 0.0
        %1495 = vmatprep.subr.mxu0 0.0
        %1496 = vmatpush1.msra.mxu0 0.0
        %1497 = vmatprep.subr.mxu0 0.0
        %1498 = vmatpush1.msra.mxu0 0.0
        %1499 = vmatprep.subr.mxu0 0.0
        %1500 = vmatpush1.msra.mxu0 0.0
        %1501 = vmatprep.subr.mxu0 0.0
        %1502 = vmatpush1.msra.mxu0 0.0
        %1503 = vmatprep.subr.mxu0 0.0
        %1504 = vmatpush1.msra.mxu0 0.0
        %1505 = vmatprep.subr.mxu0 0.0
        %1506 = vmatpush1.msra.mxu0 0.0
        %1507 = vmatprep.subr.mxu0 0.0
        %1508 = vmatpush1.msra.mxu0 0.0
        %1509 = vmatprep.subr.mxu0 0.0
        %1510 = vmatpush1.msra.mxu0 0.0
        %1511 = vmatprep.subr.mxu0 0.0
        %1512 = vmatpush1.msra.mxu0 0.0
        %1513 = vmatprep.subr.mxu0 0.0
        %1514 = vmatpush1.msra.mxu0 0.0
        %1515 = vmatprep.subr.mxu0 0.0
        %1516 = vmatpush1.msra.mxu0 0.0
        %1517 = vmatprep.subr.mxu0 0.0
        %1518 = vmatpush1.msra.mxu0 0.0
        %1519 = vmatprep.subr.mxu0 0.0
        %1520 = vmatpush1.msra.mxu0 0.0
        %1521 = vmatprep.subr.mxu0 0.0
        %1522 = vmatpush1.msra.mxu0 0.0
        %1523 = vmatprep.subr.mxu0 0.0
        %1524 = vmatpush1.msra.mxu0 0.0
        %1525 = vmatprep.subr.mxu0 0.0
        %1526 = vmatpush1.msra.mxu0 0.0
        %1527 = vmatprep.subr.mxu0 0.0
        %1528 = vmatpush1.msra.mxu0 0.0
        %1529 = vmatprep.subr.mxu0 0.0
        %1530 = vmatpush1.msra.mxu0 0.0
        %1531 = vmatprep.subr.mxu0 0.0
        %1532 = vmatpush1.msra.mxu0 0.0
        %1533 = vmatprep.subr.mxu0 0.0
        %1534 = vmatpush1.msra.mxu0 0.0
        %1535 = vmatprep.subr.mxu0 0.0
        %1536 = vmatpush1.msra.mxu0 0.0
        %1537 = vmatprep.subr.mxu0 0.0
        %1538 = vmatpush1.msra.mxu0 0.0
        %1539 = vmatprep.subr.mxu0 0.0
        %1540 = vmatpush1.msra.mxu0 0.0
        %1541 = vmatprep.subr.mxu0 0.0
        %1542 = vmatpush1.msra.mxu0 0.0
        %1543 = vmatprep.subr.mxu0 0.0
        %1544 = vmatpush1.msra.mxu0 0.0
        %1545 = vmatprep.subr.mxu0 0.0
        %1546 = vmatpush1.msra.mxu0 0.0
        %1547 = vmatprep.mubr.f32.mxu0 0.0
        %1548 = vmatmul.mubr.f32.gmra.mrb[0].mxu0 %v1481
        %v1549 = vpop.f32.mrb[0].mxu0
        %v1550 = vadd.f32 %v1478, %v1549
        %v1551 = vpop.f32.mrb[0].mxu0
        %1552 = vdwg.mxu0
        %v1553 = vmul.f32 %v1550, 0.35355338
        %1554 = vst.msk [vmem:[#allocation3] sm:$0xf] %vm1441, %v1553
        %v1555 = vld [vmem:[%s25] sm:$0xff]
        %v1556 = vld [vmem:[%s25 + $0x8] sm:$0xff]
        %v1557 = vld [vmem:[%s25 + $0x10] sm:$0xff]
        %v1558 = vld [vmem:[%s25 + $0x18] sm:$0xff]
        %v1559 = vld [vmem:[%s27] sm:$0x1]
        %v1561 = vlaneseq
        %v1562 = vshrl.u32 %v1561, 7
        %v1563 = vsub.s32 0, %v1562
        %v1564 = vrot.slane %v1559, %v1563
        %v1567 = vsel %vm1039, %v1430, 0
        %v1570 = vsel %vm1039, %v1431, 0
        %v1573 = vsel %vm1039, %v1432, 0
        %v1576 = vsel %vm1039, %v1433, 0
        %v1579 = vsel %vm1039, %v1434, 0
        %v1582 = vsel %vm1039, %v1435, 0
        %v1585 = vsel %vm1039, %v1436, 0
        %v1588 = vsel %vm1039, %v1437, 0
        %1590 = vmatprep.subr.mxu0 0.0
        %1591 = vmatpush1.msra.mxu0 %v1555
        %1592 = vmatprep.subr.mxu0 0.0
        %1593 = vmatpush1.msra.mxu0 %v1556
        %1594 = vmatprep.subr.mxu0 0.0
        %1595 = vmatpush1.msra.mxu0 %v1557
        %1596 = vmatprep.subr.mxu0 0.0
        %1597 = vmatpush1.msra.mxu0 %v1558
        %1598 = vmatprep.subr.mxu0 0.0
        %1599 = vmatpush1.msra.mxu0 0.0
        %1600 = vmatprep.subr.mxu0 0.0
        %1601 = vmatpush1.msra.mxu0 0.0
        %1602 = vmatprep.subr.mxu0 0.0
        %1603 = vmatpush1.msra.mxu0 0.0
        %1604 = vmatprep.subr.mxu0 0.0
        %1605 = vmatpush1.msra.mxu0 0.0
        %1606 = vmatprep.subr.mxu0 0.0
        %1607 = vmatpush1.msra.mxu0 0.0
        %1608 = vmatprep.subr.mxu0 0.0
        %1609 = vmatpush1.msra.mxu0 0.0
        %1610 = vmatprep.subr.mxu0 0.0
        %1611 = vmatpush1.msra.mxu0 0.0
        %1612 = vmatprep.subr.mxu0 0.0
        %1613 = vmatpush1.msra.mxu0 0.0
        %1614 = vmatprep.subr.mxu0 0.0
        %1615 = vmatpush1.msra.mxu0 0.0
        %1616 = vmatprep.subr.mxu0 0.0
        %1617 = vmatpush1.msra.mxu0 0.0
        %1618 = vmatprep.subr.mxu0 0.0
        %1619 = vmatpush1.msra.mxu0 0.0
        %1620 = vmatprep.subr.mxu0 0.0
        %1621 = vmatpush1.msra.mxu0 0.0
        %1622 = vmatprep.subr.mxu0 0.0
        %1623 = vmatpush1.msra.mxu0 0.0
        %1624 = vmatprep.subr.mxu0 0.0
        %1625 = vmatpush1.msra.mxu0 0.0
        %1626 = vmatprep.subr.mxu0 0.0
        %1627 = vmatpush1.msra.mxu0 0.0
        %1628 = vmatprep.subr.mxu0 0.0
        %1629 = vmatpush1.msra.mxu0 0.0
        %1630 = vmatprep.subr.mxu0 0.0
        %1631 = vmatpush1.msra.mxu0 0.0
        %1632 = vmatprep.subr.mxu0 0.0
        %1633 = vmatpush1.msra.mxu0 0.0
        %1634 = vmatprep.subr.mxu0 0.0
        %1635 = vmatpush1.msra.mxu0 0.0
        %1636 = vmatprep.subr.mxu0 0.0
        %1637 = vmatpush1.msra.mxu0 0.0
        %1638 = vmatprep.subr.mxu0 0.0
        %1639 = vmatpush1.msra.mxu0 0.0
        %1640 = vmatprep.subr.mxu0 0.0
        %1641 = vmatpush1.msra.mxu0 0.0
        %1642 = vmatprep.subr.mxu0 0.0
        %1643 = vmatpush1.msra.mxu0 0.0
        %1644 = vmatprep.subr.mxu0 0.0
        %1645 = vmatpush1.msra.mxu0 0.0
        %1646 = vmatprep.subr.mxu0 0.0
        %1647 = vmatpush1.msra.mxu0 0.0
        %1648 = vmatprep.subr.mxu0 0.0
        %1649 = vmatpush1.msra.mxu0 0.0
        %1650 = vmatprep.subr.mxu0 0.0
        %1651 = vmatpush1.msra.mxu0 0.0
        %1652 = vmatprep.subr.mxu0 0.0
        %1653 = vmatpush1.msra.mxu0 0.0
        %1654 = vmatprep.mubr.f32.mxu0 0.0
        %1655 = vmatmul.mubr.f32.gmra.mrb[0].mxu0 %v1567
        %v1656 = vpop.f32.mrb[0].mxu0
        %v1657 = vadd.f32 %v1564, %v1656
        %v1658 = vpop.f32.mrb[0].mxu0
        %1659 = vmatprep.mubr.f32.mxu0 0.0
        %1660 = vmatmul.mubr.f32.gmra.mrb[0].mxu0 %v1570
        %v1661 = vpop.f32.mrb[0].mxu0
        %v1662 = vadd.f32 %v1564, %v1661
        %v1663 = vpop.f32.mrb[0].mxu0
        %1664 = vmatprep.mubr.f32.mxu0 0.0
        %1665 = vmatmul.mubr.f32.gmra.mrb[0].mxu0 %v1573
        %v1666 = vpop.f32.mrb[0].mxu0
        %v1667 = vadd.f32 %v1564, %v1666
        %v1668 = vpop.f32.mrb[0].mxu0
        %1669 = vmatprep.mubr.f32.mxu0 0.0
        %1670 = vmatmul.mubr.f32.gmra.mrb[0].mxu0 %v1576
        %v1671 = vpop.f32.mrb[0].mxu0
        %v1672 = vadd.f32 %v1564, %v1671
        %v1673 = vpop.f32.mrb[0].mxu0
        %1674 = vmatprep.mubr.f32.mxu0 0.0
        %1675 = vmatmul.mubr.f32.gmra.mrb[0].mxu0 %v1579
        %v1676 = vpop.f32.mrb[0].mxu0
        %v1677 = vadd.f32 %v1564, %v1676
        %v1678 = vpop.f32.mrb[0].mxu0
        %1679 = vmatprep.mubr.f32.mxu0 0.0
        %1680 = vmatmul.mubr.f32.gmra.mrb[0].mxu0 %v1582
        %v1681 = vpop.f32.mrb[0].mxu0
        %v1682 = vadd.f32 %v1564, %v1681
        %v1683 = vpop.f32.mrb[0].mxu0
        %1684 = vmatprep.mubr.f32.mxu0 0.0
        %1685 = vmatmul.mubr.f32.gmra.mrb[0].mxu0 %v1585
        %v1686 = vpop.f32.mrb[0].mxu0
        %v1687 = vadd.f32 %v1564, %v1686
        %v1688 = vpop.f32.mrb[0].mxu0
        %1689 = vmatprep.mubr.f32.mxu0 0.0
        %1690 = vmatmul.mubr.f32.gmra.mrb[0].mxu0 %v1588
        %v1691 = vpop.f32.mrb[0].mxu0
        %v1692 = vadd.f32 %v1564, %v1691
        %v1693 = vpop.f32.mrb[0].mxu0
        %1694 = vdwg.mxu0
        %vm1695 = vcmask 523264
        %1696 = vst.msk [vmem:[#allocation2] sm:$0xff] %vm1695, %v1657
        %1697 = vst.msk [vmem:[#allocation2 + $0x8] sm:$0xff] %vm1695, %v1662
        %1698 = vst.msk [vmem:[#allocation2 + $0x10] sm:$0xff] %vm1695, %v1667
        %1699 = vst.msk [vmem:[#allocation2 + $0x18] sm:$0xff] %vm1695, %v1672
        %1700 = vst.msk [vmem:[#allocation2 + $0x20] sm:$0xff] %vm1695, %v1677
        %1701 = vst.msk [vmem:[#allocation2 + $0x28] sm:$0xff] %vm1695, %v1682
        %1702 = vst.msk [vmem:[#allocation2 + $0x30] sm:$0xff] %vm1695, %v1687
        %1703 = vst.msk [vmem:[#allocation2 + $0x38] sm:$0xff] %vm1695, %v1692
        %v1704 = vld [vmem:[#allocation3] sm:$0x1]
        %vm1705 = vcmask 57344
        %1706 = vst.msk [vmem:[#allocation4] sm:$0x1] %vm1705, %v1704
        %v1707 = vld [vmem:[#allocation3] sm:$0x1]
        %1709 = vrot.lane.b32.xlu0 %v1707, 120
        %v1710 = vpop.permute.xlu0 %1709
        %1712 = vst.msk [vmem:[#allocation4 + $0x1] sm:$0x1] %vm1705, %v1710
        %v1713 = vld [vmem:[#allocation3] sm:$0x1]
        %1715 = vrot.lane.b32.xlu0 %v1713, 112
        %v1716 = vpop.permute.xlu0 %1715
        %1718 = vst.msk [vmem:[#allocation4 + $0x2] sm:$0x1] %vm1705, %v1716
        %v1719 = vld [vmem:[#allocation3] sm:$0x1]
        %1721 = vrot.lane.b32.xlu0 %v1719, 104
        %v1722 = vpop.permute.xlu0 %1721
        %1724 = vst.msk [vmem:[#allocation4 + $0x3] sm:$0x1] %vm1705, %v1722
        %v1725 = vld [vmem:[#allocation4] sm:$0xf]
        %v1726 = vld [vmem:[#allocation2] sm:$0xff]
        %v1727 = vld [vmem:[#allocation2 + $0x8] sm:$0xff]
        %v1728 = vld [vmem:[#allocation2 + $0x10] sm:$0xff]
        %v1729 = vld [vmem:[#allocation2 + $0x18] sm:$0xff]
        %v1730 = vld [vmem:[#allocation2 + $0x20] sm:$0xff]
        %v1731 = vld [vmem:[#allocation2 + $0x28] sm:$0xff]
        %v1732 = vld [vmem:[#allocation2 + $0x30] sm:$0xff]
        %v1733 = vld [vmem:[#allocation2 + $0x38] sm:$0xff]
        %vm1734 = vcmask 64512
        %v1736 = vsel %vm1734, %v1725, 0
        %v1739 = vsel %vm1734, %v1726, 0
        %v1742 = vsel %vm1734, %v1727, 0
        %v1745 = vsel %vm1734, %v1728, 0
        %v1748 = vsel %vm1734, %v1729, 0
        %v1751 = vsel %vm1734, %v1730, 0
        %v1754 = vsel %vm1734, %v1731, 0
        %v1757 = vsel %vm1734, %v1732, 0
        %v1760 = vsel %vm1734, %v1733, 0
        %1762 = vmatprep.subr.mxu0 0.0
        %1763 = vmatpush1.xpose.msra.mxu0 %v1739
        %1764 = vmatprep.subr.mxu0 0.0
        %1765 = vmatpush1.xpose.msra.mxu0 %v1742
        %1766 = vmatprep.subr.mxu0 0.0
        %1767 = vmatpush1.xpose.msra.mxu0 %v1745
        %1768 = vmatprep.subr.mxu0 0.0
        %1769 = vmatpush1.xpose.msra.mxu0 %v1748
        %1770 = vmatprep.subr.mxu0 0.0
        %1771 = vmatpush1.xpose.msra.mxu0 %v1751
        %1772 = vmatprep.subr.mxu0 0.0
        %1773 = vmatpush1.xpose.msra.mxu0 %v1754
        %1774 = vmatprep.subr.mxu0 0.0
        %1775 = vmatpush1.xpose.msra.mxu0 %v1757
        %1776 = vmatprep.subr.mxu0 0.0
        %1777 = vmatpush1.xpose.msra.mxu0 %v1760
        %1778 = vmatprep.subr.mxu0 0.0
        %1779 = vmatpush1.xpose.msra.mxu0 0.0
        %1780 = vmatprep.subr.mxu0 0.0
        %1781 = vmatpush1.xpose.msra.mxu0 0.0
        %1782 = vmatprep.subr.mxu0 0.0
        %1783 = vmatpush1.xpose.msra.mxu0 0.0
        %1784 = vmatprep.subr.mxu0 0.0
        %1785 = vmatpush1.xpose.msra.mxu0 0.0
        %1786 = vmatprep.subr.mxu0 0.0
        %1787 = vmatpush1.xpose.msra.mxu0 0.0
        %1788 = vmatprep.subr.mxu0 0.0
        %1789 = vmatpush1.xpose.msra.mxu0 0.0
        %1790 = vmatprep.subr.mxu0 0.0
        %1791 = vmatpush1.xpose.msra.mxu0 0.0
        %1792 = vmatprep.subr.mxu0 0.0
        %1793 = vmatpush1.xpose.msra.mxu0 0.0
        %1794 = vmatprep.subr.mxu0 0.0
        %1795 = vmatpush1.xpose.msra.mxu0 0.0
        %1796 = vmatprep.subr.mxu0 0.0
        %1797 = vmatpush1.xpose.msra.mxu0 0.0
        %1798 = vmatprep.subr.mxu0 0.0
        %1799 = vmatpush1.xpose.msra.mxu0 0.0
        %1800 = vmatprep.subr.mxu0 0.0
        %1801 = vmatpush1.xpose.msra.mxu0 0.0
        %1802 = vmatprep.subr.mxu0 0.0
        %1803 = vmatpush1.xpose.msra.mxu0 0.0
        %1804 = vmatprep.subr.mxu0 0.0
        %1805 = vmatpush1.xpose.msra.mxu0 0.0
        %1806 = vmatprep.subr.mxu0 0.0
        %1807 = vmatpush1.xpose.msra.mxu0 0.0
        %1808 = vmatprep.subr.mxu0 0.0
        %1809 = vmatpush1.xpose.msra.mxu0 0.0
        %1810 = vmatprep.subr.mxu0 0.0
        %1811 = vmatpush1.xpose.msra.mxu0 0.0
        %1812 = vmatprep.subr.mxu0 0.0
        %1813 = vmatpush1.xpose.msra.mxu0 0.0
        %1814 = vmatprep.subr.mxu0 0.0
        %1815 = vmatpush1.xpose.msra.mxu0 0.0
        %1816 = vmatprep.subr.mxu0 0.0
        %1817 = vmatpush1.xpose.msra.mxu0 0.0
        %1818 = vmatprep.subr.mxu0 0.0
        %1819 = vmatpush1.xpose.msra.mxu0 0.0
        %1820 = vmatprep.subr.mxu0 0.0
        %1821 = vmatpush1.xpose.msra.mxu0 0.0
        %1822 = vmatprep.subr.mxu0 0.0
        %1823 = vmatpush1.xpose.msra.mxu0 0.0
        %1824 = vmatprep.subr.mxu0 0.0
        %1825 = vmatpush1.xpose.msra.mxu0 0.0
        %1826 = vmatprep.mubr.f32.mxu0 0.0
        %1827 = vmatmul.mubr.f32.gmra.mrb[0].mxu0 %v1736
        %v1828 = vpop.f32.mrb[0].mxu0
        %v1829 = vadd.f32 0.0, %v1828
        %v1830 = vpop.f32.mrb[0].mxu0
        %1831 = vdwg.mxu0
        %vm1832 = vcmask 519168
        %v1833 = vsel %vm1832, %v1829, -inf
        %1834 = vmax.xlane.f32.xlu0 %v1833
        %v1835 = vpop.xlane.xlu0 %1834
        %v1836 = vsub.f32 %v1829, %v1835
        %v1837 = vmul.f32 %v1836, 1.442695
        %v1838 = vpow.pop %v1837
        %v1839 = vsel %vm1832, %v1838, 0.0
        %1840 = vadd.xlane.f32.xlu0 %v1839
        %v1841 = vpop.xlane.xlu0 %1840
        %v1842 = vrcp.pop %v1841
        %v1843 = vmul.f32 %v1838, %v1842
        %1844 = vrot.lane.b32.xlu0 %v1726, 96
        %v1845 = vpop.permute.xlu0 %1844
        %1846 = vrot.lane.b32.xlu0 %v1727, 96
        %v1847 = vpop.permute.xlu0 %1846
        %1848 = vrot.lane.b32.xlu0 %v1728, 96
        %v1849 = vpop.permute.xlu0 %1848
        %1850 = vrot.lane.b32.xlu0 %v1729, 96
        %v1851 = vpop.permute.xlu0 %1850
        %1852 = vrot.lane.b32.xlu0 %v1730, 96
        %v1853 = vpop.permute.xlu0 %1852
        %1854 = vrot.lane.b32.xlu0 %v1731, 96
        %v1855 = vpop.permute.xlu0 %1854
        %1856 = vrot.lane.b32.xlu0 %v1732, 96
        %v1857 = vpop.permute.xlu0 %1856
        %1858 = vrot.lane.b32.xlu0 %v1733, 96
        %v1859 = vpop.permute.xlu0 %1858
        %v1869 = vsel %vm1695, %v1843, 0
        %1871 = vmatprep.subr.mxu0 0.0
        %1872 = vmatpush1.msra.mxu0 %v1845
        %1873 = vmatprep.subr.mxu0 0.0
        %1874 = vmatpush1.msra.mxu0 %v1847
        %1875 = vmatprep.subr.mxu0 0.0
        %1876 = vmatpush1.msra.mxu0 %v1849
        %1877 = vmatprep.subr.mxu0 0.0
        %1878 = vmatpush1.msra.mxu0 %v1851
        %1879 = vmatprep.subr.mxu0 0.0
        %1880 = vmatpush1.msra.mxu0 %v1853
        %1881 = vmatprep.subr.mxu0 0.0
        %1882 = vmatpush1.msra.mxu0 %v1855
        %1883 = vmatprep.subr.mxu0 0.0
        %1884 = vmatpush1.msra.mxu0 %v1857
        %1885 = vmatprep.subr.mxu0 0.0
        %1886 = vmatpush1.msra.mxu0 %v1859
        %1887 = vmatprep.subr.mxu0 0.0
        %1888 = vmatpush1.msra.mxu0 0.0
        %1889 = vmatprep.subr.mxu0 0.0
        %1890 = vmatpush1.msra.mxu0 0.0
        %1891 = vmatprep.subr.mxu0 0.0
        %1892 = vmatpush1.msra.mxu0 0.0
        %1893 = vmatprep.subr.mxu0 0.0
        %1894 = vmatpush1.msra.mxu0 0.0
        %1895 = vmatprep.subr.mxu0 0.0
        %1896 = vmatpush1.msra.mxu0 0.0
        %1897 = vmatprep.subr.mxu0 0.0
        %1898 = vmatpush1.msra.mxu0 0.0
        %1899 = vmatprep.subr.mxu0 0.0
        %1900 = vmatpush1.msra.mxu0 0.0
        %1901 = vmatprep.subr.mxu0 0.0
        %1902 = vmatpush1.msra.mxu0 0.0
        %1903 = vmatprep.subr.mxu0 0.0
        %1904 = vmatpush1.msra.mxu0 0.0
        %1905 = vmatprep.subr.mxu0 0.0
        %1906 = vmatpush1.msra.mxu0 0.0
        %1907 = vmatprep.subr.mxu0 0.0
        %1908 = vmatpush1.msra.mxu0 0.0
        %1909 = vmatprep.subr.mxu0 0.0
        %1910 = vmatpush1.msra.mxu0 0.0
        %1911 = vmatprep.subr.mxu0 0.0
        %1912 = vmatpush1.msra.mxu0 0.0
        %1913 = vmatprep.subr.mxu0 0.0
        %1914 = vmatpush1.msra.mxu0 0.0
        %1915 = vmatprep.subr.mxu0 0.0
        %1916 = vmatpush1.msra.mxu0 0.0
        %1917 = vmatprep.subr.mxu0 0.0
        %1918 = vmatpush1.msra.mxu0 0.0
        %1919 = vmatprep.subr.mxu0 0.0
        %1920 = vmatpush1.msra.mxu0 0.0
        %1921 = vmatprep.subr.mxu0 0.0
        %1922 = vmatpush1.msra.mxu0 0.0
        %1923 = vmatprep.subr.mxu0 0.0
        %1924 = vmatpush1.msra.mxu0 0.0
        %1925 = vmatprep.subr.mxu0 0.0
        %1926 = vmatpush1.msra.mxu0 0.0
        %1927 = vmatprep.subr.mxu0 0.0
        %1928 = vmatpush1.msra.mxu0 0.0
        %1929 = vmatprep.subr.mxu0 0.0
        %1930 = vmatpush1.msra.mxu0 0.0
        %1931 = vmatprep.subr.mxu0 0.0
        %1932 = vmatpush1.msra.mxu0 0.0
        %1933 = vmatprep.subr.mxu0 0.0
        %1934 = vmatpush1.msra.mxu0 0.0
        %1935 = vmatprep.mubr.f32.mxu0 0.0
        %1936 = vmatmul.mubr.f32.gmra.mrb[0].mxu0 %v1869
        %v1937 = vpop.f32.mrb[0].mxu0
        %v1938 = vadd.f32 0.0, %v1937
        %v1939 = vpop.f32.mrb[0].mxu0
        %1940 = vdwg.mxu0
        %vm1941 = vcmask 60416
        %1942 = vst.msk [vmem:[#allocation5] sm:$0xf] %vm1941, %v1938
        %v1943 = vld [vmem:[#allocation5] sm:$0x1]
        %1944 = vst.msk [vmem:[#allocation6] sm:$0x1] %vm1705, %v1943
        %v1945 = vld [vmem:[#allocation5 + $0x1] sm:$0x1]
        %1947 = vrot.lane.b32.xlu0 %v1945, 8
        %v1948 = vpop.permute.xlu0 %1947
        %vm1950 = vcmask 122944
        %1951 = vst.msk [vmem:[#allocation6] sm:$0x1] %vm1950, %v1948
        %v1952 = vld [vmem:[#allocation5 + $0x2] sm:$0x1]
        %1954 = vrot.lane.b32.xlu0 %v1952, 16
        %v1955 = vpop.permute.xlu0 %1954
        %vm1957 = vcmask 188544
        %1958 = vst.msk [vmem:[#allocation6] sm:$0x1] %vm1957, %v1955
        %v1959 = vld [vmem:[#allocation5 + $0x3] sm:$0x1]
        %1961 = vrot.lane.b32.xlu0 %v1959, 24
        %v1962 = vpop.permute.xlu0 %1961
        %vm1964 = vcmask 254144
        %1965 = vst.msk [vmem:[#allocation6] sm:$0x1] %vm1964, %v1962
        %v1966 = vadd.f32 %v1829, %v1829
        %v1967 = vld [vmem:[%s45] sm:$0x1]
        %v1968 = vld [vmem:[%s47] sm:$0x1]
        %v1969 = vsel %vm1832, %v1966, 0.0
        %1970 = vadd.xlane.f32.xlu0 %v1969
        %v1971 = vpop.xlane.xlu0 %1970
        %v1972 = vrcp.pop 64.0
        %v1973 = vmul.f32 %v1971, %v1972
        %v1974 = vsub.f32 %v1966, %v1973
        %v1975 = vmul.f32 %v1974, %v1974
        %v1976 = vsel %vm1832, %v1975, 0.0
        %1977 = vadd.xlane.f32.xlu0 %v1976
        %v1978 = vpop.xlane.xlu0 %1977
        %v1979 = vmul.f32 %v1978, %v1972
        %v1980 = vadd.f32 %v1979, 1e-05
        %v1981 = vrsqrt.pop %v1980
        %v1982 = vmul.f32 %v1974, %v1981
        %v1984 = vlaneseq
        %v1985 = vshrl.u32 %v1984, 7
        %v1986 = vsub.s32 0, %v1985
        %v1987 = vrot.slane %v1967, %v1986
        %v1989 = vmul.f32 %v1982, %v1987
        %v1991 = vlaneseq
        %v1992 = vshrl.u32 %v1991, 7
        %v1993 = vsub.s32 0, %v1992
        %v1994 = vrot.slane %v1968, %v1993
        %v1996 = vadd.f32 %v1989, %v1994
        %v1997 = vld [vmem:[%s49] sm:$0xff]
        %v1998 = vld [vmem:[%s49 + $0x8] sm:$0xff]
        %v1999 = vld [vmem:[%s49 + $0x10] sm:$0xff]
        %v2000 = vld [vmem:[%s49 + $0x18] sm:$0xff]
        %v2001 = vld [vmem:[%s49 + $0x20] sm:$0xff]
        %v2002 = vld [vmem:[%s49 + $0x28] sm:$0xff]
        %v2003 = vld [vmem:[%s49 + $0x30] sm:$0xff]
        %v2004 = vld [vmem:[%s49 + $0x38] sm:$0xff]
        %v2005 = vld [vmem:[%s51] sm:$0x1]
        %v2007 = vlaneseq
        %v2008 = vshrl.u32 %v2007, 7
        %v2009 = vsub.s32 0, %v2008
        %v2010 = vrot.slane %v2005, %v2009
        %v2013 = vsel %vm1695, %v1996, 0
        %2015 = vmatprep.subr.mxu0 0.0
        %2016 = vmatpush1.msra.mxu0 %v1997
        %2017 = vmatprep.subr.mxu0 0.0
        %2018 = vmatpush1.msra.mxu0 %v1998
        %2019 = vmatprep.subr.mxu0 0.0
        %2020 = vmatpush1.msra.mxu0 %v1999
        %2021 = vmatprep.subr.mxu0 0.0
        %2022 = vmatpush1.msra.mxu0 %v2000
        %2023 = vmatprep.subr.mxu0 0.0
        %2024 = vmatpush1.msra.mxu0 %v2001
        %2025 = vmatprep.subr.mxu0 0.0
        %2026 = vmatpush1.msra.mxu0 %v2002
        %2027 = vmatprep.subr.mxu0 0.0
        %2028 = vmatpush1.msra.mxu0 %v2003
        %2029 = vmatprep.subr.mxu0 0.0
        %2030 = vmatpush1.msra.mxu0 %v2004
        %2031 = vmatprep.subr.mxu0 0.0
        %2032 = vmatpush1.msra.mxu0 0.0
        %2033 = vmatprep.subr.mxu0 0.0
        %2034 = vmatpush1.msra.mxu0 0.0
        %2035 = vmatprep.subr.mxu0 0.0
        %2036 = vmatpush1.msra.mxu0 0.0
        %2037 = vmatprep.subr.mxu0 0.0
        %2038 = vmatpush1.msra.mxu0 0.0
        %2039 = vmatprep.subr.mxu0 0.0
        %2040 = vmatpush1.msra.mxu0 0.0
        %2041 = vmatprep.subr.mxu0 0.0
        %2042 = vmatpush1.msra.mxu0 0.0
        %2043 = vmatprep.subr.mxu0 0.0
        %2044 = vmatpush1.msra.mxu0 0.0
        %2045 = vmatprep.subr.mxu0 0.0
        %2046 = vmatpush1.msra.mxu0 0.0
        %2047 = vmatprep.subr.mxu0 0.0
        %2048 = vmatpush1.msra.mxu0 0.0
        %2049 = vmatprep.subr.mxu0 0.0
        %2050 = vmatpush1.msra.mxu0 0.0
        %2051 = vmatprep.subr.mxu0 0.0
        %2052 = vmatpush1.msra.mxu0 0.0
        %2053 = vmatprep.subr.mxu0 0.0
        %2054 = vmatpush1.msra.mxu0 0.0
        %2055 = vmatprep.subr.mxu0 0.0
        %2056 = vmatpush1.msra.mxu0 0.0
        %2057 = vmatprep.subr.mxu0 0.0
        %2058 = vmatpush1.msra.mxu0 0.0
        %2059 = vmatprep.subr.mxu0 0.0
        %2060 = vmatpush1.msra.mxu0 0.0
        %2061 = vmatprep.subr.mxu0 0.0
        %2062 = vmatpush1.msra.mxu0 0.0
        %2063 = vmatprep.subr.mxu0 0.0
        %2064 = vmatpush1.msra.mxu0 0.0
        %2065 = vmatprep.subr.mxu0 0.0
        %2066 = vmatpush1.msra.mxu0 0.0
        %2067 = vmatprep.subr.mxu0 0.0
        %2068 = vmatpush1.msra.mxu0 0.0
        %2069 = vmatprep.subr.mxu0 0.0
        %2070 = vmatpush1.msra.mxu0 0.0
        %2071 = vmatprep.subr.mxu0 0.0
        %2072 = vmatpush1.msra.mxu0 0.0
        %2073 = vmatprep.subr.mxu0 0.0
        %2074 = vmatpush1.msra.mxu0 0.0
        %2075 = vmatprep.subr.mxu0 0.0
        %2076 = vmatpush1.msra.mxu0 0.0
        %2077 = vmatprep.subr.mxu0 0.0
        %2078 = vmatpush1.msra.mxu0 0.0
        %2079 = vmatprep.mubr.f32.mxu0 0.0
        %2080 = vmatmul.mubr.f32.gmra.mrb[0].mxu0 %v2013
        %v2081 = vpop.f32.mrb[0].mxu0
        %v2082 = vadd.f32 %v2010, %v2081
        %v2083 = vpop.f32.mrb[0].mxu0
        %2084 = vdwg.mxu0
        %v2085 = vmul.f32 %v2082, 0.5
        %v2086 = vmul.f32 %v2082, 0.044715
        %v2087 = vmul.f32 %v2086, %v2082
        %v2088 = vmul.f32 %v2087, %v2082
        %v2089 = vadd.f32 %v2082, %v2088
        %v2090 = vmul.f32 %v2089, 0.7978846
        %v2091 = vtanh.pop %v2090
        %v2092 = vadd.f32 %v2091, 1.0
        %v2093 = vmul.f32 %v2085, %v2092
        %v2094 = vld [vmem:[%s53] sm:$0xff]
        %v2095 = vld [vmem:[%s53 + $0x8] sm:$0xff]
        %v2096 = vld [vmem:[%s53 + $0x10] sm:$0xff]
        %v2097 = vld [vmem:[%s53 + $0x18] sm:$0xff]
        %v2098 = vld [vmem:[%s53 + $0x20] sm:$0xff]
        %v2099 = vld [vmem:[%s53 + $0x28] sm:$0xff]
        %v2100 = vld [vmem:[%s53 + $0x30] sm:$0xff]
        %v2101 = vld [vmem:[%s53 + $0x38] sm:$0xff]
        %v2103 = vsel %vm1695, %v2093, 0
        %2105 = vmatprep.subr.mxu0 0.0
        %2106 = vmatpush1.msra.mxu0 %v2094
        %2107 = vmatprep.subr.mxu0 0.0
        %2108 = vmatpush1.msra.mxu0 %v2095
        %2109 = vmatprep.subr.mxu0 0.0
        %2110 = vmatpush1.msra.mxu0 %v2096
        %2111 = vmatprep.subr.mxu0 0.0
        %2112 = vmatpush1.msra.mxu0 %v2097
        %2113 = vmatprep.subr.mxu0 0.0
        %2114 = vmatpush1.msra.mxu0 %v2098
        %2115 = vmatprep.subr.mxu0 0.0
        %2116 = vmatpush1.msra.mxu0 %v2099
        %2117 = vmatprep.subr.mxu0 0.0
        %2118 = vmatpush1.msra.mxu0 %v2100
        %2119 = vmatprep.subr.mxu0 0.0
        %2120 = vmatpush1.msra.mxu0 %v2101
        %2121 = vmatprep.subr.mxu0 0.0
        %2122 = vmatpush1.msra.mxu0 0.0
        %2123 = vmatprep.subr.mxu0 0.0
        %2124 = vmatpush1.msra.mxu0 0.0
        %2125 = vmatprep.subr.mxu0 0.0
        %2126 = vmatpush1.msra.mxu0 0.0
        %2127 = vmatprep.subr.mxu0 0.0
        %2128 = vmatpush1.msra.mxu0 0.0
        %2129 = vmatprep.subr.mxu0 0.0
        %2130 = vmatpush1.msra.mxu0 0.0
        %2131 = vmatprep.subr.mxu0 0.0
        %2132 = vmatpush1.msra.mxu0 0.0
        %2133 = vmatprep.subr.mxu0 0.0
        %2134 = vmatpush1.msra.mxu0 0.0
        %2135 = vmatprep.subr.mxu0 0.0
        %2136 = vmatpush1.msra.mxu0 0.0
        %2137 = vmatprep.subr.mxu0 0.0
        %2138 = vmatpush1.msra.mxu0 0.0
        %2139 = vmatprep.subr.mxu0 0.0
        %2140 = vmatpush1.msra.mxu0 0.0
        %2141 = vmatprep.subr.mxu0 0.0
        %2142 = vmatpush1.msra.mxu0 0.0
        %2143 = vmatprep.subr.mxu0 0.0
        %2144 = vmatpush1.msra.mxu0 0.0
        %2145 = vmatprep.subr.mxu0 0.0
        %2146 = vmatpush1.msra.mxu0 0.0
        %2147 = vmatprep.subr.mxu0 0.0
        %2148 = vmatpush1.msra.mxu0 0.0
        %2149 = vmatprep.subr.mxu0 0.0
        %2150 = vmatpush1.msra.mxu0 0.0
        %2151 = vmatprep.subr.mxu0 0.0
        %2152 = vmatpush1.msra.mxu0 0.0
        %2153 = vmatprep.subr.mxu0 0.0
        %2154 = vmatpush1.msra.mxu0 0.0
        %2155 = vmatprep.subr.mxu0 0.0
        %2156 = vmatpush1.msra.mxu0 0.0
        %2157 = vmatprep.subr.mxu0 0.0
        %2158 = vmatpush1.msra.mxu0 0.0
        %2159 = vmatprep.subr.mxu0 0.0
        %2160 = vmatpush1.msra.mxu0 0.0
        %2161 = vmatprep.subr.mxu0 0.0
        %2162 = vmatpush1.msra.mxu0 0.0
        %2163 = vmatprep.subr.mxu0 0.0
        %2164 = vmatpush1.msra.mxu0 0.0
        %2165 = vmatprep.subr.mxu0 0.0
        %2166 = vmatpush1.msra.mxu0 0.0
        %2167 = vmatprep.subr.mxu0 0.0
        %2168 = vmatpush1.msra.mxu0 0.0
        %2169 = vmatprep.mubr.f32.mxu0 0.0
        %2170 = vmatmul.mubr.f32.gmra.mrb[0].mxu0 %v2103
        %v2171 = vpop.f32.mrb[0].mxu0
        %v2172 = vadd.f32 0.0, %v2171
        %v2173 = vpop.f32.mrb[0].mxu0
        %2174 = vdwg.mxu0
        %v2175 = vadd.f32 %v1966, %v2172
        %v2176 = vld [vmem:[%s55] sm:$0x1]
        %v2178 = vlaneseq
        %v2179 = vshrl.u32 %v2178, 7
        %v2180 = vsub.s32 0, %v2179
        %v2181 = vrot.slane %v2176, %v2180
        %v2183 = vadd.f32 %v2175, %v2181
        %2184 = vst.msk [vmem:[%s1003] sm:$0xf] %vm1832, %v2183
        %v2185 = vld [vmem:[#allocation3 + $0x1] sm:$0x1]
        %2186 = vst.msk [vmem:[#allocation4] sm:$0x1] %vm1705, %v2185
        %v2187 = vld [vmem:[#allocation3 + $0x1] sm:$0x1]
        %2189 = vrot.lane.b32.xlu0 %v2187, 120
        %v2190 = vpop.permute.xlu0 %2189
        %2192 = vst.msk [vmem:[#allocation4 + $0x1] sm:$0x1] %vm1705, %v2190
        %v2193 = vld [vmem:[#allocation3 + $0x1] sm:$0x1]
        %2195 = vrot.lane.b32.xlu0 %v2193, 112
        %v2196 = vpop.permute.xlu0 %2195
        %2198 = vst.msk [vmem:[#allocation4 + $0x2] sm:$0x1] %vm1705, %v2196
        %v2199 = vld [vmem:[#allocation3 + $0x1] sm:$0x1]
        %2201 = vrot.lane.b32.xlu0 %v2199, 104
        %v2202 = vpop.permute.xlu0 %2201
        %2204 = vst.msk [vmem:[#allocation4 + $0x3] sm:$0x1] %vm1705, %v2202
        %v2205 = vld [vmem:[#allocation4] sm:$0xf]
        %v2206 = vld [vmem:[#allocation2] sm:$0xff]
        %v2207 = vld [vmem:[#allocation2 + $0x8] sm:$0xff]
        %v2208 = vld [vmem:[#allocation2 + $0x10] sm:$0xff]
        %v2209 = vld [vmem:[#allocation2 + $0x18] sm:$0xff]
        %v2210 = vld [vmem:[#allocation2 + $0x20] sm:$0xff]
        %v2211 = vld [vmem:[#allocation2 + $0x28] sm:$0xff]
        %v2212 = vld [vmem:[#allocation2 + $0x30] sm:$0xff]
        %v2213 = vld [vmem:[#allocation2 + $0x38] sm:$0xff]
        %2222 = vrot.lane.b32.xlu0 %v2206, 120
        %v2223 = vpop.permute.xlu0 %2222
        %2224 = vrot.lane.b32.xlu0 %v2207, 120
        %v2225 = vpop.permute.xlu0 %2224
        %2226 = vrot.lane.b32.xlu0 %v2208, 120
        %v2227 = vpop.permute.xlu0 %2226
        %2228 = vrot.lane.b32.xlu0 %v2209, 120
        %v2229 = vpop.permute.xlu0 %2228
        %2230 = vrot.lane.b32.xlu0 %v2210, 120
        %v2231 = vpop.permute.xlu0 %2230
        %2232 = vrot.lane.b32.xlu0 %v2211, 120
        %v2233 = vpop.permute.xlu0 %2232
        %2234 = vrot.lane.b32.xlu0 %v2212, 120
        %v2235 = vpop.permute.xlu0 %2234
        %2236 = vrot.lane.b32.xlu0 %v2213, 120
        %v2237 = vpop.permute.xlu0 %2236
        %v2239 = vsel %vm1734, %v2205, 0
        %v2241 = vsel %vm1734, %v2223, 0
        %v2243 = vsel %vm1734, %v2225, 0
        %v2245 = vsel %vm1734, %v2227, 0
        %v2247 = vsel %vm1734, %v2229, 0
        %v2249 = vsel %vm1734, %v2231, 0
        %v2251 = vsel %vm1734, %v2233, 0
        %v2253 = vsel %vm1734, %v2235, 0
        %v2255 = vsel %vm1734, %v2237, 0
        %2257 = vmatprep.subr.mxu0 0.0
        %2258 = vmatpush1.xpose.msra.mxu0 %v2241
        %2259 = vmatprep.subr.mxu0 0.0
        %2260 = vmatpush1.xpose.msra.mxu0 %v2243
        %2261 = vmatprep.subr.mxu0 0.0
        %2262 = vmatpush1.xpose.msra.mxu0 %v2245
        %2263 = vmatprep.subr.mxu0 0.0
        %2264 = vmatpush1.xpose.msra.mxu0 %v2247
        %2265 = vmatprep.subr.mxu0 0.0
        %2266 = vmatpush1.xpose.msra.mxu0 %v2249
        %2267 = vmatprep.subr.mxu0 0.0
        %2268 = vmatpush1.xpose.msra.mxu0 %v2251
        %2269 = vmatprep.subr.mxu0 0.0
        %2270 = vmatpush1.xpose.msra.mxu0 %v2253
        %2271 = vmatprep.subr.mxu0 0.0
        %2272 = vmatpush1.xpose.msra.mxu0 %v2255
        %2273 = vmatprep.subr.mxu0 0.0
        %2274 = vmatpush1.xpose.msra.mxu0 0.0
        %2275 = vmatprep.subr.mxu0 0.0
        %2276 = vmatpush1.xpose.msra.mxu0 0.0
        %2277 = vmatprep.subr.mxu0 0.0
        %2278 = vmatpush1.xpose.msra.mxu0 0.0
        %2279 = vmatprep.subr.mxu0 0.0
        %2280 = vmatpush1.xpose.msra.mxu0 0.0
        %2281 = vmatprep.subr.mxu0 0.0
        %2282 = vmatpush1.xpose.msra.mxu0 0.0
        %2283 = vmatprep.subr.mxu0 0.0
        %2284 = vmatpush1.xpose.msra.mxu0 0.0
        %2285 = vmatprep.subr.mxu0 0.0
        %2286 = vmatpush1.xpose.msra.mxu0 0.0
        %2287 = vmatprep.subr.mxu0 0.0
        %2288 = vmatpush1.xpose.msra.mxu0 0.0
        %2289 = vmatprep.subr.mxu0 0.0
        %2290 = vmatpush1.xpose.msra.mxu0 0.0
        %2291 = vmatprep.subr.mxu0 0.0
        %2292 = vmatpush1.xpose.msra.mxu0 0.0
        %2293 = vmatprep.subr.mxu0 0.0
        %2294 = vmatpush1.xpose.msra.mxu0 0.0
        %2295 = vmatprep.subr.mxu0 0.0
        %2296 = vmatpush1.xpose.msra.mxu0 0.0
        %2297 = vmatprep.subr.mxu0 0.0
        %2298 = vmatpush1.xpose.msra.mxu0 0.0
        %2299 = vmatprep.subr.mxu0 0.0
        %2300 = vmatpush1.xpose.msra.mxu0 0.0
        %2301 = vmatprep.subr.mxu0 0.0
        %2302 = vmatpush1.xpose.msra.mxu0 0.0
        %2303 = vmatprep.subr.mxu0 0.0
        %2304 = vmatpush1.xpose.msra.mxu0 0.0
        %2305 = vmatprep.subr.mxu0 0.0
        %2306 = vmatpush1.xpose.msra.mxu0 0.0
        %2307 = vmatprep.subr.mxu0 0.0
        %2308 = vmatpush1.xpose.msra.mxu0 0.0
        %2309 = vmatprep.subr.mxu0 0.0
        %2310 = vmatpush1.xpose.msra.mxu0 0.0
        %2311 = vmatprep.subr.mxu0 0.0
        %2312 = vmatpush1.xpose.msra.mxu0 0.0
        %2313 = vmatprep.subr.mxu0 0.0
        %2314 = vmatpush1.xpose.msra.mxu0 0.0
        %2315 = vmatprep.subr.mxu0 0.0
        %2316 = vmatpush1.xpose.msra.mxu0 0.0
        %2317 = vmatprep.subr.mxu0 0.0
        %2318 = vmatpush1.xpose.msra.mxu0 0.0
        %2319 = vmatprep.subr.mxu0 0.0
        %2320 = vmatpush1.xpose.msra.mxu0 0.0
        %2321 = vmatprep.mubr.f32.mxu0 0.0
        %2322 = vmatmul.mubr.f32.gmra.mrb[0].mxu0 %v2239
        %v2323 = vpop.f32.mrb[0].mxu0
        %v2324 = vadd.f32 0.0, %v2323
        %v2325 = vpop.f32.mrb[0].mxu0
        %2326 = vdwg.mxu0
        %v2327 = vsel %vm1832, %v2324, -inf
        %2328 = vmax.xlane.f32.xlu0 %v2327
        %v2329 = vpop.xlane.xlu0 %2328
        %v2330 = vsub.f32 %v2324, %v2329
        %v2331 = vmul.f32 %v2330, 1.442695
        %v2332 = vpow.pop %v2331
        %v2333 = vsel %vm1832, %v2332, 0.0
        %2334 = vadd.xlane.f32.xlu0 %v2333
        %v2335 = vpop.xlane.xlu0 %2334
        %v2336 = vrcp.pop %v2335
        %v2337 = vmul.f32 %v2332, %v2336
        %2338 = vrot.lane.b32.xlu0 %v2206, 88
        %v2339 = vpop.permute.xlu0 %2338
        %2340 = vrot.lane.b32.xlu0 %v2207, 88
        %v2341 = vpop.permute.xlu0 %2340
        %2342 = vrot.lane.b32.xlu0 %v2208, 88
        %v2343 = vpop.permute.xlu0 %2342
        %2344 = vrot.lane.b32.xlu0 %v2209, 88
        %v2345 = vpop.permute.xlu0 %2344
        %2346 = vrot.lane.b32.xlu0 %v2210, 88
        %v2347 = vpop.permute.xlu0 %2346
        %2348 = vrot.lane.b32.xlu0 %v2211, 88
        %v2349 = vpop.permute.xlu0 %2348
        %2350 = vrot.lane.b32.xlu0 %v2212, 88
        %v2351 = vpop.permute.xlu0 %2350
        %2352 = vrot.lane.b32.xlu0 %v2213, 88
        %v2353 = vpop.permute.xlu0 %2352
        %v2363 = vsel %vm1695, %v2337, 0
        %2365 = vmatprep.subr.mxu0 0.0
        %2366 = vmatpush1.msra.mxu0 %v2339
        %2367 = vmatprep.subr.mxu0 0.0
        %2368 = vmatpush1.msra.mxu0 %v2341
        %2369 = vmatprep.subr.mxu0 0.0
        %2370 = vmatpush1.msra.mxu0 %v2343
        %2371 = vmatprep.subr.mxu0 0.0
        %2372 = vmatpush1.msra.mxu0 %v2345
        %2373 = vmatprep.subr.mxu0 0.0
        %2374 = vmatpush1.msra.mxu0 %v2347
        %2375 = vmatprep.subr.mxu0 0.0
        %2376 = vmatpush1.msra.mxu0 %v2349
        %2377 = vmatprep.subr.mxu0 0.0
        %2378 = vmatpush1.msra.mxu0 %v2351
        %2379 = vmatprep.subr.mxu0 0.0
        %2380 = vmatpush1.msra.mxu0 %v2353
        %2381 = vmatprep.subr.mxu0 0.0
        %2382 = vmatpush1.msra.mxu0 0.0
        %2383 = vmatprep.subr.mxu0 0.0
        %2384 = vmatpush1.msra.mxu0 0.0
        %2385 = vmatprep.subr.mxu0 0.0
        %2386 = vmatpush1.msra.mxu0 0.0
        %2387 = vmatprep.subr.mxu0 0.0
        %2388 = vmatpush1.msra.mxu0 0.0
        %2389 = vmatprep.subr.mxu0 0.0
        %2390 = vmatpush1.msra.mxu0 0.0
        %2391 = vmatprep.subr.mxu0 0.0
        %2392 = vmatpush1.msra.mxu0 0.0
        %2393 = vmatprep.subr.mxu0 0.0
        %2394 = vmatpush1.msra.mxu0 0.0
        %2395 = vmatprep.subr.mxu0 0.0
        %2396 = vmatpush1.msra.mxu0 0.0
        %2397 = vmatprep.subr.mxu0 0.0
        %2398 = vmatpush1.msra.mxu0 0.0
        %2399 = vmatprep.subr.mxu0 0.0
        %2400 = vmatpush1.msra.mxu0 0.0
        %2401 = vmatprep.subr.mxu0 0.0
        %2402 = vmatpush1.msra.mxu0 0.0
        %2403 = vmatprep.subr.mxu0 0.0
        %2404 = vmatpush1.msra.mxu0 0.0
        %2405 = vmatprep.subr.mxu0 0.0
        %2406 = vmatpush1.msra.mxu0 0.0
        %2407 = vmatprep.subr.mxu0 0.0
        %2408 = vmatpush1.msra.mxu0 0.0
        %2409 = vmatprep.subr.mxu0 0.0
        %2410 = vmatpush1.msra.mxu0 0.0
        %2411 = vmatprep.subr.mxu0 0.0
        %2412 = vmatpush1.msra.mxu0 0.0
        %2413 = vmatprep.subr.mxu0 0.0
        %2414 = vmatpush1.msra.mxu0 0.0
        %2415 = vmatprep.subr.mxu0 0.0
        %2416 = vmatpush1.msra.mxu0 0.0
        %2417 = vmatprep.subr.mxu0 0.0
        %2418 = vmatpush1.msra.mxu0 0.0
        %2419 = vmatprep.subr.mxu0 0.0
        %2420 = vmatpush1.msra.mxu0 0.0
        %2421 = vmatprep.subr.mxu0 0.0
        %2422 = vmatpush1.msra.mxu0 0.0
        %2423 = vmatprep.subr.mxu0 0.0
        %2424 = vmatpush1.msra.mxu0 0.0
        %2425 = vmatprep.subr.mxu0 0.0
        %2426 = vmatpush1.msra.mxu0 0.0
        %2427 = vmatprep.subr.mxu0 0.0
        %2428 = vmatpush1.msra.mxu0 0.0
        %2429 = vmatprep.mubr.f32.mxu0 0.0
        %2430 = vmatmul.mubr.f32.gmra.mrb[0].mxu0 %v2363
        %v2431 = vpop.f32.mrb[0].mxu0
        %v2432 = vadd.f32 0.0, %v2431
        %v2433 = vpop.f32.mrb[0].mxu0
        %2434 = vdwg.mxu0
        %2435 = vst.msk [vmem:[#allocation5] sm:$0xf] %vm1941, %v2432
        %v2436 = vld [vmem:[#allocation5] sm:$0x1]
        %2437 = vst.msk [vmem:[#allocation6 + $0x1] sm:$0x1] %vm1705, %v2436
        %v2438 = vld [vmem:[#allocation5 + $0x1] sm:$0x1]
        %2440 = vrot.lane.b32.xlu0 %v2438, 8
        %v2441 = vpop.permute.xlu0 %2440
        %2443 = vst.msk [vmem:[#allocation6 + $0x1] sm:$0x1] %vm1950, %v2441
        %v2444 = vld [vmem:[#allocation5 + $0x2] sm:$0x1]
        %2446 = vrot.lane.b32.xlu0 %v2444, 16
        %v2447 = vpop.permute.xlu0 %2446
        %2449 = vst.msk [vmem:[#allocation6 + $0x1] sm:$0x1] %vm1957, %v2447
        %v2450 = vld [vmem:[#allocation5 + $0x3] sm:$0x1]
        %2452 = vrot.lane.b32.xlu0 %v2450, 24
        %v2453 = vpop.permute.xlu0 %2452
        %2455 = vst.msk [vmem:[#allocation6 + $0x1] sm:$0x1] %vm1964, %v2453
        %v2456 = vadd.f32 %v2324, %v2324
        %v2457 = vld [vmem:[%s45] sm:$0x1]
        %v2458 = vld [vmem:[%s47] sm:$0x1]
        %v2459 = vsel %vm1832, %v2456, 0.0
        %2460 = vadd.xlane.f32.xlu0 %v2459
        %v2461 = vpop.xlane.xlu0 %2460
        %v2462 = vmul.f32 %v2461, %v1972
        %v2463 = vsub.f32 %v2456, %v2462
        %v2464 = vmul.f32 %v2463, %v2463
        %v2465 = vsel %vm1832, %v2464, 0.0
        %2466 = vadd.xlane.f32.xlu0 %v2465
        %v2467 = vpop.xlane.xlu0 %2466
        %v2468 = vmul.f32 %v2467, %v1972
        %v2469 = vadd.f32 %v2468, 1e-05
        %v2470 = vrsqrt.pop %v2469
        %v2471 = vmul.f32 %v2463, %v2470
        %v2473 = vlaneseq
        %v2474 = vshrl.u32 %v2473, 7
        %v2475 = vsub.s32 0, %v2474
        %v2476 = vrot.slane %v2457, %v2475
        %v2478 = vmul.f32 %v2471, %v2476
        %v2480 = vlaneseq
        %v2481 = vshrl.u32 %v2480, 7
        %v2482 = vsub.s32 0, %v2481
        %v2483 = vrot.slane %v2458, %v2482
        %v2485 = vadd.f32 %v2478, %v2483
        %v2486 = vld [vmem:[%s49] sm:$0xff]
        %v2487 = vld [vmem:[%s49 + $0x8] sm:$0xff]
        %v2488 = vld [vmem:[%s49 + $0x10] sm:$0xff]
        %v2489 = vld [vmem:[%s49 + $0x18] sm:$0xff]
        %v2490 = vld [vmem:[%s49 + $0x20] sm:$0xff]
        %v2491 = vld [vmem:[%s49 + $0x28] sm:$0xff]
        %v2492 = vld [vmem:[%s49 + $0x30] sm:$0xff]
        %v2493 = vld [vmem:[%s49 + $0x38] sm:$0xff]
        %v2494 = vld [vmem:[%s51] sm:$0x1]
        %v2496 = vlaneseq
        %v2497 = vshrl.u32 %v2496, 7
        %v2498 = vsub.s32 0, %v2497
        %v2499 = vrot.slane %v2494, %v2498
        %v2502 = vsel %vm1695, %v2485, 0
        %2504 = vmatprep.subr.mxu0 0.0
        %2505 = vmatpush1.msra.mxu0 %v2486
        %2506 = vmatprep.subr.mxu0 0.0
        %2507 = vmatpush1.msra.mxu0 %v2487
        %2508 = vmatprep.subr.mxu0 0.0
        %2509 = vmatpush1.msra.mxu0 %v2488
        %2510 = vmatprep.subr.mxu0 0.0
        %2511 = vmatpush1.msra.mxu0 %v2489
        %2512 = vmatprep.subr.mxu0 0.0
        %2513 = vmatpush1.msra.mxu0 %v2490
        %2514 = vmatprep.subr.mxu0 0.0
        %2515 = vmatpush1.msra.mxu0 %v2491
        %2516 = vmatprep.subr.mxu0 0.0
        %2517 = vmatpush1.msra.mxu0 %v2492
        %2518 = vmatprep.subr.mxu0 0.0
        %2519 = vmatpush1.msra.mxu0 %v2493
        %2520 = vmatprep.subr.mxu0 0.0
        %2521 = vmatpush1.msra.mxu0 0.0
        %2522 = vmatprep.subr.mxu0 0.0
        %2523 = vmatpush1.msra.mxu0 0.0
        %2524 = vmatprep.subr.mxu0 0.0
        %2525 = vmatpush1.msra.mxu0 0.0
        %2526 = vmatprep.subr.mxu0 0.0
        %2527 = vmatpush1.msra.mxu0 0.0
        %2528 = vmatprep.subr.mxu0 0.0
        %2529 = vmatpush1.msra.mxu0 0.0
        %2530 = vmatprep.subr.mxu0 0.0
        %2531 = vmatpush1.msra.mxu0 0.0
        %2532 = vmatprep.subr.mxu0 0.0
        %2533 = vmatpush1.msra.mxu0 0.0
        %2534 = vmatprep.subr.mxu0 0.0
        %2535 = vmatpush1.msra.mxu0 0.0
        %2536 = vmatprep.subr.mxu0 0.0
        %2537 = vmatpush1.msra.mxu0 0.0
        %2538 = vmatprep.subr.mxu0 0.0
        %2539 = vmatpush1.msra.mxu0 0.0
        %2540 = vmatprep.subr.mxu0 0.0
        %2541 = vmatpush1.msra.mxu0 0.0
        %2542 = vmatprep.subr.mxu0 0.0
        %2543 = vmatpush1.msra.mxu0 0.0
        %2544 = vmatprep.subr.mxu0 0.0
        %2545 = vmatpush1.msra.mxu0 0.0
        %2546 = vmatprep.subr.mxu0 0.0
        %2547 = vmatpush1.msra.mxu0 0.0
        %2548 = vmatprep.subr.mxu0 0.0
        %2549 = vmatpush1.msra.mxu0 0.0
        %2550 = vmatprep.subr.mxu0 0.0
        %2551 = vmatpush1.msra.mxu0 0.0
        %2552 = vmatprep.subr.mxu0 0.0
        %2553 = vmatpush1.msra.mxu0 0.0
        %2554 = vmatprep.subr.mxu0 0.0
        %2555 = vmatpush1.msra.mxu0 0.0
        %2556 = vmatprep.subr.mxu0 0.0
        %2557 = vmatpush1.msra.mxu0 0.0
        %2558 = vmatprep.subr.mxu0 0.0
        %2559 = vmatpush1.msra.mxu0 0.0
        %2560 = vmatprep.subr.mxu0 0.0
        %2561 = vmatpush1.msra.mxu0 0.0
        %2562 = vmatprep.subr.mxu0 0.0
        %2563 = vmatpush1.msra.mxu0 0.0
        %2564 = vmatprep.subr.mxu0 0.0
        %2565 = vmatpush1.msra.mxu0 0.0
        %2566 = vmatprep.subr.mxu0 0.0
        %2567 = vmatpush1.msra.mxu0 0.0
        %2568 = vmatprep.mubr.f32.mxu0 0.0
        %2569 = vmatmul.mubr.f32.gmra.mrb[0].mxu0 %v2502
        %v2570 = vpop.f32.mrb[0].mxu0
        %v2571 = vadd.f32 %v2499, %v2570
        %v2572 = vpop.f32.mrb[0].mxu0
        %2573 = vdwg.mxu0
        %v2574 = vmul.f32 %v2571, 0.5
        %v2575 = vmul.f32 %v2571, 0.044715
        %v2576 = vmul.f32 %v2575, %v2571
        %v2577 = vmul.f32 %v2576, %v2571
        %v2578 = vadd.f32 %v2571, %v2577
        %v2579 = vmul.f32 %v2578, 0.7978846
        %v2580 = vtanh.pop %v2579
        %v2581 = vadd.f32 %v2580, 1.0
        %v2582 = vmul.f32 %v2574, %v2581
        %v2583 = vld [vmem:[%s53] sm:$0xff]
        %v2584 = vld [vmem:[%s53 + $0x8] sm:$0xff]
        %v2585 = vld [vmem:[%s53 + $0x10] sm:$0xff]
        %v2586 = vld [vmem:[%s53 + $0x18] sm:$0xff]
        %v2587 = vld [vmem:[%s53 + $0x20] sm:$0xff]
        %v2588 = vld [vmem:[%s53 + $0x28] sm:$0xff]
        %v2589 = vld [vmem:[%s53 + $0x30] sm:$0xff]
        %v2590 = vld [vmem:[%s53 + $0x38] sm:$0xff]
        %v2592 = vsel %vm1695, %v2582, 0
        %2594 = vmatprep.subr.mxu0 0.0
        %2595 = vmatpush1.msra.mxu0 %v2583
        %2596 = vmatprep.subr.mxu0 0.0
        %2597 = vmatpush1.msra.mxu0 %v2584
        %2598 = vmatprep.subr.mxu0 0.0
        %2599 = vmatpush1.msra.mxu0 %v2585
        %2600 = vmatprep.subr.mxu0 0.0
        %2601 = vmatpush1.msra.mxu0 %v2586
        %2602 = vmatprep.subr.mxu0 0.0
        %2603 = vmatpush1.msra.mxu0 %v2587
        %2604 = vmatprep.subr.mxu0 0.0
        %2605 = vmatpush1.msra.mxu0 %v2588
        %2606 = vmatprep.subr.mxu0 0.0
        %2607 = vmatpush1.msra.mxu0 %v2589
        %2608 = vmatprep.subr.mxu0 0.0
        %2609 = vmatpush1.msra.mxu0 %v2590
        %2610 = vmatprep.subr.mxu0 0.0
        %2611 = vmatpush1.msra.mxu0 0.0
        %2612 = vmatprep.subr.mxu0 0.0
        %2613 = vmatpush1.msra.mxu0 0.0
        %2614 = vmatprep.subr.mxu0 0.0
        %2615 = vmatpush1.msra.mxu0 0.0
        %2616 = vmatprep.subr.mxu0 0.0
        %2617 = vmatpush1.msra.mxu0 0.0
        %2618 = vmatprep.subr.mxu0 0.0
        %2619 = vmatpush1.msra.mxu0 0.0
        %2620 = vmatprep.subr.mxu0 0.0
        %2621 = vmatpush1.msra.mxu0 0.0
        %2622 = vmatprep.subr.mxu0 0.0
        %2623 = vmatpush1.msra.mxu0 0.0
        %2624 = vmatprep.subr.mxu0 0.0
        %2625 = vmatpush1.msra.mxu0 0.0
        %2626 = vmatprep.subr.mxu0 0.0
        %2627 = vmatpush1.msra.mxu0 0.0
        %2628 = vmatprep.subr.mxu0 0.0
        %2629 = vmatpush1.msra.mxu0 0.0
        %2630 = vmatprep.subr.mxu0 0.0
        %2631 = vmatpush1.msra.mxu0 0.0
        %2632 = vmatprep.subr.mxu0 0.0
        %2633 = vmatpush1.msra.mxu0 0.0
        %2634 = vmatprep.subr.mxu0 0.0
        %2635 = vmatpush1.msra.mxu0 0.0
        %2636 = vmatprep.subr.mxu0 0.0
        %2637 = vmatpush1.msra.mxu0 0.0
        %2638 = vmatprep.subr.mxu0 0.0
        %2639 = vmatpush1.msra.mxu0 0.0
        %2640 = vmatprep.subr.mxu0 0.0
        %2641 = vmatpush1.msra.mxu0 0.0
        %2642 = vmatprep.subr.mxu0 0.0
        %2643 = vmatpush1.msra.mxu0 0.0
        %2644 = vmatprep.subr.mxu0 0.0
        %2645 = vmatpush1.msra.mxu0 0.0
        %2646 = vmatprep.subr.mxu0 0.0
        %2647 = vmatpush1.msra.mxu0 0.0
        %2648 = vmatprep.subr.mxu0 0.0
        %2649 = vmatpush1.msra.mxu0 0.0
        %2650 = vmatprep.subr.mxu0 0.0
        %2651 = vmatpush1.msra.mxu0 0.0
        %2652 = vmatprep.subr.mxu0 0.0
        %2653 = vmatpush1.msra.mxu0 0.0
        %2654 = vmatprep.subr.mxu0 0.0
        %2655 = vmatpush1.msra.mxu0 0.0
        %2656 = vmatprep.subr.mxu0 0.0
        %2657 = vmatpush1.msra.mxu0 0.0
        %2658 = vmatprep.mubr.f32.mxu0 0.0
        %2659 = vmatmul.mubr.f32.gmra.mrb[0].mxu0 %v2592
        %v2660 = vpop.f32.mrb[0].mxu0
        %v2661 = vadd.f32 0.0, %v2660
        %v2662 = vpop.f32.mrb[0].mxu0
        %2663 = vdwg.mxu0
        %v2664 = vadd.f32 %v2456, %v2661
        %v2665 = vld [vmem:[%s55] sm:$0x1]
        %v2667 = vlaneseq
        %v2668 = vshrl.u32 %v2667, 7
        %v2669 = vsub.s32 0, %v2668
        %v2670 = vrot.slane %v2665, %v2669
        %v2672 = vadd.f32 %v2664, %v2670
        %s2673 = scalar_lea.vmem %s1003, 4 [#allocation9]
        %2674 = vst.msk [vmem:[%s2673] sm:$0xf] %vm1832, %v2672
        %v2675 = vld [vmem:[#allocation3 + $0x2] sm:$0x1]
        %2676 = vst.msk [vmem:[#allocation4] sm:$0x1] %vm1705, %v2675
        %v2677 = vld [vmem:[#allocation3 + $0x2] sm:$0x1]
        %2679 = vrot.lane.b32.xlu0 %v2677, 120
        %v2680 = vpop.permute.xlu0 %2679
        %2682 = vst.msk [vmem:[#allocation4 + $0x1] sm:$0x1] %vm1705, %v2680
        %v2683 = vld [vmem:[#allocation3 + $0x2] sm:$0x1]
        %2685 = vrot.lane.b32.xlu0 %v2683, 112
        %v2686 = vpop.permute.xlu0 %2685
        %2688 = vst.msk [vmem:[#allocation4 + $0x2] sm:$0x1] %vm1705, %v2686
        %v2689 = vld [vmem:[#allocation3 + $0x2] sm:$0x1]
        %2691 = vrot.lane.b32.xlu0 %v2689, 104
        %v2692 = vpop.permute.xlu0 %2691
        %2694 = vst.msk [vmem:[#allocation4 + $0x3] sm:$0x1] %vm1705, %v2692
        %v2695 = vld [vmem:[#allocation4] sm:$0xf]
        %v2696 = vld [vmem:[#allocation2] sm:$0xff]
        %v2697 = vld [vmem:[#allocation2 + $0x8] sm:$0xff]
        %v2698 = vld [vmem:[#allocation2 + $0x10] sm:$0xff]
        %v2699 = vld [vmem:[#allocation2 + $0x18] sm:$0xff]
        %v2700 = vld [vmem:[#allocation2 + $0x20] sm:$0xff]
        %v2701 = vld [vmem:[#allocation2 + $0x28] sm:$0xff]
        %v2702 = vld [vmem:[#allocation2 + $0x30] sm:$0xff]
        %v2703 = vld [vmem:[#allocation2 + $0x38] sm:$0xff]
        %2712 = vrot.lane.b32.xlu0 %v2696, 112
        %v2713 = vpop.permute.xlu0 %2712
        %2714 = vrot.lane.b32.xlu0 %v2697, 112
        %v2715 = vpop.permute.xlu0 %2714
        %2716 = vrot.lane.b32.xlu0 %v2698, 112
        %v2717 = vpop.permute.xlu0 %2716
        %2718 = vrot.lane.b32.xlu0 %v2699, 112
        %v2719 = vpop.permute.xlu0 %2718
        %2720 = vrot.lane.b32.xlu0 %v2700, 112
        %v2721 = vpop.permute.xlu0 %2720
        %2722 = vrot.lane.b32.xlu0 %v2701, 112
        %v2723 = vpop.permute.xlu0 %2722
        %2724 = vrot.lane.b32.xlu0 %v2702, 112
        %v2725 = vpop.permute.xlu0 %2724
        %2726 = vrot.lane.b32.xlu0 %v2703, 112
        %v2727 = vpop.permute.xlu0 %2726
        %v2729 = vsel %vm1734, %v2695, 0
        %v2731 = vsel %vm1734, %v2713, 0
        %v2733 = vsel %vm1734, %v2715, 0
        %v2735 = vsel %vm1734, %v2717, 0
        %v2737 = vsel %vm1734, %v2719, 0
        %v2739 = vsel %vm1734, %v2721, 0
        %v2741 = vsel %vm1734, %v2723, 0
        %v2743 = vsel %vm1734, %v2725, 0
        %v2745 = vsel %vm1734, %v2727, 0
        %2747 = vmatprep.subr.mxu0 0.0
        %2748 = vmatpush1.xpose.msra.mxu0 %v2731
        %2749 = vmatprep.subr.mxu0 0.0
        %2750 = vmatpush1.xpose.msra.mxu0 %v2733
        %2751 = vmatprep.subr.mxu0 0.0
        %2752 = vmatpush1.xpose.msra.mxu0 %v2735
        %2753 = vmatprep.subr.mxu0 0.0
        %2754 = vmatpush1.xpose.msra.mxu0 %v2737
        %2755 = vmatprep.subr.mxu0 0.0
        %2756 = vmatpush1.xpose.msra.mxu0 %v2739
        %2757 = vmatprep.subr.mxu0 0.0
        %2758 = vmatpush1.xpose.msra.mxu0 %v2741
        %2759 = vmatprep.subr.mxu0 0.0
        %2760 = vmatpush1.xpose.msra.mxu0 %v2743
        %2761 = vmatprep.subr.mxu0 0.0
        %2762 = vmatpush1.xpose.msra.mxu0 %v2745
        %2763 = vmatprep.subr.mxu0 0.0
        %2764 = vmatpush1.xpose.msra.mxu0 0.0
        %2765 = vmatprep.subr.mxu0 0.0
        %2766 = vmatpush1.xpose.msra.mxu0 0.0
        %2767 = vmatprep.subr.mxu0 0.0
        %2768 = vmatpush1.xpose.msra.mxu0 0.0
        %2769 = vmatprep.subr.mxu0 0.0
        %2770 = vmatpush1.xpose.msra.mxu0 0.0
        %2771 = vmatprep.subr.mxu0 0.0
        %2772 = vmatpush1.xpose.msra.mxu0 0.0
        %2773 = vmatprep.subr.mxu0 0.0
        %2774 = vmatpush1.xpose.msra.mxu0 0.0
        %2775 = vmatprep.subr.mxu0 0.0
        %2776 = vmatpush1.xpose.msra.mxu0 0.0
        %2777 = vmatprep.subr.mxu0 0.0
        %2778 = vmatpush1.xpose.msra.mxu0 0.0
        %2779 = vmatprep.subr.mxu0 0.0
        %2780 = vmatpush1.xpose.msra.mxu0 0.0
        %2781 = vmatprep.subr.mxu0 0.0
        %2782 = vmatpush1.xpose.msra.mxu0 0.0
        %2783 = vmatprep.subr.mxu0 0.0
        %2784 = vmatpush1.xpose.msra.mxu0 0.0
        %2785 = vmatprep.subr.mxu0 0.0
        %2786 = vmatpush1.xpose.msra.mxu0 0.0
        %2787 = vmatprep.subr.mxu0 0.0
        %2788 = vmatpush1.xpose.msra.mxu0 0.0
        %2789 = vmatprep.subr.mxu0 0.0
        %2790 = vmatpush1.xpose.msra.mxu0 0.0
        %2791 = vmatprep.subr.mxu0 0.0
        %2792 = vmatpush1.xpose.msra.mxu0 0.0
        %2793 = vmatprep.subr.mxu0 0.0
        %2794 = vmatpush1.xpose.msra.mxu0 0.0
        %2795 = vmatprep.subr.mxu0 0.0
        %2796 = vmatpush1.xpose.msra.mxu0 0.0
        %2797 = vmatprep.subr.mxu0 0.0
        %2798 = vmatpush1.xpose.msra.mxu0 0.0
        %2799 = vmatprep.subr.mxu0 0.0
        %2800 = vmatpush1.xpose.msra.mxu0 0.0
        %2801 = vmatprep.subr.mxu0 0.0
        %2802 = vmatpush1.xpose.msra.mxu0 0.0
        %2803 = vmatprep.subr.mxu0 0.0
        %2804 = vmatpush1.xpose.msra.mxu0 0.0
        %2805 = vmatprep.subr.mxu0 0.0
        %2806 = vmatpush1.xpose.msra.mxu0 0.0
        %2807 = vmatprep.subr.mxu0 0.0
        %2808 = vmatpush1.xpose.msra.mxu0 0.0
        %2809 = vmatprep.subr.mxu0 0.0
        %2810 = vmatpush1.xpose.msra.mxu0 0.0
        %2811 = vmatprep.mubr.f32.mxu0 0.0
        %2812 = vmatmul.mubr.f32.gmra.mrb[0].mxu0 %v2729
        %v2813 = vpop.f32.mrb[0].mxu0
        %v2814 = vadd.f32 0.0, %v2813
        %v2815 = vpop.f32.mrb[0].mxu0
        %2816 = vdwg.mxu0
        %v2817 = vsel %vm1832, %v2814, -inf
        %2818 = vmax.xlane.f32.xlu0 %v2817
        %v2819 = vpop.xlane.xlu0 %2818
        %v2820 = vsub.f32 %v2814, %v2819
        %v2821 = vmul.f32 %v2820, 1.442695
        %v2822 = vpow.pop %v2821
        %v2823 = vsel %vm1832, %v2822, 0.0
        %2824 = vadd.xlane.f32.xlu0 %v2823
        %v2825 = vpop.xlane.xlu0 %2824
        %v2826 = vrcp.pop %v2825
        %v2827 = vmul.f32 %v2822, %v2826
        %2828 = vrot.lane.b32.xlu0 %v2696, 80
        %v2829 = vpop.permute.xlu0 %2828
        %2830 = vrot.lane.b32.xlu0 %v2697, 80
        %v2831 = vpop.permute.xlu0 %2830
        %2832 = vrot.lane.b32.xlu0 %v2698, 80
        %v2833 = vpop.permute.xlu0 %2832
        %2834 = vrot.lane.b32.xlu0 %v2699, 80
        %v2835 = vpop.permute.xlu0 %2834
        %2836 = vrot.lane.b32.xlu0 %v2700, 80
        %v2837 = vpop.permute.xlu0 %2836
        %2838 = vrot.lane.b32.xlu0 %v2701, 80
        %v2839 = vpop.permute.xlu0 %2838
        %2840 = vrot.lane.b32.xlu0 %v2702, 80
        %v2841 = vpop.permute.xlu0 %2840
        %2842 = vrot.lane.b32.xlu0 %v2703, 80
        %v2843 = vpop.permute.xlu0 %2842
        %v2853 = vsel %vm1695, %v2827, 0
        %2855 = vmatprep.subr.mxu0 0.0
        %2856 = vmatpush1.msra.mxu0 %v2829
        %2857 = vmatprep.subr.mxu0 0.0
        %2858 = vmatpush1.msra.mxu0 %v2831
        %2859 = vmatprep.subr.mxu0 0.0
        %2860 = vmatpush1.msra.mxu0 %v2833
        %2861 = vmatprep.subr.mxu0 0.0
        %2862 = vmatpush1.msra.mxu0 %v2835
        %2863 = vmatprep.subr.mxu0 0.0
        %2864 = vmatpush1.msra.mxu0 %v2837
        %2865 = vmatprep.subr.mxu0 0.0
        %2866 = vmatpush1.msra.mxu0 %v2839
        %2867 = vmatprep.subr.mxu0 0.0
        %2868 = vmatpush1.msra.mxu0 %v2841
        %2869 = vmatprep.subr.mxu0 0.0
        %2870 = vmatpush1.msra.mxu0 %v2843
        %2871 = vmatprep.subr.mxu0 0.0
        %2872 = vmatpush1.msra.mxu0 0.0
        %2873 = vmatprep.subr.mxu0 0.0
        %2874 = vmatpush1.msra.mxu0 0.0
        %2875 = vmatprep.subr.mxu0 0.0
        %2876 = vmatpush1.msra.mxu0 0.0
        %2877 = vmatprep.subr.mxu0 0.0
        %2878 = vmatpush1.msra.mxu0 0.0
        %2879 = vmatprep.subr.mxu0 0.0
        %2880 = vmatpush1.msra.mxu0 0.0
        %2881 = vmatprep.subr.mxu0 0.0
        %2882 = vmatpush1.msra.mxu0 0.0
        %2883 = vmatprep.subr.mxu0 0.0
        %2884 = vmatpush1.msra.mxu0 0.0
        %2885 = vmatprep.subr.mxu0 0.0
        %2886 = vmatpush1.msra.mxu0 0.0
        %2887 = vmatprep.subr.mxu0 0.0
        %2888 = vmatpush1.msra.mxu0 0.0
        %2889 = vmatprep.subr.mxu0 0.0
        %2890 = vmatpush1.msra.mxu0 0.0
        %2891 = vmatprep.subr.mxu0 0.0
        %2892 = vmatpush1.msra.mxu0 0.0
        %2893 = vmatprep.subr.mxu0 0.0
        %2894 = vmatpush1.msra.mxu0 0.0
        %2895 = vmatprep.subr.mxu0 0.0
        %2896 = vmatpush1.msra.mxu0 0.0
        %2897 = vmatprep.subr.mxu0 0.0
        %2898 = vmatpush1.msra.mxu0 0.0
        %2899 = vmatprep.subr.mxu0 0.0
        %2900 = vmatpush1.msra.mxu0 0.0
        %2901 = vmatprep.subr.mxu0 0.0
        %2902 = vmatpush1.msra.mxu0 0.0
        %2903 = vmatprep.subr.mxu0 0.0
        %2904 = vmatpush1.msra.mxu0 0.0
        %2905 = vmatprep.subr.mxu0 0.0
        %2906 = vmatpush1.msra.mxu0 0.0
        %2907 = vmatprep.subr.mxu0 0.0
        %2908 = vmatpush1.msra.mxu0 0.0
        %2909 = vmatprep.subr.mxu0 0.0
        %2910 = vmatpush1.msra.mxu0 0.0
        %2911 = vmatprep.subr.mxu0 0.0
        %2912 = vmatpush1.msra.mxu0 0.0
        %2913 = vmatprep.subr.mxu0 0.0
        %2914 = vmatpush1.msra.mxu0 0.0
        %2915 = vmatprep.subr.mxu0 0.0
        %2916 = vmatpush1.msra.mxu0 0.0
        %2917 = vmatprep.subr.mxu0 0.0
        %2918 = vmatpush1.msra.mxu0 0.0
        %2919 = vmatprep.mubr.f32.mxu0 0.0
        %2920 = vmatmul.mubr.f32.gmra.mrb[0].mxu0 %v2853
        %v2921 = vpop.f32.mrb[0].mxu0
        %v2922 = vadd.f32 0.0, %v2921
        %v2923 = vpop.f32.mrb[0].mxu0
        %2924 = vdwg.mxu0
        %2925 = vst.msk [vmem:[#allocation5] sm:$0xf] %vm1941, %v2922
        %v2926 = vld [vmem:[#allocation5] sm:$0x1]
        %2927 = vst.msk [vmem:[#allocation6 + $0x2] sm:$0x1] %vm1705, %v2926
        %v2928 = vld [vmem:[#allocation5 + $0x1] sm:$0x1]
        %2930 = vrot.lane.b32.xlu0 %v2928, 8
        %v2931 = vpop.permute.xlu0 %2930
        %2933 = vst.msk [vmem:[#allocation6 + $0x2] sm:$0x1] %vm1950, %v2931
        %v2934 = vld [vmem:[#allocation5 + $0x2] sm:$0x1]
        %2936 = vrot.lane.b32.xlu0 %v2934, 16
        %v2937 = vpop.permute.xlu0 %2936
        %2939 = vst.msk [vmem:[#allocation6 + $0x2] sm:$0x1] %vm1957, %v2937
        %v2940 = vld [vmem:[#allocation5 + $0x3] sm:$0x1]
        %2942 = vrot.lane.b32.xlu0 %v2940, 24
        %v2943 = vpop.permute.xlu0 %2942
        %2945 = vst.msk [vmem:[#allocation6 + $0x2] sm:$0x1] %vm1964, %v2943
        %v2946 = vadd.f32 %v2814, %v2814
        %v2947 = vld [vmem:[%s45] sm:$0x1]
        %v2948 = vld [vmem:[%s47] sm:$0x1]
        %v2949 = vsel %vm1832, %v2946, 0.0
        %2950 = vadd.xlane.f32.xlu0 %v2949
        %v2951 = vpop.xlane.xlu0 %2950
        %v2952 = vmul.f32 %v2951, %v1972
        %v2953 = vsub.f32 %v2946, %v2952
        %v2954 = vmul.f32 %v2953, %v2953
        %v2955 = vsel %vm1832, %v2954, 0.0
        %2956 = vadd.xlane.f32.xlu0 %v2955
        %v2957 = vpop.xlane.xlu0 %2956
        %v2958 = vmul.f32 %v2957, %v1972
        %v2959 = vadd.f32 %v2958, 1e-05
        %v2960 = vrsqrt.pop %v2959
        %v2961 = vmul.f32 %v2953, %v2960
        %v2963 = vlaneseq
        %v2964 = vshrl.u32 %v2963, 7
        %v2965 = vsub.s32 0, %v2964
        %v2966 = vrot.slane %v2947, %v2965
        %v2968 = vmul.f32 %v2961, %v2966
        %v2970 = vlaneseq
        %v2971 = vshrl.u32 %v2970, 7
        %v2972 = vsub.s32 0, %v2971
        %v2973 = vrot.slane %v2948, %v2972
        %v2975 = vadd.f32 %v2968, %v2973
        %v2976 = vld [vmem:[%s49] sm:$0xff]
        %v2977 = vld [vmem:[%s49 + $0x8] sm:$0xff]
        %v2978 = vld [vmem:[%s49 + $0x10] sm:$0xff]
        %v2979 = vld [vmem:[%s49 + $0x18] sm:$0xff]
        %v2980 = vld [vmem:[%s49 + $0x20] sm:$0xff]
        %v2981 = vld [vmem:[%s49 + $0x28] sm:$0xff]
        %v2982 = vld [vmem:[%s49 + $0x30] sm:$0xff]
        %v2983 = vld [vmem:[%s49 + $0x38] sm:$0xff]
        %v2984 = vld [vmem:[%s51] sm:$0x1]
        %v2986 = vlaneseq
        %v2987 = vshrl.u32 %v2986, 7
        %v2988 = vsub.s32 0, %v2987
        %v2989 = vrot.slane %v2984, %v2988
        %v2992 = vsel %vm1695, %v2975, 0
        %2994 = vmatprep.subr.mxu0 0.0
        %2995 = vmatpush1.msra.mxu0 %v2976
        %2996 = vmatprep.subr.mxu0 0.0
        %2997 = vmatpush1.msra.mxu0 %v2977
        %2998 = vmatprep.subr.mxu0 0.0
        %2999 = vmatpush1.msra.mxu0 %v2978
        %3000 = vmatprep.subr.mxu0 0.0
        %3001 = vmatpush1.msra.mxu0 %v2979
        %3002 = vmatprep.subr.mxu0 0.0
        %3003 = vmatpush1.msra.mxu0 %v2980
        %3004 = vmatprep.subr.mxu0 0.0
        %3005 = vmatpush1.msra.mxu0 %v2981
        %3006 = vmatprep.subr.mxu0 0.0
        %3007 = vmatpush1.msra.mxu0 %v2982
        %3008 = vmatprep.subr.mxu0 0.0
        %3009 = vmatpush1.msra.mxu0 %v2983
        %3010 = vmatprep.subr.mxu0 0.0
        %3011 = vmatpush1.msra.mxu0 0.0
        %3012 = vmatprep.subr.mxu0 0.0
        %3013 = vmatpush1.msra.mxu0 0.0
        %3014 = vmatprep.subr.mxu0 0.0
        %3015 = vmatpush1.msra.mxu0 0.0
        %3016 = vmatprep.subr.mxu0 0.0
        %3017 = vmatpush1.msra.mxu0 0.0
        %3018 = vmatprep.subr.mxu0 0.0
        %3019 = vmatpush1.msra.mxu0 0.0
        %3020 = vmatprep.subr.mxu0 0.0
        %3021 = vmatpush1.msra.mxu0 0.0
        %3022 = vmatprep.subr.mxu0 0.0
        %3023 = vmatpush1.msra.mxu0 0.0
        %3024 = vmatprep.subr.mxu0 0.0
        %3025 = vmatpush1.msra.mxu0 0.0
        %3026 = vmatprep.subr.mxu0 0.0
        %3027 = vmatpush1.msra.mxu0 0.0
        %3028 = vmatprep.subr.mxu0 0.0
        %3029 = vmatpush1.msra.mxu0 0.0
        %3030 = vmatprep.subr.mxu0 0.0
        %3031 = vmatpush1.msra.mxu0 0.0
        %3032 = vmatprep.subr.mxu0 0.0
        %3033 = vmatpush1.msra.mxu0 0.0
        %3034 = vmatprep.subr.mxu0 0.0
        %3035 = vmatpush1.msra.mxu0 0.0
        %3036 = vmatprep.subr.mxu0 0.0
        %3037 = vmatpush1.msra.mxu0 0.0
        %3038 = vmatprep.subr.mxu0 0.0
        %3039 = vmatpush1.msra.mxu0 0.0
        %3040 = vmatprep.subr.mxu0 0.0
        %3041 = vmatpush1.msra.mxu0 0.0
        %3042 = vmatprep.subr.mxu0 0.0
        %3043 = vmatpush1.msra.mxu0 0.0
        %3044 = vmatprep.subr.mxu0 0.0
        %3045 = vmatpush1.msra.mxu0 0.0
        %3046 = vmatprep.subr.mxu0 0.0
        %3047 = vmatpush1.msra.mxu0 0.0
        %3048 = vmatprep.subr.mxu0 0.0
        %3049 = vmatpush1.msra.mxu0 0.0
        %3050 = vmatprep.subr.mxu0 0.0
        %3051 = vmatpush1.msra.mxu0 0.0
        %3052 = vmatprep.subr.mxu0 0.0
        %3053 = vmatpush1.msra.mxu0 0.0
        %3054 = vmatprep.subr.mxu0 0.0
        %3055 = vmatpush1.msra.mxu0 0.0
        %3056 = vmatprep.subr.mxu0 0.0
        %3057 = vmatpush1.msra.mxu0 0.0
        %3058 = vmatprep.mubr.f32.mxu0 0.0
        %3059 = vmatmul.mubr.f32.gmra.mrb[0].mxu0 %v2992
        %v3060 = vpop.f32.mrb[0].mxu0
        %v3061 = vadd.f32 %v2989, %v3060
        %v3062 = vpop.f32.mrb[0].mxu0
        %3063 = vdwg.mxu0
        %v3064 = vmul.f32 %v3061, 0.5
        %v3065 = vmul.f32 %v3061, 0.044715
        %v3066 = vmul.f32 %v3065, %v3061
        %v3067 = vmul.f32 %v3066, %v3061
        %v3068 = vadd.f32 %v3061, %v3067
        %v3069 = vmul.f32 %v3068, 0.7978846
        %v3070 = vtanh.pop %v3069
        %v3071 = vadd.f32 %v3070, 1.0
        %v3072 = vmul.f32 %v3064, %v3071
        %v3073 = vld [vmem:[%s53] sm:$0xff]
        %v3074 = vld [vmem:[%s53 + $0x8] sm:$0xff]
        %v3075 = vld [vmem:[%s53 + $0x10] sm:$0xff]
        %v3076 = vld [vmem:[%s53 + $0x18] sm:$0xff]
        %v3077 = vld [vmem:[%s53 + $0x20] sm:$0xff]
        %v3078 = vld [vmem:[%s53 + $0x28] sm:$0xff]
        %v3079 = vld [vmem:[%s53 + $0x30] sm:$0xff]
        %v3080 = vld [vmem:[%s53 + $0x38] sm:$0xff]
        %v3082 = vsel %vm1695, %v3072, 0
        %3084 = vmatprep.subr.mxu0 0.0
        %3085 = vmatpush1.msra.mxu0 %v3073
        %3086 = vmatprep.subr.mxu0 0.0
        %3087 = vmatpush1.msra.mxu0 %v3074
        %3088 = vmatprep.subr.mxu0 0.0
        %3089 = vmatpush1.msra.mxu0 %v3075
        %3090 = vmatprep.subr.mxu0 0.0
        %3091 = vmatpush1.msra.mxu0 %v3076
        %3092 = vmatprep.subr.mxu0 0.0
        %3093 = vmatpush1.msra.mxu0 %v3077
        %3094 = vmatprep.subr.mxu0 0.0
        %3095 = vmatpush1.msra.mxu0 %v3078
        %3096 = vmatprep.subr.mxu0 0.0
        %3097 = vmatpush1.msra.mxu0 %v3079
        %3098 = vmatprep.subr.mxu0 0.0
        %3099 = vmatpush1.msra.mxu0 %v3080
        %3100 = vmatprep.subr.mxu0 0.0
        %3101 = vmatpush1.msra.mxu0 0.0
        %3102 = vmatprep.subr.mxu0 0.0
        %3103 = vmatpush1.msra.mxu0 0.0
        %3104 = vmatprep.subr.mxu0 0.0
        %3105 = vmatpush1.msra.mxu0 0.0
        %3106 = vmatprep.subr.mxu0 0.0
        %3107 = vmatpush1.msra.mxu0 0.0
        %3108 = vmatprep.subr.mxu0 0.0
        %3109 = vmatpush1.msra.mxu0 0.0
        %3110 = vmatprep.subr.mxu0 0.0
        %3111 = vmatpush1.msra.mxu0 0.0
        %3112 = vmatprep.subr.mxu0 0.0
        %3113 = vmatpush1.msra.mxu0 0.0
        %3114 = vmatprep.subr.mxu0 0.0
        %3115 = vmatpush1.msra.mxu0 0.0
        %3116 = vmatprep.subr.mxu0 0.0
        %3117 = vmatpush1.msra.mxu0 0.0
        %3118 = vmatprep.subr.mxu0 0.0
        %3119 = vmatpush1.msra.mxu0 0.0
        %3120 = vmatprep.subr.mxu0 0.0
        %3121 = vmatpush1.msra.mxu0 0.0
        %3122 = vmatprep.subr.mxu0 0.0
        %3123 = vmatpush1.msra.mxu0 0.0
        %3124 = vmatprep.subr.mxu0 0.0
        %3125 = vmatpush1.msra.mxu0 0.0
        %3126 = vmatprep.subr.mxu0 0.0
        %3127 = vmatpush1.msra.mxu0 0.0
        %3128 = vmatprep.subr.mxu0 0.0
        %3129 = vmatpush1.msra.mxu0 0.0
        %3130 = vmatprep.subr.mxu0 0.0
        %3131 = vmatpush1.msra.mxu0 0.0
        %3132 = vmatprep.subr.mxu0 0.0
        %3133 = vmatpush1.msra.mxu0 0.0
        %3134 = vmatprep.subr.mxu0 0.0
        %3135 = vmatpush1.msra.mxu0 0.0
        %3136 = vmatprep.subr.mxu0 0.0
        %3137 = vmatpush1.msra.mxu0 0.0
        %3138 = vmatprep.subr.mxu0 0.0
        %3139 = vmatpush1.msra.mxu0 0.0
        %3140 = vmatprep.subr.mxu0 0.0
        %3141 = vmatpush1.msra.mxu0 0.0
        %3142 = vmatprep.subr.mxu0 0.0
        %3143 = vmatpush1.msra.mxu0 0.0
        %3144 = vmatprep.subr.mxu0 0.0
        %3145 = vmatpush1.msra.mxu0 0.0
        %3146 = vmatprep.subr.mxu0 0.0
        %3147 = vmatpush1.msra.mxu0 0.0
        %3148 = vmatprep.mubr.f32.mxu0 0.0
        %3149 = vmatmul.mubr.f32.gmra.mrb[0].mxu0 %v3082
        %v3150 = vpop.f32.mrb[0].mxu0
        %v3151 = vadd.f32 0.0, %v3150
        %v3152 = vpop.f32.mrb[0].mxu0
        %3153 = vdwg.mxu0
        %v3154 = vadd.f32 %v2946, %v3151
        %v3155 = vld [vmem:[%s55] sm:$0x1]
        %v3157 = vlaneseq
        %v3158 = vshrl.u32 %v3157, 7
        %v3159 = vsub.s32 0, %v3158
        %v3160 = vrot.slane %v3155, %v3159
        %v3162 = vadd.f32 %v3154, %v3160
        %s3163 = scalar_lea.vmem %s1003, 8 [#allocation9]
        %3164 = vst.msk [vmem:[%s3163] sm:$0xf] %vm1832, %v3162
        %v3165 = vld [vmem:[#allocation3 + $0x3] sm:$0x1]
        %3166 = vst.msk [vmem:[#allocation4] sm:$0x1] %vm1705, %v3165
        %v3167 = vld [vmem:[#allocation3 + $0x3] sm:$0x1]
        %3169 = vrot.lane.b32.xlu0 %v3167, 120
        %v3170 = vpop.permute.xlu0 %3169
        %3172 = vst.msk [vmem:[#allocation4 + $0x1] sm:$0x1] %vm1705, %v3170
        %v3173 = vld [vmem:[#allocation3 + $0x3] sm:$0x1]
        %3175 = vrot.lane.b32.xlu0 %v3173, 112
        %v3176 = vpop.permute.xlu0 %3175
        %3178 = vst.msk [vmem:[#allocation4 + $0x2] sm:$0x1] %vm1705, %v3176
        %v3179 = vld [vmem:[#allocation3 + $0x3] sm:$0x1]
        %3181 = vrot.lane.b32.xlu0 %v3179, 104
        %v3182 = vpop.permute.xlu0 %3181
        %3184 = vst.msk [vmem:[#allocation4 + $0x3] sm:$0x1] %vm1705, %v3182
        %v3185 = vld [vmem:[#allocation4] sm:$0xf]
        %v3186 = vld [vmem:[#allocation2] sm:$0xff]
        %v3187 = vld [vmem:[#allocation2 + $0x8] sm:$0xff]
        %v3188 = vld [vmem:[#allocation2 + $0x10] sm:$0xff]
        %v3189 = vld [vmem:[#allocation2 + $0x18] sm:$0xff]
        %v3190 = vld [vmem:[#allocation2 + $0x20] sm:$0xff]
        %v3191 = vld [vmem:[#allocation2 + $0x28] sm:$0xff]
        %v3192 = vld [vmem:[#allocation2 + $0x30] sm:$0xff]
        %v3193 = vld [vmem:[#allocation2 + $0x38] sm:$0xff]
        %3202 = vrot.lane.b32.xlu0 %v3186, 104
        %v3203 = vpop.permute.xlu0 %3202
        %3204 = vrot.lane.b32.xlu0 %v3187, 104
        %v3205 = vpop.permute.xlu0 %3204
        %3206 = vrot.lane.b32.xlu0 %v3188, 104
        %v3207 = vpop.permute.xlu0 %3206
        %3208 = vrot.lane.b32.xlu0 %v3189, 104
        %v3209 = vpop.permute.xlu0 %3208
        %3210 = vrot.lane.b32.xlu0 %v3190, 104
        %v3211 = vpop.permute.xlu0 %3210
        %3212 = vrot.lane.b32.xlu0 %v3191, 104
        %v3213 = vpop.permute.xlu0 %3212
        %3214 = vrot.lane.b32.xlu0 %v3192, 104
        %v3215 = vpop.permute.xlu0 %3214
        %3216 = vrot.lane.b32.xlu0 %v3193, 104
        %v3217 = vpop.permute.xlu0 %3216
        %v3219 = vsel %vm1734, %v3185, 0
        %v3221 = vsel %vm1734, %v3203, 0
        %v3223 = vsel %vm1734, %v3205, 0
        %v3225 = vsel %vm1734, %v3207, 0
        %v3227 = vsel %vm1734, %v3209, 0
        %v3229 = vsel %vm1734, %v3211, 0
        %v3231 = vsel %vm1734, %v3213, 0
        %v3233 = vsel %vm1734, %v3215, 0
        %v3235 = vsel %vm1734, %v3217, 0
        %3237 = vmatprep.subr.mxu0 0.0
        %3238 = vmatpush1.xpose.msra.mxu0 %v3221
        %3239 = vmatprep.subr.mxu0 0.0
        %3240 = vmatpush1.xpose.msra.mxu0 %v3223
        %3241 = vmatprep.subr.mxu0 0.0
        %3242 = vmatpush1.xpose.msra.mxu0 %v3225
        %3243 = vmatprep.subr.mxu0 0.0
        %3244 = vmatpush1.xpose.msra.mxu0 %v3227
        %3245 = vmatprep.subr.mxu0 0.0
        %3246 = vmatpush1.xpose.msra.mxu0 %v3229
        %3247 = vmatprep.subr.mxu0 0.0
        %3248 = vmatpush1.xpose.msra.mxu0 %v3231
        %3249 = vmatprep.subr.mxu0 0.0
        %3250 = vmatpush1.xpose.msra.mxu0 %v3233
        %3251 = vmatprep.subr.mxu0 0.0
        %3252 = vmatpush1.xpose.msra.mxu0 %v3235
        %3253 = vmatprep.subr.mxu0 0.0
        %3254 = vmatpush1.xpose.msra.mxu0 0.0
        %3255 = vmatprep.subr.mxu0 0.0
        %3256 = vmatpush1.xpose.msra.mxu0 0.0
        %3257 = vmatprep.subr.mxu0 0.0
        %3258 = vmatpush1.xpose.msra.mxu0 0.0
        %3259 = vmatprep.subr.mxu0 0.0
        %3260 = vmatpush1.xpose.msra.mxu0 0.0
        %3261 = vmatprep.subr.mxu0 0.0
        %3262 = vmatpush1.xpose.msra.mxu0 0.0
        %3263 = vmatprep.subr.mxu0 0.0
        %3264 = vmatpush1.xpose.msra.mxu0 0.0
        %3265 = vmatprep.subr.mxu0 0.0
        %3266 = vmatpush1.xpose.msra.mxu0 0.0
        %3267 = vmatprep.subr.mxu0 0.0
        %3268 = vmatpush1.xpose.msra.mxu0 0.0
        %3269 = vmatprep.subr.mxu0 0.0
        %3270 = vmatpush1.xpose.msra.mxu0 0.0
        %3271 = vmatprep.subr.mxu0 0.0
        %3272 = vmatpush1.xpose.msra.mxu0 0.0
        %3273 = vmatprep.subr.mxu0 0.0
        %3274 = vmatpush1.xpose.msra.mxu0 0.0
        %3275 = vmatprep.subr.mxu0 0.0
        %3276 = vmatpush1.xpose.msra.mxu0 0.0
        %3277 = vmatprep.subr.mxu0 0.0
        %3278 = vmatpush1.xpose.msra.mxu0 0.0
        %3279 = vmatprep.subr.mxu0 0.0
        %3280 = vmatpush1.xpose.msra.mxu0 0.0
        %3281 = vmatprep.subr.mxu0 0.0
        %3282 = vmatpush1.xpose.msra.mxu0 0.0
        %3283 = vmatprep.subr.mxu0 0.0
        %3284 = vmatpush1.xpose.msra.mxu0 0.0
        %3285 = vmatprep.subr.mxu0 0.0
        %3286 = vmatpush1.xpose.msra.mxu0 0.0
        %3287 = vmatprep.subr.mxu0 0.0
        %3288 = vmatpush1.xpose.msra.mxu0 0.0
        %3289 = vmatprep.subr.mxu0 0.0
        %3290 = vmatpush1.xpose.msra.mxu0 0.0
        %3291 = vmatprep.subr.mxu0 0.0
        %3292 = vmatpush1.xpose.msra.mxu0 0.0
        %3293 = vmatprep.subr.mxu0 0.0
        %3294 = vmatpush1.xpose.msra.mxu0 0.0
        %3295 = vmatprep.subr.mxu0 0.0
        %3296 = vmatpush1.xpose.msra.mxu0 0.0
        %3297 = vmatprep.subr.mxu0 0.0
        %3298 = vmatpush1.xpose.msra.mxu0 0.0
        %3299 = vmatprep.subr.mxu0 0.0
        %3300 = vmatpush1.xpose.msra.mxu0 0.0
        %3301 = vmatprep.mubr.f32.mxu0 0.0
        %3302 = vmatmul.mubr.f32.gmra.mrb[0].mxu0 %v3219
        %v3303 = vpop.f32.mrb[0].mxu0
        %v3304 = vadd.f32 0.0, %v3303
        %v3305 = vpop.f32.mrb[0].mxu0
        %3306 = vdwg.mxu0
        %v3307 = vsel %vm1832, %v3304, -inf
        %3308 = vmax.xlane.f32.xlu0 %v3307
        %v3309 = vpop.xlane.xlu0 %3308
        %v3310 = vsub.f32 %v3304, %v3309
        %v3311 = vmul.f32 %v3310, 1.442695
        %v3312 = vpow.pop %v3311
        %v3313 = vsel %vm1832, %v3312, 0.0
        %3314 = vadd.xlane.f32.xlu0 %v3313
        %v3315 = vpop.xlane.xlu0 %3314
        %v3316 = vrcp.pop %v3315
        %v3317 = vmul.f32 %v3312, %v3316
        %3318 = vrot.lane.b32.xlu0 %v3186, 72
        %v3319 = vpop.permute.xlu0 %3318
        %3320 = vrot.lane.b32.xlu0 %v3187, 72
        %v3321 = vpop.permute.xlu0 %3320
        %3322 = vrot.lane.b32.xlu0 %v3188, 72
        %v3323 = vpop.permute.xlu0 %3322
        %3324 = vrot.lane.b32.xlu0 %v3189, 72
        %v3325 = vpop.permute.xlu0 %3324
        %3326 = vrot.lane.b32.xlu0 %v3190, 72
        %v3327 = vpop.permute.xlu0 %3326
        %3328 = vrot.lane.b32.xlu0 %v3191, 72
        %v3329 = vpop.permute.xlu0 %3328
        %3330 = vrot.lane.b32.xlu0 %v3192, 72
        %v3331 = vpop.permute.xlu0 %3330
        %3332 = vrot.lane.b32.xlu0 %v3193, 72
        %v3333 = vpop.permute.xlu0 %3332
        %v3343 = vsel %vm1695, %v3317, 0
        %3345 = vmatprep.subr.mxu0 0.0
        %3346 = vmatpush1.msra.mxu0 %v3319
        %3347 = vmatprep.subr.mxu0 0.0
        %3348 = vmatpush1.msra.mxu0 %v3321
        %3349 = vmatprep.subr.mxu0 0.0
        %3350 = vmatpush1.msra.mxu0 %v3323
        %3351 = vmatprep.subr.mxu0 0.0
        %3352 = vmatpush1.msra.mxu0 %v3325
        %3353 = vmatprep.subr.mxu0 0.0
        %3354 = vmatpush1.msra.mxu0 %v3327
        %3355 = vmatprep.subr.mxu0 0.0
        %3356 = vmatpush1.msra.mxu0 %v3329
        %3357 = vmatprep.subr.mxu0 0.0
        %3358 = vmatpush1.msra.mxu0 %v3331
        %3359 = vmatprep.subr.mxu0 0.0
        %3360 = vmatpush1.msra.mxu0 %v3333
        %3361 = vmatprep.subr.mxu0 0.0
        %3362 = vmatpush1.msra.mxu0 0.0
        %3363 = vmatprep.subr.mxu0 0.0
        %3364 = vmatpush1.msra.mxu0 0.0
        %3365 = vmatprep.subr.mxu0 0.0
        %3366 = vmatpush1.msra.mxu0 0.0
        %3367 = vmatprep.subr.mxu0 0.0
        %3368 = vmatpush1.msra.mxu0 0.0
        %3369 = vmatprep.subr.mxu0 0.0
        %3370 = vmatpush1.msra.mxu0 0.0
        %3371 = vmatprep.subr.mxu0 0.0
        %3372 = vmatpush1.msra.mxu0 0.0
        %3373 = vmatprep.subr.mxu0 0.0
        %3374 = vmatpush1.msra.mxu0 0.0
        %3375 = vmatprep.subr.mxu0 0.0
        %3376 = vmatpush1.msra.mxu0 0.0
        %3377 = vmatprep.subr.mxu0 0.0
        %3378 = vmatpush1.msra.mxu0 0.0
        %3379 = vmatprep.subr.mxu0 0.0
        %3380 = vmatpush1.msra.mxu0 0.0
        %3381 = vmatprep.subr.mxu0 0.0
        %3382 = vmatpush1.msra.mxu0 0.0
        %3383 = vmatprep.subr.mxu0 0.0
        %3384 = vmatpush1.msra.mxu0 0.0
        %3385 = vmatprep.subr.mxu0 0.0
        %3386 = vmatpush1.msra.mxu0 0.0
        %3387 = vmatprep.subr.mxu0 0.0
        %3388 = vmatpush1.msra.mxu0 0.0
        %3389 = vmatprep.subr.mxu0 0.0
        %3390 = vmatpush1.msra.mxu0 0.0
        %3391 = vmatprep.subr.mxu0 0.0
        %3392 = vmatpush1.msra.mxu0 0.0
        %3393 = vmatprep.subr.mxu0 0.0
        %3394 = vmatpush1.msra.mxu0 0.0
        %3395 = vmatprep.subr.mxu0 0.0
        %3396 = vmatpush1.msra.mxu0 0.0
        %3397 = vmatprep.subr.mxu0 0.0
        %3398 = vmatpush1.msra.mxu0 0.0
        %3399 = vmatprep.subr.mxu0 0.0
        %3400 = vmatpush1.msra.mxu0 0.0
        %3401 = vmatprep.subr.mxu0 0.0
        %3402 = vmatpush1.msra.mxu0 0.0
        %3403 = vmatprep.subr.mxu0 0.0
        %3404 = vmatpush1.msra.mxu0 0.0
        %3405 = vmatprep.subr.mxu0 0.0
        %3406 = vmatpush1.msra.mxu0 0.0
        %3407 = vmatprep.subr.mxu0 0.0
        %3408 = vmatpush1.msra.mxu0 0.0
        %3409 = vmatprep.mubr.f32.mxu0 0.0
        %3410 = vmatmul.mubr.f32.gmra.mrb[0].mxu0 %v3343
        %v3411 = vpop.f32.mrb[0].mxu0
        %v3412 = vadd.f32 0.0, %v3411
        %v3413 = vpop.f32.mrb[0].mxu0
        %3414 = vdwg.mxu0
        %3415 = vst.msk [vmem:[#allocation5] sm:$0xf] %vm1941, %v3412
        %v3416 = vld [vmem:[#allocation5] sm:$0x1]
        %3417 = vst.msk [vmem:[#allocation6 + $0x3] sm:$0x1] %vm1705, %v3416
        %v3418 = vld [vmem:[#allocation5 + $0x1] sm:$0x1]
        %3420 = vrot.lane.b32.xlu0 %v3418, 8
        %v3421 = vpop.permute.xlu0 %3420
        %3423 = vst.msk [vmem:[#allocation6 + $0x3] sm:$0x1] %vm1950, %v3421
        %v3424 = vld [vmem:[#allocation5 + $0x2] sm:$0x1]
        %3426 = vrot.lane.b32.xlu0 %v3424, 16
        %v3427 = vpop.permute.xlu0 %3426
        %3429 = vst.msk [vmem:[#allocation6 + $0x3] sm:$0x1] %vm1957, %v3427
        %v3430 = vld [vmem:[#allocation5 + $0x3] sm:$0x1]
        %3432 = vrot.lane.b32.xlu0 %v3430, 24
        %v3433 = vpop.permute.xlu0 %3432
        %3435 = vst.msk [vmem:[#allocation6 + $0x3] sm:$0x1] %vm1964, %v3433
        %v3436 = vadd.f32 %v3304, %v3304
        %v3437 = vld [vmem:[%s45] sm:$0x1]
        %v3438 = vld [vmem:[%s47] sm:$0x1]
        %v3439 = vsel %vm1832, %v3436, 0.0
        %3440 = vadd.xlane.f32.xlu0 %v3439
        %v3441 = vpop.xlane.xlu0 %3440
        %v3442 = vmul.f32 %v3441, %v1972
        %v3443 = vsub.f32 %v3436, %v3442
        %v3444 = vmul.f32 %v3443, %v3443
        %v3445 = vsel %vm1832, %v3444, 0.0
        %3446 = vadd.xlane.f32.xlu0 %v3445
        %v3447 = vpop.xlane.xlu0 %3446
        %v3448 = vmul.f32 %v3447, %v1972
        %v3449 = vadd.f32 %v3448, 1e-05
        %v3450 = vrsqrt.pop %v3449
        %v3451 = vmul.f32 %v3443, %v3450
        %v3453 = vlaneseq
        %v3454 = vshrl.u32 %v3453, 7
        %v3455 = vsub.s32 0, %v3454
        %v3456 = vrot.slane %v3437, %v3455
        %v3458 = vmul.f32 %v3451, %v3456
        %v3460 = vlaneseq
        %v3461 = vshrl.u32 %v3460, 7
        %v3462 = vsub.s32 0, %v3461
        %v3463 = vrot.slane %v3438, %v3462
        %v3465 = vadd.f32 %v3458, %v3463
        %v3466 = vld [vmem:[%s49] sm:$0xff]
        %v3467 = vld [vmem:[%s49 + $0x8] sm:$0xff]
        %v3468 = vld [vmem:[%s49 + $0x10] sm:$0xff]
        %v3469 = vld [vmem:[%s49 + $0x18] sm:$0xff]
        %v3470 = vld [vmem:[%s49 + $0x20] sm:$0xff]
        %v3471 = vld [vmem:[%s49 + $0x28] sm:$0xff]
        %v3472 = vld [vmem:[%s49 + $0x30] sm:$0xff]
        %v3473 = vld [vmem:[%s49 + $0x38] sm:$0xff]
        %v3474 = vld [vmem:[%s51] sm:$0x1]
        %v3476 = vlaneseq
        %v3477 = vshrl.u32 %v3476, 7
        %v3478 = vsub.s32 0, %v3477
        %v3479 = vrot.slane %v3474, %v3478
        %v3482 = vsel %vm1695, %v3465, 0
        %3484 = vmatprep.subr.mxu0 0.0
        %3485 = vmatpush1.msra.mxu0 %v3466
        %3486 = vmatprep.subr.mxu0 0.0
        %3487 = vmatpush1.msra.mxu0 %v3467
        %3488 = vmatprep.subr.mxu0 0.0
        %3489 = vmatpush1.msra.mxu0 %v3468
        %3490 = vmatprep.subr.mxu0 0.0
        %3491 = vmatpush1.msra.mxu0 %v3469
        %3492 = vmatprep.subr.mxu0 0.0
        %3493 = vmatpush1.msra.mxu0 %v3470
        %3494 = vmatprep.subr.mxu0 0.0
        %3495 = vmatpush1.msra.mxu0 %v3471
        %3496 = vmatprep.subr.mxu0 0.0
        %3497 = vmatpush1.msra.mxu0 %v3472
        %3498 = vmatprep.subr.mxu0 0.0
        %3499 = vmatpush1.msra.mxu0 %v3473
        %3500 = vmatprep.subr.mxu0 0.0
        %3501 = vmatpush1.msra.mxu0 0.0
        %3502 = vmatprep.subr.mxu0 0.0
        %3503 = vmatpush1.msra.mxu0 0.0
        %3504 = vmatprep.subr.mxu0 0.0
        %3505 = vmatpush1.msra.mxu0 0.0
        %3506 = vmatprep.subr.mxu0 0.0
        %3507 = vmatpush1.msra.mxu0 0.0
        %3508 = vmatprep.subr.mxu0 0.0
        %3509 = vmatpush1.msra.mxu0 0.0
        %3510 = vmatprep.subr.mxu0 0.0
        %3511 = vmatpush1.msra.mxu0 0.0
        %3512 = vmatprep.subr.mxu0 0.0
        %3513 = vmatpush1.msra.mxu0 0.0
        %3514 = vmatprep.subr.mxu0 0.0
        %3515 = vmatpush1.msra.mxu0 0.0
        %3516 = vmatprep.subr.mxu0 0.0
        %3517 = vmatpush1.msra.mxu0 0.0
        %3518 = vmatprep.subr.mxu0 0.0
        %3519 = vmatpush1.msra.mxu0 0.0
        %3520 = vmatprep.subr.mxu0 0.0
        %3521 = vmatpush1.msra.mxu0 0.0
        %3522 = vmatprep.subr.mxu0 0.0
        %3523 = vmatpush1.msra.mxu0 0.0
        %3524 = vmatprep.subr.mxu0 0.0
        %3525 = vmatpush1.msra.mxu0 0.0
        %3526 = vmatprep.subr.mxu0 0.0
        %3527 = vmatpush1.msra.mxu0 0.0
        %3528 = vmatprep.subr.mxu0 0.0
        %3529 = vmatpush1.msra.mxu0 0.0
        %3530 = vmatprep.subr.mxu0 0.0
        %3531 = vmatpush1.msra.mxu0 0.0
        %3532 = vmatprep.subr.mxu0 0.0
        %3533 = vmatpush1.msra.mxu0 0.0
        %3534 = vmatprep.subr.mxu0 0.0
        %3535 = vmatpush1.msra.mxu0 0.0
        %3536 = vmatprep.subr.mxu0 0.0
        %3537 = vmatpush1.msra.mxu0 0.0
        %3538 = vmatprep.subr.mxu0 0.0
        %3539 = vmatpush1.msra.mxu0 0.0
        %3540 = vmatprep.subr.mxu0 0.0
        %3541 = vmatpush1.msra.mxu0 0.0
        %3542 = vmatprep.subr.mxu0 0.0
        %3543 = vmatpush1.msra.mxu0 0.0
        %3544 = vmatprep.subr.mxu0 0.0
        %3545 = vmatpush1.msra.mxu0 0.0
        %3546 = vmatprep.subr.mxu0 0.0
        %3547 = vmatpush1.msra.mxu0 0.0
        %3548 = vmatprep.mubr.f32.mxu0 0.0
        %3549 = vmatmul.mubr.f32.gmra.mrb[0].mxu0 %v3482
        %v3550 = vpop.f32.mrb[0].mxu0
        %v3551 = vadd.f32 %v3479, %v3550
        %v3552 = vpop.f32.mrb[0].mxu0
        %3553 = vdwg.mxu0
        %v3554 = vmul.f32 %v3551, 0.5
        %v3555 = vmul.f32 %v3551, 0.044715
        %v3556 = vmul.f32 %v3555, %v3551
        %v3557 = vmul.f32 %v3556, %v3551
        %v3558 = vadd.f32 %v3551, %v3557
        %v3559 = vmul.f32 %v3558, 0.7978846
        %v3560 = vtanh.pop %v3559
        %v3561 = vadd.f32 %v3560, 1.0
        %v3562 = vmul.f32 %v3554, %v3561
        %v3563 = vld [vmem:[%s53] sm:$0xff]
        %v3564 = vld [vmem:[%s53 + $0x8] sm:$0xff]
        %v3565 = vld [vmem:[%s53 + $0x10] sm:$0xff]
        %v3566 = vld [vmem:[%s53 + $0x18] sm:$0xff]
        %v3567 = vld [vmem:[%s53 + $0x20] sm:$0xff]
        %v3568 = vld [vmem:[%s53 + $0x28] sm:$0xff]
        %v3569 = vld [vmem:[%s53 + $0x30] sm:$0xff]
        %v3570 = vld [vmem:[%s53 + $0x38] sm:$0xff]
        %v3572 = vsel %vm1695, %v3562, 0
        %3574 = vmatprep.subr.mxu0 0.0
        %3575 = vmatpush1.msra.mxu0 %v3563
        %3576 = vmatprep.subr.mxu0 0.0
        %3577 = vmatpush1.msra.mxu0 %v3564
        %3578 = vmatprep.subr.mxu0 0.0
        %3579 = vmatpush1.msra.mxu0 %v3565
        %3580 = vmatprep.subr.mxu0 0.0
        %3581 = vmatpush1.msra.mxu0 %v3566
        %3582 = vmatprep.subr.mxu0 0.0
        %3583 = vmatpush1.msra.mxu0 %v3567
        %3584 = vmatprep.subr.mxu0 0.0
        %3585 = vmatpush1.msra.mxu0 %v3568
        %3586 = vmatprep.subr.mxu0 0.0
        %3587 = vmatpush1.msra.mxu0 %v3569
        %3588 = vmatprep.subr.mxu0 0.0
        %3589 = vmatpush1.msra.mxu0 %v3570
        %3590 = vmatprep.subr.mxu0 0.0
        %3591 = vmatpush1.msra.mxu0 0.0
        %3592 = vmatprep.subr.mxu0 0.0
        %3593 = vmatpush1.msra.mxu0 0.0
        %3594 = vmatprep.subr.mxu0 0.0
        %3595 = vmatpush1.msra.mxu0 0.0
        %3596 = vmatprep.subr.mxu0 0.0
        %3597 = vmatpush1.msra.mxu0 0.0
        %3598 = vmatprep.subr.mxu0 0.0
        %3599 = vmatpush1.msra.mxu0 0.0
        %3600 = vmatprep.subr.mxu0 0.0
        %3601 = vmatpush1.msra.mxu0 0.0
        %3602 = vmatprep.subr.mxu0 0.0
        %3603 = vmatpush1.msra.mxu0 0.0
        %3604 = vmatprep.subr.mxu0 0.0
        %3605 = vmatpush1.msra.mxu0 0.0
        %3606 = vmatprep.subr.mxu0 0.0
        %3607 = vmatpush1.msra.mxu0 0.0
        %3608 = vmatprep.subr.mxu0 0.0
        %3609 = vmatpush1.msra.mxu0 0.0
        %3610 = vmatprep.subr.mxu0 0.0
        %3611 = vmatpush1.msra.mxu0 0.0
        %3612 = vmatprep.subr.mxu0 0.0
        %3613 = vmatpush1.msra.mxu0 0.0
        %3614 = vmatprep.subr.mxu0 0.0
        %3615 = vmatpush1.msra.mxu0 0.0
        %3616 = vmatprep.subr.mxu0 0.0
        %3617 = vmatpush1.msra.mxu0 0.0
        %3618 = vmatprep.subr.mxu0 0.0
        %3619 = vmatpush1.msra.mxu0 0.0
        %3620 = vmatprep.subr.mxu0 0.0
        %3621 = vmatpush1.msra.mxu0 0.0
        %3622 = vmatprep.subr.mxu0 0.0
        %3623 = vmatpush1.msra.mxu0 0.0
        %3624 = vmatprep.subr.mxu0 0.0
        %3625 = vmatpush1.msra.mxu0 0.0
        %3626 = vmatprep.subr.mxu0 0.0
        %3627 = vmatpush1.msra.mxu0 0.0
        %3628 = vmatprep.subr.mxu0 0.0
        %3629 = vmatpush1.msra.mxu0 0.0
        %3630 = vmatprep.subr.mxu0 0.0
        %3631 = vmatpush1.msra.mxu0 0.0
        %3632 = vmatprep.subr.mxu0 0.0
        %3633 = vmatpush1.msra.mxu0 0.0
        %3634 = vmatprep.subr.mxu0 0.0
        %3635 = vmatpush1.msra.mxu0 0.0
        %3636 = vmatprep.subr.mxu0 0.0
        %3637 = vmatpush1.msra.mxu0 0.0
        %3638 = vmatprep.mubr.f32.mxu0 0.0
        %3639 = vmatmul.mubr.f32.gmra.mrb[0].mxu0 %v3572
        %v3640 = vpop.f32.mrb[0].mxu0
        %v3641 = vadd.f32 0.0, %v3640
        %v3642 = vpop.f32.mrb[0].mxu0
        %3643 = vdwg.mxu0
        %v3644 = vadd.f32 %v3436, %v3641
        %v3645 = vld [vmem:[%s55] sm:$0x1]
        %v3647 = vlaneseq
        %v3648 = vshrl.u32 %v3647, 7
        %v3649 = vsub.s32 0, %v3648
        %v3650 = vrot.slane %v3645, %v3649
        %v3652 = vadd.f32 %v3644, %v3650
        %s3653 = scalar_lea.vmem %s1003, 12 [#allocation9]
        %3654 = vst.msk [vmem:[%s3653] sm:$0xf] %vm1832, %v3652
        %v3655 = vld [vmem:[#allocation6] sm:$0xf]
        %v3656 = vld [vmem:[%s29] sm:$0xff]
        %v3657 = vld [vmem:[%s29 + $0x8] sm:$0xff]
        %v3658 = vld [vmem:[%s29 + $0x10] sm:$0xff]
        %v3659 = vld [vmem:[%s29 + $0x18] sm:$0xff]
        %v3660 = vld [vmem:[%s31] sm:$0x1]
        %v3662 = vlaneseq
        %v3663 = vshrl.u32 %v3662, 7
        %v3664 = vsub.s32 0, %v3663
        %v3665 = vrot.slane %v3660, %v3664
        %v3668 = vsel %vm1039, %v3655, 0
        %3670 = vmatprep.subr.mxu0 0.0
        %3671 = vmatpush1.msra.mxu0 %v3656
        %3672 = vmatprep.subr.mxu0 0.0
        %3673 = vmatpush1.msra.mxu0 %v3657
        %3674 = vmatprep.subr.mxu0 0.0
        %3675 = vmatpush1.msra.mxu0 %v3658
        %3676 = vmatprep.subr.mxu0 0.0
        %3677 = vmatpush1.msra.mxu0 %v3659
        %3678 = vmatprep.subr.mxu0 0.0
        %3679 = vmatpush1.msra.mxu0 0.0
        %3680 = vmatprep.subr.mxu0 0.0
        %3681 = vmatpush1.msra.mxu0 0.0
        %3682 = vmatprep.subr.mxu0 0.0
        %3683 = vmatpush1.msra.mxu0 0.0
        %3684 = vmatprep.subr.mxu0 0.0
        %3685 = vmatpush1.msra.mxu0 0.0
        %3686 = vmatprep.subr.mxu0 0.0
        %3687 = vmatpush1.msra.mxu0 0.0
        %3688 = vmatprep.subr.mxu0 0.0
        %3689 = vmatpush1.msra.mxu0 0.0
        %3690 = vmatprep.subr.mxu0 0.0
        %3691 = vmatpush1.msra.mxu0 0.0
        %3692 = vmatprep.subr.mxu0 0.0
        %3693 = vmatpush1.msra.mxu0 0.0
        %3694 = vmatprep.subr.mxu0 0.0
        %3695 = vmatpush1.msra.mxu0 0.0
        %3696 = vmatprep.subr.mxu0 0.0
        %3697 = vmatpush1.msra.mxu0 0.0
        %3698 = vmatprep.subr.mxu0 0.0
        %3699 = vmatpush1.msra.mxu0 0.0
        %3700 = vmatprep.subr.mxu0 0.0
        %3701 = vmatpush1.msra.mxu0 0.0
        %3702 = vmatprep.subr.mxu0 0.0
        %3703 = vmatpush1.msra.mxu0 0.0
        %3704 = vmatprep.subr.mxu0 0.0
        %3705 = vmatpush1.msra.mxu0 0.0
        %3706 = vmatprep.subr.mxu0 0.0
        %3707 = vmatpush1.msra.mxu0 0.0
        %3708 = vmatprep.subr.mxu0 0.0
        %3709 = vmatpush1.msra.mxu0 0.0
        %3710 = vmatprep.subr.mxu0 0.0
        %3711 = vmatpush1.msra.mxu0 0.0
        %3712 = vmatprep.subr.mxu0 0.0
        %3713 = vmatpush1.msra.mxu0 0.0
        %3714 = vmatprep.subr.mxu0 0.0
        %3715 = vmatpush1.msra.mxu0 0.0
        %3716 = vmatprep.subr.mxu0 0.0
        %3717 = vmatpush1.msra.mxu0 0.0
        %3718 = vmatprep.subr.mxu0 0.0
        %3719 = vmatpush1.msra.mxu0 0.0
        %3720 = vmatprep.subr.mxu0 0.0
        %3721 = vmatpush1.msra.mxu0 0.0
        %3722 = vmatprep.subr.mxu0 0.0
        %3723 = vmatpush1.msra.mxu0 0.0
        %3724 = vmatprep.subr.mxu0 0.0
        %3725 = vmatpush1.msra.mxu0 0.0
        %3726 = vmatprep.subr.mxu0 0.0
        %3727 = vmatpush1.msra.mxu0 0.0
        %3728 = vmatprep.subr.mxu0 0.0
        %3729 = vmatpush1.msra.mxu0 0.0
        %3730 = vmatprep.subr.mxu0 0.0
        %3731 = vmatpush1.msra.mxu0 0.0
        %3732 = vmatprep.subr.mxu0 0.0
        %3733 = vmatpush1.msra.mxu0 0.0
        %3734 = vmatprep.mubr.f32.mxu0 0.0
        %3735 = vmatmul.mubr.f32.gmra.mrb[0].mxu0 %v3668
        %v3736 = vpop.f32.mrb[0].mxu0
        %v3737 = vadd.f32 %v3665, %v3736
        %v3738 = vpop.f32.mrb[0].mxu0
        %3739 = vdwg.mxu0
        %v3740 = vadd.f32 %v3737, %v3737
        %v3741 = vld [vmem:[%s33] sm:$0x1]
        %v3742 = vld [vmem:[%s35] sm:$0x1]
        %v3743 = vsel %vm1441, %v3740, 0.0
        %3744 = vadd.xlane.f32.xlu0 %v3743
        %v3745 = vpop.xlane.xlu0 %3744
        %v3746 = vmul.f32 %v3745, %v1195
        %v3747 = vsub.f32 %v3740, %v3746
        %v3748 = vmul.f32 %v3747, %v3747
        %v3749 = vsel %vm1441, %v3748, 0.0
        %3750 = vadd.xlane.f32.xlu0 %v3749
        %v3751 = vpop.xlane.xlu0 %3750
        %v3752 = vmul.f32 %v3751, %v1195
        %v3753 = vadd.f32 %v3752, 1e-05
        %v3754 = vrsqrt.pop %v3753
        %v3755 = vmul.f32 %v3747, %v3754
        %v3757 = vlaneseq
        %v3758 = vshrl.u32 %v3757, 7
        %v3759 = vsub.s32 0, %v3758
        %v3760 = vrot.slane %v3741, %v3759
        %v3762 = vmul.f32 %v3755, %v3760
        %v3764 = vlaneseq
        %v3765 = vshrl.u32 %v3764, 7
        %v3766 = vsub.s32 0, %v3765
        %v3767 = vrot.slane %v3742, %v3766
        %v3769 = vadd.f32 %v3762, %v3767
        %v3770 = vld [vmem:[%s37] sm:$0xff]
        %v3771 = vld [vmem:[%s37 + $0x8] sm:$0xff]
        %v3772 = vld [vmem:[%s37 + $0x10] sm:$0xff]
        %v3773 = vld [vmem:[%s37 + $0x18] sm:$0xff]
        %v3774 = vld [vmem:[%s39] sm:$0x1]
        %v3776 = vlaneseq
        %v3777 = vshrl.u32 %v3776, 7
        %v3778 = vsub.s32 0, %v3777
        %v3779 = vrot.slane %v3774, %v3778
        %v3782 = vsel %vm1039, %v3769, 0
        %3784 = vmatprep.subr.mxu0 0.0
        %3785 = vmatpush1.msra.mxu0 %v3770
        %3786 = vmatprep.subr.mxu0 0.0
        %3787 = vmatpush1.msra.mxu0 %v3771
        %3788 = vmatprep.subr.mxu0 0.0
        %3789 = vmatpush1.msra.mxu0 %v3772
        %3790 = vmatprep.subr.mxu0 0.0
        %3791 = vmatpush1.msra.mxu0 %v3773
        %3792 = vmatprep.subr.mxu0 0.0
        %3793 = vmatpush1.msra.mxu0 0.0
        %3794 = vmatprep.subr.mxu0 0.0
        %3795 = vmatpush1.msra.mxu0 0.0
        %3796 = vmatprep.subr.mxu0 0.0
        %3797 = vmatpush1.msra.mxu0 0.0
        %3798 = vmatprep.subr.mxu0 0.0
        %3799 = vmatpush1.msra.mxu0 0.0
        %3800 = vmatprep.subr.mxu0 0.0
        %3801 = vmatpush1.msra.mxu0 0.0
        %3802 = vmatprep.subr.mxu0 0.0
        %3803 = vmatpush1.msra.mxu0 0.0
        %3804 = vmatprep.subr.mxu0 0.0
        %3805 = vmatpush1.msra.mxu0 0.0
        %3806 = vmatprep.subr.mxu0 0.0
        %3807 = vmatpush1.msra.mxu0 0.0
        %3808 = vmatprep.subr.mxu0 0.0
        %3809 = vmatpush1.msra.mxu0 0.0
        %3810 = vmatprep.subr.mxu0 0.0
        %3811 = vmatpush1.msra.mxu0 0.0
        %3812 = vmatprep.subr.mxu0 0.0
        %3813 = vmatpush1.msra.mxu0 0.0
        %3814 = vmatprep.subr.mxu0 0.0
        %3815 = vmatpush1.msra.mxu0 0.0
        %3816 = vmatprep.subr.mxu0 0.0
        %3817 = vmatpush1.msra.mxu0 0.0
        %3818 = vmatprep.subr.mxu0 0.0
        %3819 = vmatpush1.msra.mxu0 0.0
        %3820 = vmatprep.subr.mxu0 0.0
        %3821 = vmatpush1.msra.mxu0 0.0
        %3822 = vmatprep.subr.mxu0 0.0
        %3823 = vmatpush1.msra.mxu0 0.0
        %3824 = vmatprep.subr.mxu0 0.0
        %3825 = vmatpush1.msra.mxu0 0.0
        %3826 = vmatprep.subr.mxu0 0.0
        %3827 = vmatpush1.msra.mxu0 0.0
        %3828 = vmatprep.subr.mxu0 0.0
        %3829 = vmatpush1.msra.mxu0 0.0
        %3830 = vmatprep.subr.mxu0 0.0
        %3831 = vmatpush1.msra.mxu0 0.0
        %3832 = vmatprep.subr.mxu0 0.0
        %3833 = vmatpush1.msra.mxu0 0.0
        %3834 = vmatprep.subr.mxu0 0.0
        %3835 = vmatpush1.msra.mxu0 0.0
        %3836 = vmatprep.subr.mxu0 0.0
        %3837 = vmatpush1.msra.mxu0 0.0
        %3838 = vmatprep.subr.mxu0 0.0
        %3839 = vmatpush1.msra.mxu0 0.0
        %3840 = vmatprep.subr.mxu0 0.0
        %3841 = vmatpush1.msra.mxu0 0.0
        %3842 = vmatprep.subr.mxu0 0.0
        %3843 = vmatpush1.msra.mxu0 0.0
        %3844 = vmatprep.subr.mxu0 0.0
        %3845 = vmatpush1.msra.mxu0 0.0
        %3846 = vmatprep.subr.mxu0 0.0
        %3847 = vmatpush1.msra.mxu0 0.0
        %3848 = vmatprep.mubr.f32.mxu0 0.0
        %3849 = vmatmul.mubr.f32.gmra.mrb[0].mxu0 %v3782
        %v3850 = vpop.f32.mrb[0].mxu0
        %v3851 = vadd.f32 %v3779, %v3850
        %v3852 = vpop.f32.mrb[0].mxu0
        %3853 = vdwg.mxu0
        %v3854 = vmul.f32 %v3851, 0.5
        %v3855 = vmul.f32 %v3851, 0.044715
        %v3856 = vmul.f32 %v3855, %v3851
        %v3857 = vmul.f32 %v3856, %v3851
        %v3858 = vadd.f32 %v3851, %v3857
        %v3859 = vmul.f32 %v3858, 0.7978846
        %v3860 = vtanh.pop %v3859
        %v3861 = vadd.f32 %v3860, 1.0
        %v3862 = vmul.f32 %v3854, %v3861
        %v3863 = vld [vmem:[%s41] sm:$0xff]
        %v3864 = vld [vmem:[%s41 + $0x8] sm:$0xff]
        %v3865 = vld [vmem:[%s41 + $0x10] sm:$0xff]
        %v3866 = vld [vmem:[%s41 + $0x18] sm:$0xff]
        %v3867 = vld [vmem:[%s41 + $0x20] sm:$0xff]
        %v3868 = vld [vmem:[%s41 + $0x28] sm:$0xff]
        %v3869 = vld [vmem:[%s41 + $0x30] sm:$0xff]
        %v3870 = vld [vmem:[%s41 + $0x38] sm:$0xff]
        %v3871 = vld [vmem:[%s41 + $0x40] sm:$0xff]
        %v3872 = vld [vmem:[%s41 + $0x48] sm:$0xff]
        %v3873 = vld [vmem:[%s41 + $0x50] sm:$0xff]
        %v3874 = vld [vmem:[%s41 + $0x58] sm:$0xff]
        %v3875 = vld [vmem:[%s41 + $0x60] sm:$0xff]
        %v3876 = vld [vmem:[%s41 + $0x68] sm:$0xff]
        %v3877 = vld [vmem:[%s41 + $0x70] sm:$0xff]
        %v3878 = vld [vmem:[%s41 + $0x78] sm:$0xff]
        %3879 = vmatprep.subr.mxu0 0.0
        %3880 = vmatpush1.msra.mxu0 %v3863
        %3881 = vmatprep.subr.mxu0 0.0
        %3882 = vmatpush1.msra.mxu0 %v3864
        %3883 = vmatprep.subr.mxu0 0.0
        %3884 = vmatpush1.msra.mxu0 %v3865
        %3885 = vmatprep.subr.mxu0 0.0
        %3886 = vmatpush1.msra.mxu0 %v3866
        %3887 = vmatprep.subr.mxu0 0.0
        %3888 = vmatpush1.msra.mxu0 %v3867
        %3889 = vmatprep.subr.mxu0 0.0
        %3890 = vmatpush1.msra.mxu0 %v3868
        %3891 = vmatprep.subr.mxu0 0.0
        %3892 = vmatpush1.msra.mxu0 %v3869
        %3893 = vmatprep.subr.mxu0 0.0
        %3894 = vmatpush1.msra.mxu0 %v3870
        %3895 = vmatprep.subr.mxu0 0.0
        %3896 = vmatpush1.msra.mxu0 %v3871
        %3897 = vmatprep.subr.mxu0 0.0
        %3898 = vmatpush1.msra.mxu0 %v3872
        %3899 = vmatprep.subr.mxu0 0.0
        %3900 = vmatpush1.msra.mxu0 %v3873
        %3901 = vmatprep.subr.mxu0 0.0
        %3902 = vmatpush1.msra.mxu0 %v3874
        %3903 = vmatprep.subr.mxu0 0.0
        %3904 = vmatpush1.msra.mxu0 %v3875
        %3905 = vmatprep.subr.mxu0 0.0
        %3906 = vmatpush1.msra.mxu0 %v3876
        %3907 = vmatprep.subr.mxu0 0.0
        %3908 = vmatpush1.msra.mxu0 %v3877
        %3909 = vmatprep.subr.mxu0 0.0
        %3910 = vmatpush1.msra.mxu0 %v3878
        %3911 = vmatprep.subr.mxu0 0.0
        %3912 = vmatpush1.msra.mxu0 0.0
        %3913 = vmatprep.subr.mxu0 0.0
        %3914 = vmatpush1.msra.mxu0 0.0
        %3915 = vmatprep.subr.mxu0 0.0
        %3916 = vmatpush1.msra.mxu0 0.0
        %3917 = vmatprep.subr.mxu0 0.0
        %3918 = vmatpush1.msra.mxu0 0.0
        %3919 = vmatprep.subr.mxu0 0.0
        %3920 = vmatpush1.msra.mxu0 0.0
        %3921 = vmatprep.subr.mxu0 0.0
        %3922 = vmatpush1.msra.mxu0 0.0
        %3923 = vmatprep.subr.mxu0 0.0
        %3924 = vmatpush1.msra.mxu0 0.0
        %3925 = vmatprep.subr.mxu0 0.0
        %3926 = vmatpush1.msra.mxu0 0.0
        %3927 = vmatprep.subr.mxu0 0.0
        %3928 = vmatpush1.msra.mxu0 0.0
        %3929 = vmatprep.subr.mxu0 0.0
        %3930 = vmatpush1.msra.mxu0 0.0
        %3931 = vmatprep.subr.mxu0 0.0
        %3932 = vmatpush1.msra.mxu0 0.0
        %3933 = vmatprep.subr.mxu0 0.0
        %3934 = vmatpush1.msra.mxu0 0.0
        %3935 = vmatprep.subr.mxu0 0.0
        %3936 = vmatpush1.msra.mxu0 0.0
        %3937 = vmatprep.subr.mxu0 0.0
        %3938 = vmatpush1.msra.mxu0 0.0
        %3939 = vmatprep.subr.mxu0 0.0
        %3940 = vmatpush1.msra.mxu0 0.0
        %3941 = vmatprep.subr.mxu0 0.0
        %3942 = vmatpush1.msra.mxu0 0.0
        %3943 = vmatprep.mubr.f32.mxu0 0.0
        %3944 = vmatmul.mubr.f32.gmra.mrb[0].mxu0 %v3862
        %v3945 = vpop.f32.mrb[0].mxu0
        %v3946 = vadd.f32 0.0, %v3945
        %v3947 = vpop.f32.mrb[0].mxu0
        %3948 = vdwg.mxu0
        %v3949 = vadd.f32 %v3740, %v3946
        %v3950 = vld [vmem:[%s43] sm:$0x1]
        %v3952 = vlaneseq
        %v3953 = vshrl.u32 %v3952, 7
        %v3954 = vsub.s32 0, %v3953
        %v3955 = vrot.slane %v3950, %v3954
        %v3957 = vadd.f32 %v3949, %v3955
        %3958 = vst.msk [vmem:[%s996] sm:$0xf] %vm1441, %v3957
        %v3959 = vld [vmem:[%s57] sm:$0xff]
        %v3960 = vld [vmem:[%s57 + $0x8] sm:$0xff]
        %v3961 = vld [vmem:[%s57 + $0x10] sm:$0xff]
        %v3962 = vld [vmem:[%s57 + $0x18] sm:$0xff]
        %v3963 = vld [vmem:[%s59] sm:$0x1]
        %v3965 = vlaneseq
        %v3966 = vshrl.u32 %v3965, 7
        %v3967 = vsub.s32 0, %v3966
        %v3968 = vrot.slane %v3963, %v3967
        %v3971 = vsel %vm1039, %v3957, 0
        %3973 = vmatprep.subr.mxu0 0.0
        %3974 = vmatpush1.msra.mxu0 %v3959
        %3975 = vmatprep.subr.mxu0 0.0
        %3976 = vmatpush1.msra.mxu0 %v3960
        %3977 = vmatprep.subr.mxu0 0.0
        %3978 = vmatpush1.msra.mxu0 %v3961
        %3979 = vmatprep.subr.mxu0 0.0
        %3980 = vmatpush1.msra.mxu0 %v3962
        %3981 = vmatprep.subr.mxu0 0.0
        %3982 = vmatpush1.msra.mxu0 0.0
        %3983 = vmatprep.subr.mxu0 0.0
        %3984 = vmatpush1.msra.mxu0 0.0
        %3985 = vmatprep.subr.mxu0 0.0
        %3986 = vmatpush1.msra.mxu0 0.0
        %3987 = vmatprep.subr.mxu0 0.0
        %3988 = vmatpush1.msra.mxu0 0.0
        %3989 = vmatprep.subr.mxu0 0.0
        %3990 = vmatpush1.msra.mxu0 0.0
        %3991 = vmatprep.subr.mxu0 0.0
        %3992 = vmatpush1.msra.mxu0 0.0
        %3993 = vmatprep.subr.mxu0 0.0
        %3994 = vmatpush1.msra.mxu0 0.0
        %3995 = vmatprep.subr.mxu0 0.0
        %3996 = vmatpush1.msra.mxu0 0.0
        %3997 = vmatprep.subr.mxu0 0.0
        %3998 = vmatpush1.msra.mxu0 0.0
        %3999 = vmatprep.subr.mxu0 0.0
        %4000 = vmatpush1.msra.mxu0 0.0
        %4001 = vmatprep.subr.mxu0 0.0
        %4002 = vmatpush1.msra.mxu0 0.0
        %4003 = vmatprep.subr.mxu0 0.0
        %4004 = vmatpush1.msra.mxu0 0.0
        %4005 = vmatprep.subr.mxu0 0.0
        %4006 = vmatpush1.msra.mxu0 0.0
        %4007 = vmatprep.subr.mxu0 0.0
        %4008 = vmatpush1.msra.mxu0 0.0
        %4009 = vmatprep.subr.mxu0 0.0
        %4010 = vmatpush1.msra.mxu0 0.0
        %4011 = vmatprep.subr.mxu0 0.0
        %4012 = vmatpush1.msra.mxu0 0.0
        %4013 = vmatprep.subr.mxu0 0.0
        %4014 = vmatpush1.msra.mxu0 0.0
        %4015 = vmatprep.subr.mxu0 0.0
        %4016 = vmatpush1.msra.mxu0 0.0
        %4017 = vmatprep.subr.mxu0 0.0
        %4018 = vmatpush1.msra.mxu0 0.0
        %4019 = vmatprep.subr.mxu0 0.0
        %4020 = vmatpush1.msra.mxu0 0.0
        %4021 = vmatprep.subr.mxu0 0.0
        %4022 = vmatpush1.msra.mxu0 0.0
        %4023 = vmatprep.subr.mxu0 0.0
        %4024 = vmatpush1.msra.mxu0 0.0
        %4025 = vmatprep.subr.mxu0 0.0
        %4026 = vmatpush1.msra.mxu0 0.0
        %4027 = vmatprep.subr.mxu0 0.0
        %4028 = vmatpush1.msra.mxu0 0.0
        %4029 = vmatprep.subr.mxu0 0.0
        %4030 = vmatpush1.msra.mxu0 0.0
        %4031 = vmatprep.subr.mxu0 0.0
        %4032 = vmatpush1.msra.mxu0 0.0
        %4033 = vmatprep.subr.mxu0 0.0
        %4034 = vmatpush1.msra.mxu0 0.0
        %4035 = vmatprep.subr.mxu0 0.0
        %4036 = vmatpush1.msra.mxu0 0.0
        %4037 = vmatprep.mubr.f32.mxu0 0.0
        %4038 = vmatmul.mubr.f32.gmra.mrb[0].mxu0 %v3971
        %v4039 = vpop.f32.mrb[0].mxu0
        %v4040 = vadd.f32 %v3968, %v4039
        %v4041 = vpop.f32.mrb[0].mxu0
        %4042 = vdwg.mxu0
        %vm4043 = vcmask 125952
        %4044 = vst.msk [vmem:[%s1010] sm:$0xf] %vm4043, %v4040
        %s4045 = sand.u32 %s731, 1
        %s4046 = scalar_lea.sflag [#allocation8], %s4045
        %s4047 = sand.u32 %s731, 1
        %s4048 = smul.addr %s4047, 4
        %s4049 = scalar_lea.vmem [#allocation7], %s4048
        %s4050 = sand.u32 %s83, 1
        %s4051 = scalar_lea.sflag [#allocation10], %s4050
        %s4052 = sand.u32 %s757, 1
        %s4053 = smul.addr %s4052, 16
        %s4054 = scalar_lea.vmem [#allocation9], %s4053
        %s4055 = sand.u32 %s83, 1
        %s4056 = scalar_lea.sflag [#allocation10], %s4055
        %s4057 = sand.u32 %s783, 1
        %s4058 = smul.addr %s4057, 4
        %s4059 = scalar_lea.vmem [#allocation11], %s4058
        // Predicated region
        $region141: #{tpu_custom_call.1} parent=139 // pred_check
          %p4060 = pneg %p741
        $region142: #{tpu_custom_call.1} parent=139 // pred_check_branch
          %4062 = sbr.rel (%p4060) target = $region144
        $region143: #{tpu_custom_call.1} parent=139 // pred_region
          %s4064 = ssub.s32 64, 64
          %4065 = vsyncadd %s4046, %s4064
          %s4066 = smul.addr %s83, 64
          %s4067 = scalar_lea.hbm %s61, %s4066
          %s4069 = sshll.u32 %s4049, 4
          %s4070 = int_to_ptr.vmem [resolvable:$true] %s4069
          %4072 = dma.vmem_to_hbm [thread:$0]  %s4070, 64, %s4067, %s4046
        $region144: #{tpu_custom_call.1} parent=139 // pred_fallthru
          _
        // Predicated region
        $region145: #{tpu_custom_call.1} parent=139 // pred_check
          %p4073 = pneg %p767
        $region146: #{tpu_custom_call.1} parent=139 // pred_check_branch
          %4075 = sbr.rel (%p4073) target = $region148
        $region147: #{tpu_custom_call.1} parent=139 // pred_region
          %s4077 = ssub.s32 256, 256
          %4078 = vsyncadd %s4051, %s4077
          %s4079 = smul.addr %s83, 64
          %s4080 = scalar_lea.hbm %s63, %s4079
          %s4081 = sshll.u32 %s4054, 4
          %s4082 = int_to_ptr.vmem [resolvable:$true] %s4081
          %4087 = dma.vmem_to_hbm [thread:$0]  %s4082, 256, %s4080, %s4051, 64, 128, 4
        $region148: #{tpu_custom_call.1} parent=139 // pred_fallthru
          _
        // Predicated region
        $region149: #{tpu_custom_call.1} parent=139 // pred_check
          %p4088 = pneg %p793
        $region150: #{tpu_custom_call.1} parent=139 // pred_check_branch
          %4090 = sbr.rel (%p4088) target = $region152
        $region151: #{tpu_custom_call.1} parent=139 // pred_region
          %s4092 = ssub.s32 64, 64
          %4093 = vsyncadd %s4056, %s4092
          %s4094 = smul.addr %s83, 64
          %s4095 = scalar_lea.hbm %s65, %s4094
          %s4097 = sshll.u32 %s4059, 4
          %s4098 = int_to_ptr.vmem [resolvable:$true] %s4097
          %4100 = dma.vmem_to_hbm [thread:$0]  %s4098, 64, %s4095, %s4056
        $region152: #{tpu_custom_call.1} parent=139 // pred_fallthru
          _
      $region140: #{tpu_custom_call.1} parent=5 // pred_fallthru
        _
      %p4101 = scmp.le.s32.totalorder 2, %s78
      // Predicated region
      $region153: #{tpu_custom_call.1} parent=5 // pred_check
        %p4102 = pneg %p4101
      $region154: #{tpu_custom_call.1} parent=5 // pred_check_branch
        %4104 = sbr.rel (%p4102) target = $region156
      $region155: #{tpu_custom_call.1} parent=5 // pred_region
        %s4105 = ssub.s32 %s78, 2
        // Predicated region
        $region157: #{tpu_custom_call.1} parent=155 // pred_check
          %p4106 = pneg %p747
        $region158: #{tpu_custom_call.1} parent=155 // pred_check_branch
          %4108 = sbr.rel (%p4106) target = $region160
        $region159: #{tpu_custom_call.1} parent=155 // pred_region
          %s4109 = sand.u32 %s732, 1
          %s4110 = scalar_lea.sflag [#allocation8], %s4109
          %s4111 = sand.u32 %s732, 1
          %s4112 = smul.addr %s4111, 4
          %s4113 = scalar_lea.vmem [#allocation7], %s4112
          %4114 = dma.done %s4110, 64
        $region160: #{tpu_custom_call.1} parent=155 // pred_fallthru
          _
        // Predicated region
        $region161: #{tpu_custom_call.1} parent=155 // pred_check
          %p4115 = pneg %p773
        $region162: #{tpu_custom_call.1} parent=155 // pred_check_branch
          %4117 = sbr.rel (%p4115) target = $region164
        $region163: #{tpu_custom_call.1} parent=155 // pred_region
          %s4118 = sand.u32 %s84, 1
          %s4119 = scalar_lea.sflag [#allocation10], %s4118
          %s4120 = sand.u32 %s758, 1
          %s4121 = smul.addr %s4120, 16
          %s4122 = scalar_lea.vmem [#allocation9], %s4121
          %4123 = dma.done %s4119, 256
        $region164: #{tpu_custom_call.1} parent=155 // pred_fallthru
          _
        // Predicated region
        $region165: #{tpu_custom_call.1} parent=155 // pred_check
          %p4124 = pneg %p799
        $region166: #{tpu_custom_call.1} parent=155 // pred_check_branch
          %4126 = sbr.rel (%p4124) target = $region168
        $region167: #{tpu_custom_call.1} parent=155 // pred_region
          %s4127 = sand.u32 %s84, 1
          %s4128 = scalar_lea.sflag [#allocation10], %s4127
          %s4129 = sand.u32 %s784, 1
          %s4130 = smul.addr %s4129, 4
          %s4131 = scalar_lea.vmem [#allocation11], %s4130
          %4132 = dma.done %s4128, 64
        $region168: #{tpu_custom_call.1} parent=155 // pred_fallthru
          _
      $region156: #{tpu_custom_call.1} parent=5 // pred_fallthru
        _
    $region6: #{tpu_custom_call.1} parent=1 // loop_footer
      %s82 = sadd.s32 1, %s78
    $region7: #{tpu_custom_call.1} parent=1 // loop_footer_branch
      %77 = sbr.rel target = $region3
    $region8: #{tpu_custom_call.1} parent=1 // loop_exit
      _
    %4133 = vsyncpa [#allocation8], 1
    %s4134 = scalar_lea.sflag [#allocation8], 1
    %4135 = vsyncpa %s4134, 1
    %4136 = vsyncpa [#allocation10], 1
    %s4137 = scalar_lea.sflag [#allocation10], 1
    %4138 = vsyncpa %s4137, 1

</llo_original>
